<compile_context>
chip_gen: v6e
topology: v6e:2x2x1
jax: 0.10.0
libtpu: 0.0.40
codegen_flags: <defaults>
</compile_context>

<pallas_src>
import jax
import jax.numpy as jnp
import numpy as np
from jax import lax
from jax.experimental import pallas as pl
from jax.experimental.pallas import tpu as pltpu


# ----------------------------- Pallas kernel -------------------------------


def _net_kernel(x_ref, w1_ref, b1_ref, w2_ref, b2_ref, w3_ref, fb1_ref,
                w4_ref, fb2_ref, o_ref):
    """Full forward pass for one batch tile of TB samples.

    x_ref : (TB, 28, 28)   input tile
    w1_ref: (5, 28, 256)   conv1 weights [ki, input-col, (pw,aw,c) column]
    b1_ref: (1, 256)
    w2_ref: (5, 128, 256)  conv2 weights [ki, (aw,ic) row, (pw,ow2,oc) column]
    b2_ref: (1, 256)
    w3_ref: (512, 50)      fc1 weights (flatten permutation folded in)
    fb1_ref:(1, 50)
    w4_ref: (50, 10)
    fb2_ref:(1, 10)
    o_ref : (TB, 10)       log-softmax output
    """
    f32 = jnp.float32
    TB = x_ref.shape[0]
    x = x_ref[...]                                        # (TB, 28, 28)

    # ---- conv1 (5x5, 1->10): 5 MXU matmuls, one per kernel row ki ---------
    # Output columns: j = pw*128 + aw*10 + c  with conv-output w = 2*aw + pw
    # (lanes 120..127 of each half are zero padding).
    acc1 = jnp.zeros((TB * 24, 256), f32)
    for ki in range(5):
        rows = x[:, ki:ki + 24, :].reshape(TB * 24, 28)   # (b,h) -> x[b,h+ki,:]
        acc1 = acc1 + jnp.dot(rows, w1_ref[ki], preferred_element_type=f32)
    a1 = acc1 + b1_ref[...]                               # (TB*24, 256)

    # ---- maxpool 2x2 + relu -----------------------------------------------
    mw = jnp.maximum(a1[:, :128], a1[:, 128:])            # pool over w
    mh = jnp.max(mw.reshape(TB, 12, 2, 128), axis=2)      # pool over h
    y1 = jnp.maximum(mh, 0.0)                             # (TB,12,128); lane=aw*10+c

    # ---- conv2 (5x5, 10->20); Dropout2d == identity in eval ---------------
    # Output columns: j = pw*128 + ow2*20 + oc  with conv-output ow = 2*ow2+pw
    acc2 = jnp.zeros((TB * 8, 256), f32)
    for ki in range(5):
        rows = y1[:, ki:ki + 8, :].reshape(TB * 8, 128)
        acc2 = acc2 + jnp.dot(rows, w2_ref[ki], preferred_element_type=f32)
    a2 = acc2 + b2_ref[...]                               # (TB*8, 256)

    mw2 = jnp.maximum(a2[:, :128], a2[:, 128:])           # pool over w
    mh2 = jnp.max(mw2.reshape(TB, 4, 2, 128), axis=2)     # pool over h
    y2 = jnp.maximum(mh2, 0.0)                            # (TB,4,128); lane=ow2*20+oc

    # ---- fc1 + relu (F.dropout == identity), fc2 + log_softmax ------------
    flat = y2.reshape(TB, 512)                            # index = oh2*128 + ow2*20 + oc
    h = jnp.dot(flat, w3_ref[...], preferred_element_type=f32) + fb1_ref[...]
    h = jnp.maximum(h, 0.0)                               # (TB, 50)

    logits = jnp.dot(h, w4_ref[...], preferred_element_type=f32) + fb2_ref[...]
    m = jnp.max(logits, axis=-1, keepdims=True)
    z = logits - m
    lse = jnp.log(jnp.sum(jnp.exp(z), axis=-1, keepdims=True))
    o_ref[...] = (z - lse).astype(o_ref.dtype)


# ------------------------------- wrapper ------------------------------------


def forward(x_nchw, kp, tb=8):
    """x_nchw: (B, 1, 28, 28) float32 (PyTorch layout) -> (B, 10) log-probs."""
    B = x_nchw.shape[0]
    x = x_nchw.reshape(B, 28, 28)                         # drop size-1 channel
    Bp = ((B + tb - 1) // tb) * tb
    if Bp != B:
        x = jnp.pad(x, ((0, Bp - B), (0, 0), (0, 0)))

    out = pl.pallas_call(
        _net_kernel,
        grid=(Bp // tb,),
        in_specs=[
            pl.BlockSpec((tb, 28, 28), lambda i: (i, 0, 0)),
            pl.BlockSpec((5, 28, 256), lambda i: (0, 0, 0)),    # w1 (resident)
            pl.BlockSpec((1, 256), lambda i: (0, 0)),           # b1
            pl.BlockSpec((5, 128, 256), lambda i: (0, 0, 0)),   # w2
            pl.BlockSpec((1, 256), lambda i: (0, 0)),           # b2
            pl.BlockSpec((512, 50), lambda i: (0, 0)),          # w3 (fc1)
            pl.BlockSpec((1, 50), lambda i: (0, 0)),            # fb1
            pl.BlockSpec((50, 10), lambda i: (0, 0)),           # w4 (fc2)
            pl.BlockSpec((1, 10), lambda i: (0, 0)),            # fb2
        ],
        out_specs=pl.BlockSpec((tb, 10), lambda i: (i, 0)),
        out_shape=jax.ShapeDtypeStruct((Bp, 10), jnp.float32),
        compiler_params=pltpu.CompilerParams(
            dimension_semantics=("parallel",),
            vmem_limit_bytes=32 * 1024 * 1024),
    )(x, kp["w1"], kp["b1"], kp["w2"], kp["b2"], kp["w3"], kp["fb1"],
      kp["w4"], kp["fb2"])
    return out[:B]


# ------------------------------ parameters ----------------------------------


def init_torch_params(key):
    """Parameters in PyTorch layouts: conv (O,I,kh,kw), linear (out,in)."""
    ks = jax.random.split(key, 8)
    sc = 0.05
    w1 = sc * jax.random.normal(ks[0], (10, 1, 5, 5), jnp.float32)
    b1 = sc * jax.random.normal(ks[1], (10,), jnp.float32)
    w2 = sc * jax.random.normal(ks[2], (20, 10, 5, 5), jnp.float32)
    b2 = sc * jax.random.normal(ks[3], (20,), jnp.float32)
    fw1 = sc * jax.random.normal(ks[4], (50, 320), jnp.float32)
    fb1 = sc * jax.random.normal(ks[5], (50,), jnp.float32)
    fw2 = sc * jax.random.normal(ks[6], (10, 50), jnp.float32)
    fb2 = sc * jax.random.normal(ks[7], (10,), jnp.float32)
    return (w1, b1, w2, b2, fw1, fb1, fw2, fb2)


def prepare_kernel_params(torch_params):
    """Re-lay PyTorch weights into the lane-dense matmul forms the kernel uses."""
    w1, b1, w2, b2, fw1, fb1, fw2, fb2 = [np.asarray(p, np.float32)
                                          for p in torch_params]

    # conv1 -> (5, 28, 256); column j = pw*128 + aw*10 + c, output w = 2*aw+pw.
    W1 = np.zeros((5, 28, 256), np.float32)
    B1 = np.zeros((1, 256), np.float32)
    for pw in range(2):
        for aw in range(12):
            w = 2 * aw + pw
            for c in range(10):
                col = pw * 128 + aw * 10 + c
                B1[0, col] = b1[c]
                for ki in range(5):
                    for kj in range(5):
                        W1[ki, w + kj, col] = w1[c, 0, ki, kj]

    # conv2 -> (5, 128, 256); row = aw*10 + ic; col = pw*128 + ow2*20 + oc,
    # output ow = 2*ow2 + pw.
    W2 = np.zeros((5, 128, 256), np.float32)
    B2 = np.zeros((1, 256), np.float32)
    for pw in range(2):
        for ow2 in range(4):
            ow = 2 * ow2 + pw
            for oc in range(20):
                col = pw * 128 + ow2 * 20 + oc
                B2[0, col] = b2[oc]
                for ki in range(5):
                    for kj in range(5):
                        aw = ow + kj
                        for ic in range(10):
                            W2[ki, aw * 10 + ic, col] = w2[oc, ic, ki, kj]

    # fc1 -> (512, 50); kernel flatten index = oh2*128 + ow2*20 + oc,
    # torch flatten index = oc*16 + oh2*4 + ow2.
    W3 = np.zeros((512, 50), np.float32)
    for oh2 in range(4):
        for ow2 in range(4):
            for oc in range(20):
                W3[oh2 * 128 + ow2 * 20 + oc, :] = fw1[:, oc * 16 + oh2 * 4 + ow2]

    return {
        "w1": jnp.asarray(W1), "b1": jnp.asarray(B1),
        "w2": jnp.asarray(W2), "b2": jnp.asarray(B2),
        "w3": jnp.asarray(W3), "fb1": jnp.asarray(fb1.reshape(1, 50)),
        "w4": jnp.asarray(fw2.T), "fb2": jnp.asarray(fb2.reshape(1, 10)),
    }


# ------------------------- pure-JAX reference check -------------------------


def forward_ref(x, torch_params):
    w1, b1, w2, b2, fw1, fb1, fw2, fb2 = torch_params
    B = x.shape[0]
    dn = ("NCHW", "OIHW", "NCHW")
    y1 = lax.conv_general_dilated(x, w1, (1, 1), "VALID", dimension_numbers=dn)
    y1 = y1 + b1.reshape(1, 10, 1, 1)
    y1 = jnp.maximum(jnp.max(y1.reshape(B, 10, 12, 2, 12, 2), axis=(3, 5)), 0.0)
    y2 = lax.conv_general_dilated(y1, w2, (1, 1), "VALID", dimension_numbers=dn)
    y2 = y2 + b2.reshape(1, 20, 1, 1)
    y2 = jnp.maximum(jnp.max(y2.reshape(B, 20, 4, 2, 4, 2), axis=(3, 5)), 0.0)
    flat = y2.reshape(B, 320)
    h = jnp.maximum(flat @ fw1.T + fb1, 0.0)
    logits = h @ fw2.T + fb2
    return jax.nn.log_softmax(logits, axis=1)


if __name__ == "__main__":
    root = jax.random.PRNGKey(0)
    kx, kparams = jax.random.split(root)
    x = jax.random.normal(kx, (2, 1, 28, 28), jnp.float32)   # NCHW like PyTorch

    torch_params = init_torch_params(kparams)
    kp = prepare_kernel_params(torch_params)

    out = jax.jit(forward)(x, kp)
    out = jax.block_until_ready(out)

    ref = forward_ref(x, torch_params)
    assert out.shape == (2, 10), out.shape
    np.testing.assert_allclose(np.asarray(out), np.asarray(ref),
                               rtol=1e-4, atol=1e-4)
    print("KERNEL_OK")
</pallas_src>

<mosaic_0001>
module attributes {stable_mosaic.version = 11 : i64} {
  func.func @_net_kernel(%arg0: i32, %arg1: memref<8x28x28xf32, #tpu.memory_space<vmem>>, %arg2: memref<5x28x256xf32, #tpu.memory_space<vmem>>, %arg3: memref<1x256xf32, #tpu.memory_space<vmem>>, %arg4: memref<5x128x256xf32, #tpu.memory_space<vmem>>, %arg5: memref<1x256xf32, #tpu.memory_space<vmem>>, %arg6: memref<512x50xf32, #tpu.memory_space<vmem>>, %arg7: memref<1x50xf32, #tpu.memory_space<vmem>>, %arg8: memref<50x10xf32, #tpu.memory_space<vmem>>, %arg9: memref<1x10xf32, #tpu.memory_space<vmem>>, %arg10: memref<8x10xf32, #tpu.memory_space<vmem>>) attributes {dimension_semantics = [#tpu.dimension_semantics<parallel>], iteration_bounds = array<i64: 1>, scalar_prefetch = 0 : i64, scratch_operands = 0 : i64, tpu.core_type = #tpu.core_type<tc>, window_params = [{transform_indices = @transform_0, window_bounds = array<i64: 8, 28, 28>}, {pipeline_mode = #tpu.pipeline_mode<synchronous>, transform_indices = @transform_1, window_bounds = array<i64: 5, 28, 256>}, {pipeline_mode = #tpu.pipeline_mode<synchronous>, transform_indices = @transform_2, window_bounds = array<i64: 1, 256>}, {pipeline_mode = #tpu.pipeline_mode<synchronous>, transform_indices = @transform_3, window_bounds = array<i64: 5, 128, 256>}, {pipeline_mode = #tpu.pipeline_mode<synchronous>, transform_indices = @transform_4, window_bounds = array<i64: 1, 256>}, {pipeline_mode = #tpu.pipeline_mode<synchronous>, transform_indices = @transform_5, window_bounds = array<i64: 512, 50>}, {pipeline_mode = #tpu.pipeline_mode<synchronous>, transform_indices = @transform_6, window_bounds = array<i64: 1, 50>}, {pipeline_mode = #tpu.pipeline_mode<synchronous>, transform_indices = @transform_7, window_bounds = array<i64: 50, 10>}, {pipeline_mode = #tpu.pipeline_mode<synchronous>, transform_indices = @transform_8, window_bounds = array<i64: 1, 10>}, {transform_indices = @transform_9, window_bounds = array<i64: 8, 10>}]} {
    %c0 = arith.constant 0 : index
    %c0_0 = arith.constant 0 : index
    %c0_1 = arith.constant 0 : index
    %0 = vector.load %arg1[%c0, %c0_0, %c0_1] : memref<8x28x28xf32, #tpu.memory_space<vmem>>, vector<8x28x28xf32>
    %cst = arith.constant 0.000000e+00 : f32
    %1 = vector.broadcast %cst : f32 to vector<192x256xf32>
    %2 = vector.extract_strided_slice %0 {offsets = [0, 0, 0], sizes = [8, 24, 28], strides = [1, 1, 1]} : vector<8x28x28xf32> to vector<8x24x28xf32>
    %3 = vector.shape_cast %2 : vector<8x24x28xf32> to vector<192x28xf32>
    %c0_2 = arith.constant 0 : index
    %c0_3 = arith.constant 0 : index
    %c0_4 = arith.constant 0 : index
    %4 = vector.load %arg2[%c0_2, %c0_3, %c0_4] : memref<5x28x256xf32, #tpu.memory_space<vmem>>, vector<1x28x256xf32>
    %5 = vector.shape_cast %4 : vector<1x28x256xf32> to vector<28x256xf32>
    %cst_5 = arith.constant dense<0.000000e+00> : vector<192x256xf32>
    %6 = tpu.matmul %3, %5, %cst_5 {dimension_numbers = #tpu.dot_dimension_numbers<[1], [0], [0], [1], [0, 0, 1, 1], [], []>} : vector<192x28xf32>, vector<28x256xf32>, vector<192x256xf32> -> vector<192x256xf32>
    %7 = arith.addf %1, %6 : vector<192x256xf32>
    %8 = vector.extract_strided_slice %0 {offsets = [0, 1, 0], sizes = [8, 24, 28], strides = [1, 1, 1]} : vector<8x28x28xf32> to vector<8x24x28xf32>
    %9 = vector.shape_cast %8 : vector<8x24x28xf32> to vector<192x28xf32>
    %c1 = arith.constant 1 : index
    %c0_6 = arith.constant 0 : index
    %c0_7 = arith.constant 0 : index
    %10 = vector.load %arg2[%c1, %c0_6, %c0_7] : memref<5x28x256xf32, #tpu.memory_space<vmem>>, vector<1x28x256xf32>
    %11 = vector.shape_cast %10 : vector<1x28x256xf32> to vector<28x256xf32>
    %cst_8 = arith.constant dense<0.000000e+00> : vector<192x256xf32>
    %12 = tpu.matmul %9, %11, %cst_8 {dimension_numbers = #tpu.dot_dimension_numbers<[1], [0], [0], [1], [0, 0, 1, 1], [], []>} : vector<192x28xf32>, vector<28x256xf32>, vector<192x256xf32> -> vector<192x256xf32>
    %13 = arith.addf %7, %12 : vector<192x256xf32>
    %14 = vector.extract_strided_slice %0 {offsets = [0, 2, 0], sizes = [8, 24, 28], strides = [1, 1, 1]} : vector<8x28x28xf32> to vector<8x24x28xf32>
    %15 = vector.shape_cast %14 : vector<8x24x28xf32> to vector<192x28xf32>
    %c2 = arith.constant 2 : index
    %c0_9 = arith.constant 0 : index
    %c0_10 = arith.constant 0 : index
    %16 = vector.load %arg2[%c2, %c0_9, %c0_10] : memref<5x28x256xf32, #tpu.memory_space<vmem>>, vector<1x28x256xf32>
    %17 = vector.shape_cast %16 : vector<1x28x256xf32> to vector<28x256xf32>
    %cst_11 = arith.constant dense<0.000000e+00> : vector<192x256xf32>
    %18 = tpu.matmul %15, %17, %cst_11 {dimension_numbers = #tpu.dot_dimension_numbers<[1], [0], [0], [1], [0, 0, 1, 1], [], []>} : vector<192x28xf32>, vector<28x256xf32>, vector<192x256xf32> -> vector<192x256xf32>
    %19 = arith.addf %13, %18 : vector<192x256xf32>
    %20 = vector.extract_strided_slice %0 {offsets = [0, 3, 0], sizes = [8, 24, 28], strides = [1, 1, 1]} : vector<8x28x28xf32> to vector<8x24x28xf32>
    %21 = vector.shape_cast %20 : vector<8x24x28xf32> to vector<192x28xf32>
    %c3 = arith.constant 3 : index
    %c0_12 = arith.constant 0 : index
    %c0_13 = arith.constant 0 : index
    %22 = vector.load %arg2[%c3, %c0_12, %c0_13] : memref<5x28x256xf32, #tpu.memory_space<vmem>>, vector<1x28x256xf32>
    %23 = vector.shape_cast %22 : vector<1x28x256xf32> to vector<28x256xf32>
    %cst_14 = arith.constant dense<0.000000e+00> : vector<192x256xf32>
    %24 = tpu.matmul %21, %23, %cst_14 {dimension_numbers = #tpu.dot_dimension_numbers<[1], [0], [0], [1], [0, 0, 1, 1], [], []>} : vector<192x28xf32>, vector<28x256xf32>, vector<192x256xf32> -> vector<192x256xf32>
    %25 = arith.addf %19, %24 : vector<192x256xf32>
    %26 = vector.extract_strided_slice %0 {offsets = [0, 4, 0], sizes = [8, 24, 28], strides = [1, 1, 1]} : vector<8x28x28xf32> to vector<8x24x28xf32>
    %27 = vector.shape_cast %26 : vector<8x24x28xf32> to vector<192x28xf32>
    %c4 = arith.constant 4 : index
    %c0_15 = arith.constant 0 : index
    %c0_16 = arith.constant 0 : index
    %28 = vector.load %arg2[%c4, %c0_15, %c0_16] : memref<5x28x256xf32, #tpu.memory_space<vmem>>, vector<1x28x256xf32>
    %29 = vector.shape_cast %28 : vector<1x28x256xf32> to vector<28x256xf32>
    %cst_17 = arith.constant dense<0.000000e+00> : vector<192x256xf32>
    %30 = tpu.matmul %27, %29, %cst_17 {dimension_numbers = #tpu.dot_dimension_numbers<[1], [0], [0], [1], [0, 0, 1, 1], [], []>} : vector<192x28xf32>, vector<28x256xf32>, vector<192x256xf32> -> vector<192x256xf32>
    %31 = arith.addf %25, %30 : vector<192x256xf32>
    %c0_18 = arith.constant 0 : index
    %c0_19 = arith.constant 0 : index
    %32 = vector.load %arg3[%c0_18, %c0_19] : memref<1x256xf32, #tpu.memory_space<vmem>>, vector<1x256xf32>
    %33 = vector.broadcast %32 : vector<1x256xf32> to vector<192x256xf32>
    %34 = arith.addf %31, %33 : vector<192x256xf32>
    %35 = vector.extract_strided_slice %34 {offsets = [0, 0], sizes = [192, 128], strides = [1, 1]} : vector<192x256xf32> to vector<192x128xf32>
    %36 = vector.extract_strided_slice %34 {offsets = [0, 128], sizes = [192, 128], strides = [1, 1]} : vector<192x256xf32> to vector<192x128xf32>
    %37 = arith.maximumf %35, %36 : vector<192x128xf32>
    %38 = vector.shape_cast %37 : vector<192x128xf32> to vector<8x12x2x128xf32>
    %cst_20 = arith.constant dense<0xFF800000> : vector<8x12x128xf32>
    %39 = vector.multi_reduction <maximumf>, %38, %cst_20 [2] : vector<8x12x2x128xf32> to vector<8x12x128xf32>
    %cst_21 = arith.constant 0.000000e+00 : f32
    %40 = vector.broadcast %cst_21 : f32 to vector<8x12x128xf32>
    %41 = arith.maximumf %39, %40 : vector<8x12x128xf32>
    %cst_22 = arith.constant 0.000000e+00 : f32
    %42 = vector.broadcast %cst_22 : f32 to vector<64x256xf32>
    %43 = vector.extract_strided_slice %41 {offsets = [0, 0, 0], sizes = [8, 8, 128], strides = [1, 1, 1]} : vector<8x12x128xf32> to vector<8x8x128xf32>
    %44 = vector.shape_cast %43 : vector<8x8x128xf32> to vector<64x128xf32>
    %c0_23 = arith.constant 0 : index
    %c0_24 = arith.constant 0 : index
    %c0_25 = arith.constant 0 : index
    %45 = vector.load %arg4[%c0_23, %c0_24, %c0_25] : memref<5x128x256xf32, #tpu.memory_space<vmem>>, vector<1x128x256xf32>
    %46 = vector.shape_cast %45 : vector<1x128x256xf32> to vector<128x256xf32>
    %cst_26 = arith.constant dense<0.000000e+00> : vector<64x256xf32>
    %47 = tpu.matmul %44, %46, %cst_26 {dimension_numbers = #tpu.dot_dimension_numbers<[1], [0], [0], [1], [0, 0, 1, 1], [], []>} : vector<64x128xf32>, vector<128x256xf32>, vector<64x256xf32> -> vector<64x256xf32>
    %48 = arith.addf %42, %47 : vector<64x256xf32>
    %49 = vector.extract_strided_slice %41 {offsets = [0, 1, 0], sizes = [8, 8, 128], strides = [1, 1, 1]} : vector<8x12x128xf32> to vector<8x8x128xf32>
    %50 = vector.shape_cast %49 : vector<8x8x128xf32> to vector<64x128xf32>
    %c1_27 = arith.constant 1 : index
    %c0_28 = arith.constant 0 : index
    %c0_29 = arith.constant 0 : index
    %51 = vector.load %arg4[%c1_27, %c0_28, %c0_29] : memref<5x128x256xf32, #tpu.memory_space<vmem>>, vector<1x128x256xf32>
    %52 = vector.shape_cast %51 : vector<1x128x256xf32> to vector<128x256xf32>
    %cst_30 = arith.constant dense<0.000000e+00> : vector<64x256xf32>
    %53 = tpu.matmul %50, %52, %cst_30 {dimension_numbers = #tpu.dot_dimension_numbers<[1], [0], [0], [1], [0, 0, 1, 1], [], []>} : vector<64x128xf32>, vector<128x256xf32>, vector<64x256xf32> -> vector<64x256xf32>
    %54 = arith.addf %48, %53 : vector<64x256xf32>
    %55 = vector.extract_strided_slice %41 {offsets = [0, 2, 0], sizes = [8, 8, 128], strides = [1, 1, 1]} : vector<8x12x128xf32> to vector<8x8x128xf32>
    %56 = vector.shape_cast %55 : vector<8x8x128xf32> to vector<64x128xf32>
    %c2_31 = arith.constant 2 : index
    %c0_32 = arith.constant 0 : index
    %c0_33 = arith.constant 0 : index
    %57 = vector.load %arg4[%c2_31, %c0_32, %c0_33] : memref<5x128x256xf32, #tpu.memory_space<vmem>>, vector<1x128x256xf32>
    %58 = vector.shape_cast %57 : vector<1x128x256xf32> to vector<128x256xf32>
    %cst_34 = arith.constant dense<0.000000e+00> : vector<64x256xf32>
    %59 = tpu.matmul %56, %58, %cst_34 {dimension_numbers = #tpu.dot_dimension_numbers<[1], [0], [0], [1], [0, 0, 1, 1], [], []>} : vector<64x128xf32>, vector<128x256xf32>, vector<64x256xf32> -> vector<64x256xf32>
    %60 = arith.addf %54, %59 : vector<64x256xf32>
    %61 = vector.extract_strided_slice %41 {offsets = [0, 3, 0], sizes = [8, 8, 128], strides = [1, 1, 1]} : vector<8x12x128xf32> to vector<8x8x128xf32>
    %62 = vector.shape_cast %61 : vector<8x8x128xf32> to vector<64x128xf32>
    %c3_35 = arith.constant 3 : index
    %c0_36 = arith.constant 0 : index
    %c0_37 = arith.constant 0 : index
    %63 = vector.load %arg4[%c3_35, %c0_36, %c0_37] : memref<5x128x256xf32, #tpu.memory_space<vmem>>, vector<1x128x256xf32>
    %64 = vector.shape_cast %63 : vector<1x128x256xf32> to vector<128x256xf32>
    %cst_38 = arith.constant dense<0.000000e+00> : vector<64x256xf32>
    %65 = tpu.matmul %62, %64, %cst_38 {dimension_numbers = #tpu.dot_dimension_numbers<[1], [0], [0], [1], [0, 0, 1, 1], [], []>} : vector<64x128xf32>, vector<128x256xf32>, vector<64x256xf32> -> vector<64x256xf32>
    %66 = arith.addf %60, %65 : vector<64x256xf32>
    %67 = vector.extract_strided_slice %41 {offsets = [0, 4, 0], sizes = [8, 8, 128], strides = [1, 1, 1]} : vector<8x12x128xf32> to vector<8x8x128xf32>
    %68 = vector.shape_cast %67 : vector<8x8x128xf32> to vector<64x128xf32>
    %c4_39 = arith.constant 4 : index
    %c0_40 = arith.constant 0 : index
    %c0_41 = arith.constant 0 : index
    %69 = vector.load %arg4[%c4_39, %c0_40, %c0_41] : memref<5x128x256xf32, #tpu.memory_space<vmem>>, vector<1x128x256xf32>
    %70 = vector.shape_cast %69 : vector<1x128x256xf32> to vector<128x256xf32>
    %cst_42 = arith.constant dense<0.000000e+00> : vector<64x256xf32>
    %71 = tpu.matmul %68, %70, %cst_42 {dimension_numbers = #tpu.dot_dimension_numbers<[1], [0], [0], [1], [0, 0, 1, 1], [], []>} : vector<64x128xf32>, vector<128x256xf32>, vector<64x256xf32> -> vector<64x256xf32>
    %72 = arith.addf %66, %71 : vector<64x256xf32>
    %c0_43 = arith.constant 0 : index
    %c0_44 = arith.constant 0 : index
    %73 = vector.load %arg5[%c0_43, %c0_44] : memref<1x256xf32, #tpu.memory_space<vmem>>, vector<1x256xf32>
    %74 = vector.broadcast %73 : vector<1x256xf32> to vector<64x256xf32>
    %75 = arith.addf %72, %74 : vector<64x256xf32>
    %76 = vector.extract_strided_slice %75 {offsets = [0, 0], sizes = [64, 128], strides = [1, 1]} : vector<64x256xf32> to vector<64x128xf32>
    %77 = vector.extract_strided_slice %75 {offsets = [0, 128], sizes = [64, 128], strides = [1, 1]} : vector<64x256xf32> to vector<64x128xf32>
    %78 = arith.maximumf %76, %77 : vector<64x128xf32>
    %79 = vector.shape_cast %78 : vector<64x128xf32> to vector<8x4x2x128xf32>
    %cst_45 = arith.constant dense<0xFF800000> : vector<8x4x128xf32>
    %80 = vector.multi_reduction <maximumf>, %79, %cst_45 [2] : vector<8x4x2x128xf32> to vector<8x4x128xf32>
    %cst_46 = arith.constant 0.000000e+00 : f32
    %81 = vector.broadcast %cst_46 : f32 to vector<8x4x128xf32>
    %82 = arith.maximumf %80, %81 : vector<8x4x128xf32>
    %83 = vector.shape_cast %82 : vector<8x4x128xf32> to vector<8x512xf32>
    %c0_47 = arith.constant 0 : index
    %c0_48 = arith.constant 0 : index
    %84 = vector.load %arg6[%c0_47, %c0_48] : memref<512x50xf32, #tpu.memory_space<vmem>>, vector<512x50xf32>
    %cst_49 = arith.constant dense<0.000000e+00> : vector<8x50xf32>
    %85 = tpu.matmul %83, %84, %cst_49 {dimension_numbers = #tpu.dot_dimension_numbers<[1], [0], [0], [1], [0, 0, 1, 1], [], []>} : vector<8x512xf32>, vector<512x50xf32>, vector<8x50xf32> -> vector<8x50xf32>
    %c0_50 = arith.constant 0 : index
    %c0_51 = arith.constant 0 : index
    %86 = vector.load %arg7[%c0_50, %c0_51] : memref<1x50xf32, #tpu.memory_space<vmem>>, vector<1x50xf32>
    %87 = vector.broadcast %86 : vector<1x50xf32> to vector<8x50xf32>
    %88 = arith.addf %85, %87 : vector<8x50xf32>
    %cst_52 = arith.constant 0.000000e+00 : f32
    %89 = vector.broadcast %cst_52 : f32 to vector<8x50xf32>
    %90 = arith.maximumf %88, %89 : vector<8x50xf32>
    %c0_53 = arith.constant 0 : index
    %c0_54 = arith.constant 0 : index
    %91 = vector.load %arg8[%c0_53, %c0_54] : memref<50x10xf32, #tpu.memory_space<vmem>>, vector<50x10xf32>
    %cst_55 = arith.constant dense<0.000000e+00> : vector<8x10xf32>
    %92 = tpu.matmul %90, %91, %cst_55 {dimension_numbers = #tpu.dot_dimension_numbers<[1], [0], [0], [1], [0, 0, 1, 1], [], []>} : vector<8x50xf32>, vector<50x10xf32>, vector<8x10xf32> -> vector<8x10xf32>
    %c0_56 = arith.constant 0 : index
    %c0_57 = arith.constant 0 : index
    %93 = vector.load %arg9[%c0_56, %c0_57] : memref<1x10xf32, #tpu.memory_space<vmem>>, vector<1x10xf32>
    %94 = vector.broadcast %93 : vector<1x10xf32> to vector<8x10xf32>
    %95 = arith.addf %92, %94 : vector<8x10xf32>
    %cst_58 = arith.constant dense<0xFF800000> : vector<8xf32>
    %96 = vector.multi_reduction <maximumf>, %95, %cst_58 [1] : vector<8x10xf32> to vector<8xf32>
    %97 = vector.shape_cast %96 : vector<8xf32> to vector<8x1xf32>
    %98 = vector.broadcast %97 : vector<8x1xf32> to vector<8x10xf32>
    %99 = arith.subf %95, %98 : vector<8x10xf32>
    %100 = math.exp %99 : vector<8x10xf32>
    %cst_59 = arith.constant dense<0.000000e+00> : vector<8xf32>
    %101 = vector.multi_reduction <add>, %100, %cst_59 [1] : vector<8x10xf32> to vector<8xf32>
    %102 = vector.shape_cast %101 : vector<8xf32> to vector<8x1xf32>
    %103 = math.log %102 : vector<8x1xf32>
    %104 = vector.broadcast %103 : vector<8x1xf32> to vector<8x10xf32>
    %105 = arith.subf %99, %104 : vector<8x10xf32>
    %c0_60 = arith.constant 0 : index
    %c0_61 = arith.constant 0 : index
    %106 = vector.load %arg10[%c0_60, %c0_61] : memref<8x10xf32, #tpu.memory_space<vmem>>, vector<8x10xf32>
    tpu.vector_store %arg10[%c0_60, %c0_61], %105 {strides = array<i32>} : memref<8x10xf32, #tpu.memory_space<vmem>>, vector<8x10xf32>,
    return
  }
  func.func @transform_0(%arg0: i32) -> (i32, i32, i32) {
    %c0_i32 = arith.constant 0 : i32
    %c0_i32_0 = arith.constant 0 : i32
    %c0_i32_1 = arith.constant 0 : i32
    return %arg0, %c0_i32, %c0_i32_0 : i32, i32, i32
  }
  func.func @transform_1(%arg0: i32) -> (i32, i32, i32) {
    %c0_i32 = arith.constant 0 : i32
    %c0_i32_0 = arith.constant 0 : i32
    %c0_i32_1 = arith.constant 0 : i32
    %c0_i32_2 = arith.constant 0 : i32
    return %c0_i32, %c0_i32_0, %c0_i32_1 : i32, i32, i32
  }
  func.func @transform_2(%arg0: i32) -> (i32, i32) {
    %c0_i32 = arith.constant 0 : i32
    %c0_i32_0 = arith.constant 0 : i32
    %c0_i32_1 = arith.constant 0 : i32
    return %c0_i32, %c0_i32_0 : i32, i32
  }
  func.func @transform_3(%arg0: i32) -> (i32, i32, i32) {
    %c0_i32 = arith.constant 0 : i32
    %c0_i32_0 = arith.constant 0 : i32
    %c0_i32_1 = arith.constant 0 : i32
    %c0_i32_2 = arith.constant 0 : i32
    return %c0_i32, %c0_i32_0, %c0_i32_1 : i32, i32, i32
  }
  func.func @transform_4(%arg0: i32) -> (i32, i32) {
    %c0_i32 = arith.constant 0 : i32
    %c0_i32_0 = arith.constant 0 : i32
    %c0_i32_1 = arith.constant 0 : i32
    return %c0_i32, %c0_i32_0 : i32, i32
  }
  func.func @transform_5(%arg0: i32) -> (i32, i32) {
    %c0_i32 = arith.constant 0 : i32
    %c0_i32_0 = arith.constant 0 : i32
    %c0_i32_1 = arith.constant 0 : i32
    return %c0_i32, %c0_i32_0 : i32, i32
  }
  func.func @transform_6(%arg0: i32) -> (i32, i32) {
    %c0_i32 = arith.constant 0 : i32
    %c0_i32_0 = arith.constant 0 : i32
    %c0_i32_1 = arith.constant 0 : i32
    return %c0_i32, %c0_i32_0 : i32, i32
  }
  func.func @transform_7(%arg0: i32) -> (i32, i32) {
    %c0_i32 = arith.constant 0 : i32
    %c0_i32_0 = arith.constant 0 : i32
    %c0_i32_1 = arith.constant 0 : i32
    return %c0_i32, %c0_i32_0 : i32, i32
  }
  func.func @transform_8(%arg0: i32) -> (i32, i32) {
    %c0_i32 = arith.constant 0 : i32
    %c0_i32_0 = arith.constant 0 : i32
    %c0_i32_1 = arith.constant 0 : i32
    return %c0_i32, %c0_i32_0 : i32, i32
  }
  func.func @transform_9(%arg0: i32) -> (i32, i32) {
    %c0_i32 = arith.constant 0 : i32
    %c0_i32_0 = arith.constant 0 : i32
    return %arg0, %c0_i32 : i32, i32
  }
}

</mosaic_0001>

<llo_original>
// kernel: forward.1
$region0: #{forward.1}
  #allocation0 [shape = 'u32[]', space=smem, size = 0x4, offset = 0x4, fixed_abs, tag = 'smem constant byte address 0x4 - core index']
  #allocation1 [shape = 'u32[144,128]{1,0:T(1,128)}', space=vmem, size = 0x12000, scoped, tag = 'internal scratch']
  %s0 = inlined_call_operand.vmem [shape: f32[8,28,28], index: 0, kind: input, shape index: {}]
  %s1 = inlined_call_operand.hbm [shape: f32[5,28,256], index: 1, kind: input, shape index: {}]
  %s2 = inlined_call_operand.vmem [shape: f32[1,256], index: 2, kind: input, shape index: {}]
  %s3 = inlined_call_operand.vmem [shape: f32[5,128,256], index: 3, kind: input, shape index: {}]
  %s4 = inlined_call_operand.vmem [shape: f32[1,256], index: 4, kind: input, shape index: {}]
  %s5 = inlined_call_operand.vmem [shape: f32[512,50], index: 5, kind: input, shape index: {}]
  %s6 = inlined_call_operand.vmem [shape: f32[1,50], index: 6, kind: input, shape index: {}]
  %s7 = inlined_call_operand.vmem [shape: f32[50,10], index: 7, kind: input, shape index: {}]
  %s8 = inlined_call_operand.vmem [shape: f32[1,10], index: 8, kind: input, shape index: {}]
  %s9 = inlined_call_operand.vmem [shape: f32[8,10], index: 9, kind: output, shape index: {}]
  %s10 = sld [smem:[#allocation0]]
  $region50: #{forward.1} parent=0
    _
  %s12 = ssub.s32 1, %s10
  %s13 = scalar_select 0, %s12, %s10
  $region1: #{forward.1} parent=0
    #allocation2 [shape = 'u8[163840]{0}', space=vmem, size = 0x28000, scoped, tag = 'input window, operand 1, single buffered']
    #allocation3 [shape = 's32[1]{0}', space=sflag, size = 0x4, scoped, tag = 'scoped memory for forward.1']
    %14 = vsyncpa [#allocation3], 0
    // Predicated region
    $region2: #{forward.1} parent=1 // pred_check
      _
    $region3: #{forward.1} parent=1 // pred_check_branch
      %16 = sbr.rel (0) target = $region5
    $region4: #{forward.1} parent=1 // pred_region
      _
    $region5: #{forward.1} parent=1 // pred_fallthru
      _
    // Predicated region
    $region6: #{forward.1} parent=1 // pred_check
      _
    $region7: #{forward.1} parent=1 // pred_check_branch
      %18 = sbr.rel (0) target = $region9
    $region8: #{forward.1} parent=1 // pred_region
      %s20 = ssub.s32 5120, 5120
      %21 = vsyncadd [#allocation3], %s20
      %s22 = sshll.u32 [#allocation2], 4
      %s23 = int_to_ptr.vmem [resolvable:$true] %s22
      %28 = dma.hbm_to_vmem [thread:$0]  %s1, 5120, %s23, [#allocation3], 256, 256, 16
    $region9: #{forward.1} parent=1 // pred_fallthru
      _
    // Predicated region
    $region10: #{forward.1} parent=1 // pred_check
      _
    $region11: #{forward.1} parent=1 // pred_check_branch
      %30 = sbr.rel (0) target = $region13
    $region12: #{forward.1} parent=1 // pred_region
      _
    $region13: #{forward.1} parent=1 // pred_fallthru
      _
    // Predicated region
    $region14: #{forward.1} parent=1 // pred_check
      _
    $region15: #{forward.1} parent=1 // pred_check_branch
      %32 = sbr.rel (0) target = $region17
    $region16: #{forward.1} parent=1 // pred_region
      _
    $region17: #{forward.1} parent=1 // pred_fallthru
      _
    // Predicated region
    $region18: #{forward.1} parent=1 // pred_check
      _
    $region19: #{forward.1} parent=1 // pred_check_branch
      %34 = sbr.rel (0) target = $region21
    $region20: #{forward.1} parent=1 // pred_region
      _
    $region21: #{forward.1} parent=1 // pred_fallthru
      _
    // Predicated region
    $region22: #{forward.1} parent=1 // pred_check
      _
    $region23: #{forward.1} parent=1 // pred_check_branch
      %36 = sbr.rel (0) target = $region25
    $region24: #{forward.1} parent=1 // pred_region
      _
    $region25: #{forward.1} parent=1 // pred_fallthru
      _
    // Predicated region
    $region26: #{forward.1} parent=1 // pred_check
      _
    $region27: #{forward.1} parent=1 // pred_check_branch
      %38 = sbr.rel (0) target = $region29
    $region28: #{forward.1} parent=1 // pred_region
      _
    $region29: #{forward.1} parent=1 // pred_fallthru
      _
    // Predicated region
    $region30: #{forward.1} parent=1 // pred_check
      _
    $region31: #{forward.1} parent=1 // pred_check_branch
      %40 = sbr.rel (0) target = $region33
    $region32: #{forward.1} parent=1 // pred_region
      _
    $region33: #{forward.1} parent=1 // pred_fallthru
      _
    // Predicated region
    $region34: #{forward.1} parent=1 // pred_check
      _
    $region35: #{forward.1} parent=1 // pred_check_branch
      %42 = sbr.rel (0) target = $region37
    $region36: #{forward.1} parent=1 // pred_region
      _
    $region37: #{forward.1} parent=1 // pred_fallthru
      _
    // Predicated region
    $region38: #{forward.1} parent=1 // pred_check
      _
    $region39: #{forward.1} parent=1 // pred_check_branch
      %44 = sbr.rel (0) target = $region41
    $region40: #{forward.1} parent=1 // pred_region
      %45 = dma.done [#allocation3], 5120
    $region41: #{forward.1} parent=1 // pred_fallthru
      _
    %v46 = vld [vmem:[%s0] sm:$0xff]
    %v47 = vld [vmem:[%s0 + $0x8] sm:$0xff]
    %v48 = vld [vmem:[%s0 + $0x10] sm:$0xff]
    %v49 = vld [vmem:[%s0 + $0x18] sm:$0xf]
    %v50 = vld [vmem:[%s0 + $0x20] sm:$0xff]
    %v51 = vld [vmem:[%s0 + $0x28] sm:$0xff]
    %v52 = vld [vmem:[%s0 + $0x30] sm:$0xff]
    %v53 = vld [vmem:[%s0 + $0x38] sm:$0xf]
    %v54 = vld [vmem:[%s0 + $0x40] sm:$0xff]
    %v55 = vld [vmem:[%s0 + $0x48] sm:$0xff]
    %v56 = vld [vmem:[%s0 + $0x50] sm:$0xff]
    %v57 = vld [vmem:[%s0 + $0x58] sm:$0xf]
    %v58 = vld [vmem:[%s0 + $0x60] sm:$0xff]
    %v59 = vld [vmem:[%s0 + $0x68] sm:$0xff]
    %v60 = vld [vmem:[%s0 + $0x70] sm:$0xff]
    %v61 = vld [vmem:[%s0 + $0x78] sm:$0xf]
    %v62 = vld [vmem:[%s0 + $0x80] sm:$0xff]
    %v63 = vld [vmem:[%s0 + $0x88] sm:$0xff]
    %v64 = vld [vmem:[%s0 + $0x90] sm:$0xff]
    %v65 = vld [vmem:[%s0 + $0x98] sm:$0xf]
    %v66 = vld [vmem:[%s0 + $0xa0] sm:$0xff]
    %v67 = vld [vmem:[%s0 + $0xa8] sm:$0xff]
    %v68 = vld [vmem:[%s0 + $0xb0] sm:$0xff]
    %v69 = vld [vmem:[%s0 + $0xb8] sm:$0xf]
    %v70 = vld [vmem:[%s0 + $0xc0] sm:$0xff]
    %v71 = vld [vmem:[%s0 + $0xc8] sm:$0xff]
    %v72 = vld [vmem:[%s0 + $0xd0] sm:$0xff]
    %v73 = vld [vmem:[%s0 + $0xd8] sm:$0xf]
    %v74 = vld [vmem:[%s0 + $0xe0] sm:$0xff]
    %v75 = vld [vmem:[%s0 + $0xe8] sm:$0xff]
    %v76 = vld [vmem:[%s0 + $0xf0] sm:$0xff]
    %v77 = vld [vmem:[%s0 + $0xf8] sm:$0xf]
    %v78 = vld [vmem:[#allocation2] sm:$0xff]
    %v79 = vld [vmem:[#allocation2 + $0x8] sm:$0xff]
    %v80 = vld [vmem:[#allocation2 + $0x10] sm:$0xff]
    %v81 = vld [vmem:[#allocation2 + $0x18] sm:$0xff]
    %v82 = vld [vmem:[#allocation2 + $0x20] sm:$0xff]
    %v83 = vld [vmem:[#allocation2 + $0x28] sm:$0xff]
    %v84 = vld [vmem:[#allocation2 + $0x30] sm:$0xf]
    %v85 = vld [vmem:[#allocation2 + $0x38] sm:$0xf]
    %vm118 = vcmask 1046528
    %v119 = vrot.slane %v46, 1
    %v120 = vrot.slane %v47, 1
    %v121 = vsel %vm118, %v119, %v120
    %v122 = vrot.slane %v48, 1
    %v123 = vsel %vm118, %v120, %v122
    %v124 = vrot.slane %v49, 1
    %v125 = vsel %vm118, %v122, %v124
    %v126 = vrot.slane %v50, 1
    %v127 = vrot.slane %v51, 1
    %v128 = vsel %vm118, %v126, %v127
    %v129 = vrot.slane %v52, 1
    %v130 = vsel %vm118, %v127, %v129
    %v131 = vrot.slane %v53, 1
    %v132 = vsel %vm118, %v129, %v131
    %v133 = vrot.slane %v54, 1
    %v134 = vrot.slane %v55, 1
    %v135 = vsel %vm118, %v133, %v134
    %v136 = vrot.slane %v56, 1
    %v137 = vsel %vm118, %v134, %v136
    %v138 = vrot.slane %v57, 1
    %v139 = vsel %vm118, %v136, %v138
    %v140 = vrot.slane %v58, 1
    %v141 = vrot.slane %v59, 1
    %v142 = vsel %vm118, %v140, %v141
    %v143 = vrot.slane %v60, 1
    %v144 = vsel %vm118, %v141, %v143
    %v145 = vrot.slane %v61, 1
    %v146 = vsel %vm118, %v143, %v145
    %v147 = vrot.slane %v62, 1
    %v148 = vrot.slane %v63, 1
    %v149 = vsel %vm118, %v147, %v148
    %v150 = vrot.slane %v64, 1
    %v151 = vsel %vm118, %v148, %v150
    %v152 = vrot.slane %v65, 1
    %v153 = vsel %vm118, %v150, %v152
    %v154 = vrot.slane %v66, 1
    %v155 = vrot.slane %v67, 1
    %v156 = vsel %vm118, %v154, %v155
    %v157 = vrot.slane %v68, 1
    %v158 = vsel %vm118, %v155, %v157
    %v159 = vrot.slane %v69, 1
    %v160 = vsel %vm118, %v157, %v159
    %v161 = vrot.slane %v70, 1
    %v162 = vrot.slane %v71, 1
    %v163 = vsel %vm118, %v161, %v162
    %v164 = vrot.slane %v72, 1
    %v165 = vsel %vm118, %v162, %v164
    %v166 = vrot.slane %v73, 1
    %v167 = vsel %vm118, %v164, %v166
    %v168 = vrot.slane %v74, 1
    %v169 = vrot.slane %v75, 1
    %v170 = vsel %vm118, %v168, %v169
    %v171 = vrot.slane %v76, 1
    %v172 = vsel %vm118, %v169, %v171
    %v173 = vrot.slane %v77, 1
    %v174 = vsel %vm118, %v171, %v173
    %s175 = scalar_lea.vmem [#allocation2], 64
    %v176 = vld [vmem:[%s175] sm:$0xff]
    %v177 = vld [vmem:[%s175 + $0x8] sm:$0xff]
    %v178 = vld [vmem:[%s175 + $0x10] sm:$0xff]
    %v179 = vld [vmem:[%s175 + $0x18] sm:$0xff]
    %v180 = vld [vmem:[%s175 + $0x20] sm:$0xff]
    %v181 = vld [vmem:[%s175 + $0x28] sm:$0xff]
    %v182 = vld [vmem:[%s175 + $0x30] sm:$0xf]
    %v183 = vld [vmem:[%s175 + $0x38] sm:$0xf]
    %vm184 = vcmask 228352
    %v185 = vsel %vm184, %v121, 0
    %v187 = vsel %vm184, %v123, 0
    %v189 = vsel %vm184, %v125, 0
    %v191 = vsel %vm184, %v128, 0
    %v193 = vsel %vm184, %v130, 0
    %v195 = vsel %vm184, %v132, 0
    %v197 = vsel %vm184, %v135, 0
    %v199 = vsel %vm184, %v137, 0
    %v201 = vsel %vm184, %v139, 0
    %v203 = vsel %vm184, %v142, 0
    %v205 = vsel %vm184, %v144, 0
    %v207 = vsel %vm184, %v146, 0
    %v209 = vsel %vm184, %v149, 0
    %v211 = vsel %vm184, %v151, 0
    %v213 = vsel %vm184, %v153, 0
    %v215 = vsel %vm184, %v156, 0
    %v217 = vsel %vm184, %v158, 0
    %v219 = vsel %vm184, %v160, 0
    %v221 = vsel %vm184, %v163, 0
    %v223 = vsel %vm184, %v165, 0
    %v225 = vsel %vm184, %v167, 0
    %v227 = vsel %vm184, %v170, 0
    %v229 = vsel %vm184, %v172, 0
    %v231 = vsel %vm184, %v174, 0
    %vm233 = vcmask 1043456
    %v235 = vsel %vm233, %v182, 0
    %v238 = vsel %vm233, %v183, 0
    %240 = vmatprep.subr.mxu0 0.0
    %241 = vmatpush1.msra.mxu0 0.0
    %242 = vmatprep.subr.mxu0 0.0
    %243 = vmatpush1.msra.mxu0 0.0
    %244 = vmatprep.subr.mxu0 0.0
    %245 = vmatpush1.msra.mxu0 0.0
    %246 = vmatprep.subr.mxu0 0.0
    %247 = vmatpush1.msra.mxu0 0.0
    %248 = vmatprep.subr.mxu0 0.0
    %249 = vmatpush1.msra.mxu0 0.0
    %250 = vmatprep.subr.mxu0 0.0
    %251 = vmatpush1.msra.mxu0 0.0
    %252 = vmatprep.subr.mxu0 0.0
    %253 = vmatpush1.msra.mxu0 0.0
    %254 = vmatprep.subr.mxu0 0.0
    %255 = vmatpush1.msra.mxu0 0.0
    %256 = vmatprep.subr.mxu0 0.0
    %257 = vmatpush1.msra.mxu0 0.0
    %258 = vmatprep.subr.mxu0 0.0
    %259 = vmatpush1.msra.mxu0 0.0
    %260 = vmatprep.subr.mxu0 0.0
    %261 = vmatpush1.msra.mxu0 0.0
    %262 = vmatprep.subr.mxu0 0.0
    %263 = vmatpush1.msra.mxu0 0.0
    %264 = vmatprep.subr.mxu0 %v238
    %265 = vmatpush1.msra.mxu0 %v235
    %266 = vmatprep.subr.mxu0 %v181
    %267 = vmatpush1.msra.mxu0 %v180
    %268 = vmatprep.subr.mxu0 %v179
    %269 = vmatpush1.msra.mxu0 %v178
    %270 = vmatprep.subr.mxu0 %v177
    %271 = vmatpush1.msra.mxu0 %v176
    %272 = vmatprep.subr.mxu0 0.0
    %273 = vmatpush2.msra.mxu0 0.0
    %274 = vmatprep.subr.mxu0 0.0
    %275 = vmatpush2.msra.mxu0 0.0
    %276 = vmatprep.subr.mxu0 0.0
    %277 = vmatpush2.msra.mxu0 0.0
    %278 = vmatprep.subr.mxu0 0.0
    %279 = vmatpush2.msra.mxu0 0.0
    %280 = vmatprep.subr.mxu0 0.0
    %281 = vmatpush2.msra.mxu0 0.0
    %282 = vmatprep.subr.mxu0 0.0
    %283 = vmatpush2.msra.mxu0 0.0
    %284 = vmatprep.subr.mxu0 0.0
    %285 = vmatpush2.msra.mxu0 0.0
    %286 = vmatprep.subr.mxu0 0.0
    %287 = vmatpush2.msra.mxu0 0.0
    %288 = vmatprep.subr.mxu0 0.0
    %289 = vmatpush2.msra.mxu0 0.0
    %290 = vmatprep.subr.mxu0 0.0
    %291 = vmatpush2.msra.mxu0 0.0
    %292 = vmatprep.subr.mxu0 0.0
    %293 = vmatpush2.msra.mxu0 0.0
    %294 = vmatprep.subr.mxu0 0.0
    %295 = vmatpush2.msra.mxu0 0.0
    %296 = vmatprep.subr.mxu0 0.0
    %297 = vmatpush2.msra.mxu0 0.0
    %298 = vmatprep.subr.mxu0 0.0
    %299 = vmatpush2.msra.mxu0 0.0
    %300 = vmatprep.subr.mxu0 0.0
    %301 = vmatpush2.msra.mxu0 0.0
    %302 = vmatprep.subr.mxu0 0.0
    %303 = vmatpush2.msra.mxu0 0.0
    %304 = vmatprep.mubr.f32.mxu0 0.0
    %305 = vmatmul.mubr.f32.gmra.mxu0 %v185
    %v306 = vpop.f32.mrf.mxu0
    %v307 = vadd.f32 0.0, %v306
    %v308 = vpop.f32.mrf.mxu0
    %v309 = vadd.f32 0.0, %v308
    %310 = vmatprep.mubr.f32.mxu0 0.0
    %311 = vmatmul.mubr.f32.gmra.mxu0 %v187
    %v312 = vpop.f32.mrf.mxu0
    %v313 = vadd.f32 0.0, %v312
    %v314 = vpop.f32.mrf.mxu0
    %v315 = vadd.f32 0.0, %v314
    %316 = vmatprep.mubr.f32.mxu0 0.0
    %317 = vmatmul.mubr.f32.gmra.mxu0 %v189
    %v318 = vpop.f32.mrf.mxu0
    %v319 = vadd.f32 0.0, %v318
    %v320 = vpop.f32.mrf.mxu0
    %v321 = vadd.f32 0.0, %v320
    %322 = vmatprep.mubr.f32.mxu0 0.0
    %323 = vmatmul.mubr.f32.gmra.mxu0 %v191
    %v324 = vpop.f32.mrf.mxu0
    %v325 = vadd.f32 0.0, %v324
    %v326 = vpop.f32.mrf.mxu0
    %v327 = vadd.f32 0.0, %v326
    %328 = vmatprep.mubr.f32.mxu0 0.0
    %329 = vmatmul.mubr.f32.gmra.mxu0 %v193
    %v330 = vpop.f32.mrf.mxu0
    %v331 = vadd.f32 0.0, %v330
    %v332 = vpop.f32.mrf.mxu0
    %v333 = vadd.f32 0.0, %v332
    %334 = vmatprep.mubr.f32.mxu0 0.0
    %335 = vmatmul.mubr.f32.gmra.mxu0 %v195
    %v336 = vpop.f32.mrf.mxu0
    %v337 = vadd.f32 0.0, %v336
    %v338 = vpop.f32.mrf.mxu0
    %v339 = vadd.f32 0.0, %v338
    %340 = vmatprep.mubr.f32.mxu0 0.0
    %341 = vmatmul.mubr.f32.gmra.mxu0 %v197
    %v342 = vpop.f32.mrf.mxu0
    %v343 = vadd.f32 0.0, %v342
    %v344 = vpop.f32.mrf.mxu0
    %v345 = vadd.f32 0.0, %v344
    %346 = vmatprep.mubr.f32.mxu0 0.0
    %347 = vmatmul.mubr.f32.gmra.mxu0 %v199
    %v348 = vpop.f32.mrf.mxu0
    %v349 = vadd.f32 0.0, %v348
    %v350 = vpop.f32.mrf.mxu0
    %v351 = vadd.f32 0.0, %v350
    %352 = vmatprep.mubr.f32.mxu0 0.0
    %353 = vmatmul.mubr.f32.gmra.mxu0 %v201
    %v354 = vpop.f32.mrf.mxu0
    %v355 = vadd.f32 0.0, %v354
    %v356 = vpop.f32.mrf.mxu0
    %v357 = vadd.f32 0.0, %v356
    %358 = vmatprep.mubr.f32.mxu0 0.0
    %359 = vmatmul.mubr.f32.gmra.mxu0 %v203
    %v360 = vpop.f32.mrf.mxu0
    %v361 = vadd.f32 0.0, %v360
    %v362 = vpop.f32.mrf.mxu0
    %v363 = vadd.f32 0.0, %v362
    %364 = vmatprep.mubr.f32.mxu0 0.0
    %365 = vmatmul.mubr.f32.gmra.mxu0 %v205
    %v366 = vpop.f32.mrf.mxu0
    %v367 = vadd.f32 0.0, %v366
    %v368 = vpop.f32.mrf.mxu0
    %v369 = vadd.f32 0.0, %v368
    %370 = vmatprep.mubr.f32.mxu0 0.0
    %371 = vmatmul.mubr.f32.gmra.mxu0 %v207
    %v372 = vpop.f32.mrf.mxu0
    %v373 = vadd.f32 0.0, %v372
    %v374 = vpop.f32.mrf.mxu0
    %v375 = vadd.f32 0.0, %v374
    %376 = vmatprep.mubr.f32.mxu0 0.0
    %377 = vmatmul.mubr.f32.gmra.mxu0 %v209
    %v378 = vpop.f32.mrf.mxu0
    %v379 = vadd.f32 0.0, %v378
    %v380 = vpop.f32.mrf.mxu0
    %v381 = vadd.f32 0.0, %v380
    %382 = vmatprep.mubr.f32.mxu0 0.0
    %383 = vmatmul.mubr.f32.gmra.mxu0 %v211
    %v384 = vpop.f32.mrf.mxu0
    %v385 = vadd.f32 0.0, %v384
    %v386 = vpop.f32.mrf.mxu0
    %v387 = vadd.f32 0.0, %v386
    %388 = vmatprep.mubr.f32.mxu0 0.0
    %389 = vmatmul.mubr.f32.gmra.mxu0 %v213
    %v390 = vpop.f32.mrf.mxu0
    %v391 = vadd.f32 0.0, %v390
    %v392 = vpop.f32.mrf.mxu0
    %v393 = vadd.f32 0.0, %v392
    %394 = vmatprep.mubr.f32.mxu0 0.0
    %395 = vmatmul.mubr.f32.gmra.mxu0 %v215
    %v396 = vpop.f32.mrf.mxu0
    %v397 = vadd.f32 0.0, %v396
    %v398 = vpop.f32.mrf.mxu0
    %v399 = vadd.f32 0.0, %v398
    %400 = vmatprep.mubr.f32.mxu0 0.0
    %401 = vmatmul.mubr.f32.gmra.mxu0 %v217
    %v402 = vpop.f32.mrf.mxu0
    %v403 = vadd.f32 0.0, %v402
    %v404 = vpop.f32.mrf.mxu0
    %v405 = vadd.f32 0.0, %v404
    %406 = vmatprep.mubr.f32.mxu0 0.0
    %407 = vmatmul.mubr.f32.gmra.mxu0 %v219
    %v408 = vpop.f32.mrf.mxu0
    %v409 = vadd.f32 0.0, %v408
    %v410 = vpop.f32.mrf.mxu0
    %v411 = vadd.f32 0.0, %v410
    %412 = vmatprep.mubr.f32.mxu0 0.0
    %413 = vmatmul.mubr.f32.gmra.mxu0 %v221
    %v414 = vpop.f32.mrf.mxu0
    %v415 = vadd.f32 0.0, %v414
    %v416 = vpop.f32.mrf.mxu0
    %v417 = vadd.f32 0.0, %v416
    %418 = vmatprep.mubr.f32.mxu0 0.0
    %419 = vmatmul.mubr.f32.gmra.mxu0 %v223
    %v420 = vpop.f32.mrf.mxu0
    %v421 = vadd.f32 0.0, %v420
    %v422 = vpop.f32.mrf.mxu0
    %v423 = vadd.f32 0.0, %v422
    %424 = vmatprep.mubr.f32.mxu0 0.0
    %425 = vmatmul.mubr.f32.gmra.mxu0 %v225
    %v426 = vpop.f32.mrf.mxu0
    %v427 = vadd.f32 0.0, %v426
    %v428 = vpop.f32.mrf.mxu0
    %v429 = vadd.f32 0.0, %v428
    %430 = vmatprep.mubr.f32.mxu0 0.0
    %431 = vmatmul.mubr.f32.gmra.mxu0 %v227
    %v432 = vpop.f32.mrf.mxu0
    %v433 = vadd.f32 0.0, %v432
    %v434 = vpop.f32.mrf.mxu0
    %v435 = vadd.f32 0.0, %v434
    %436 = vmatprep.mubr.f32.mxu0 0.0
    %437 = vmatmul.mubr.f32.gmra.mxu0 %v229
    %v438 = vpop.f32.mrf.mxu0
    %v439 = vadd.f32 0.0, %v438
    %v440 = vpop.f32.mrf.mxu0
    %v441 = vadd.f32 0.0, %v440
    %442 = vmatprep.mubr.f32.mxu0 0.0
    %443 = vmatmul.mubr.f32.gmra.mxu0 %v231
    %v444 = vpop.f32.mrf.mxu0
    %v445 = vadd.f32 0.0, %v444
    %v446 = vpop.f32.mrf.mxu0
    %v447 = vadd.f32 0.0, %v446
    %448 = vdwg.mxu0
    %v449 = vsel %vm184, %v46, 0
    %v451 = vsel %vm184, %v47, 0
    %v453 = vsel %vm184, %v48, 0
    %v455 = vsel %vm184, %v50, 0
    %v457 = vsel %vm184, %v51, 0
    %v459 = vsel %vm184, %v52, 0
    %v461 = vsel %vm184, %v54, 0
    %v463 = vsel %vm184, %v55, 0
    %v465 = vsel %vm184, %v56, 0
    %v467 = vsel %vm184, %v58, 0
    %v469 = vsel %vm184, %v59, 0
    %v471 = vsel %vm184, %v60, 0
    %v473 = vsel %vm184, %v62, 0
    %v475 = vsel %vm184, %v63, 0
    %v477 = vsel %vm184, %v64, 0
    %v479 = vsel %vm184, %v66, 0
    %v481 = vsel %vm184, %v67, 0
    %v483 = vsel %vm184, %v68, 0
    %v485 = vsel %vm184, %v70, 0
    %v487 = vsel %vm184, %v71, 0
    %v489 = vsel %vm184, %v72, 0
    %v491 = vsel %vm184, %v74, 0
    %v493 = vsel %vm184, %v75, 0
    %v495 = vsel %vm184, %v76, 0
    %v498 = vsel %vm233, %v84, 0
    %v501 = vsel %vm233, %v85, 0
    %503 = vmatprep.subr.mxu0 0.0
    %504 = vmatpush1.msra.mxu0 0.0
    %505 = vmatprep.subr.mxu0 0.0
    %506 = vmatpush1.msra.mxu0 0.0
    %507 = vmatprep.subr.mxu0 0.0
    %508 = vmatpush1.msra.mxu0 0.0
    %509 = vmatprep.subr.mxu0 0.0
    %510 = vmatpush1.msra.mxu0 0.0
    %511 = vmatprep.subr.mxu0 0.0
    %512 = vmatpush1.msra.mxu0 0.0
    %513 = vmatprep.subr.mxu0 0.0
    %514 = vmatpush1.msra.mxu0 0.0
    %515 = vmatprep.subr.mxu0 0.0
    %516 = vmatpush1.msra.mxu0 0.0
    %517 = vmatprep.subr.mxu0 0.0
    %518 = vmatpush1.msra.mxu0 0.0
    %519 = vmatprep.subr.mxu0 0.0
    %520 = vmatpush1.msra.mxu0 0.0
    %521 = vmatprep.subr.mxu0 0.0
    %522 = vmatpush1.msra.mxu0 0.0
    %523 = vmatprep.subr.mxu0 0.0
    %524 = vmatpush1.msra.mxu0 0.0
    %525 = vmatprep.subr.mxu0 0.0
    %526 = vmatpush1.msra.mxu0 0.0
    %527 = vmatprep.subr.mxu0 %v501
    %528 = vmatpush1.msra.mxu0 %v498
    %529 = vmatprep.subr.mxu0 %v83
    %530 = vmatpush1.msra.mxu0 %v82
    %531 = vmatprep.subr.mxu0 %v81
    %532 = vmatpush1.msra.mxu0 %v80
    %533 = vmatprep.subr.mxu0 %v79
    %534 = vmatpush1.msra.mxu0 %v78
    %535 = vmatprep.subr.mxu0 0.0
    %536 = vmatpush2.msra.mxu0 0.0
    %537 = vmatprep.subr.mxu0 0.0
    %538 = vmatpush2.msra.mxu0 0.0
    %539 = vmatprep.subr.mxu0 0.0
    %540 = vmatpush2.msra.mxu0 0.0
    %541 = vmatprep.subr.mxu0 0.0
    %542 = vmatpush2.msra.mxu0 0.0
    %543 = vmatprep.subr.mxu0 0.0
    %544 = vmatpush2.msra.mxu0 0.0
    %545 = vmatprep.subr.mxu0 0.0
    %546 = vmatpush2.msra.mxu0 0.0
    %547 = vmatprep.subr.mxu0 0.0
    %548 = vmatpush2.msra.mxu0 0.0
    %549 = vmatprep.subr.mxu0 0.0
    %550 = vmatpush2.msra.mxu0 0.0
    %551 = vmatprep.subr.mxu0 0.0
    %552 = vmatpush2.msra.mxu0 0.0
    %553 = vmatprep.subr.mxu0 0.0
    %554 = vmatpush2.msra.mxu0 0.0
    %555 = vmatprep.subr.mxu0 0.0
    %556 = vmatpush2.msra.mxu0 0.0
    %557 = vmatprep.subr.mxu0 0.0
    %558 = vmatpush2.msra.mxu0 0.0
    %559 = vmatprep.subr.mxu0 0.0
    %560 = vmatpush2.msra.mxu0 0.0
    %561 = vmatprep.subr.mxu0 0.0
    %562 = vmatpush2.msra.mxu0 0.0
    %563 = vmatprep.subr.mxu0 0.0
    %564 = vmatpush2.msra.mxu0 0.0
    %565 = vmatprep.subr.mxu0 0.0
    %566 = vmatpush2.msra.mxu0 0.0
    %567 = vmatprep.mubr.f32.mxu0 0.0
    %568 = vmatmul.mubr.f32.gmra.mxu0 %v449
    %v569 = vpop.f32.mrf.mxu0
    %v570 = vadd.f32 %v307, %v569
    %v571 = vpop.f32.mrf.mxu0
    %v572 = vadd.f32 %v309, %v571
    %573 = vmatprep.mubr.f32.mxu0 0.0
    %574 = vmatmul.mubr.f32.gmra.mxu0 %v451
    %v575 = vpop.f32.mrf.mxu0
    %v576 = vadd.f32 %v313, %v575
    %v577 = vpop.f32.mrf.mxu0
    %v578 = vadd.f32 %v315, %v577
    %579 = vmatprep.mubr.f32.mxu0 0.0
    %580 = vmatmul.mubr.f32.gmra.mxu0 %v453
    %v581 = vpop.f32.mrf.mxu0
    %v582 = vadd.f32 %v319, %v581
    %v583 = vpop.f32.mrf.mxu0
    %v584 = vadd.f32 %v321, %v583
    %585 = vmatprep.mubr.f32.mxu0 0.0
    %586 = vmatmul.mubr.f32.gmra.mxu0 %v455
    %v587 = vpop.f32.mrf.mxu0
    %v588 = vadd.f32 %v325, %v587
    %v589 = vpop.f32.mrf.mxu0
    %v590 = vadd.f32 %v327, %v589
    %591 = vmatprep.mubr.f32.mxu0 0.0
    %592 = vmatmul.mubr.f32.gmra.mxu0 %v457
    %v593 = vpop.f32.mrf.mxu0
    %v594 = vadd.f32 %v331, %v593
    %v595 = vpop.f32.mrf.mxu0
    %v596 = vadd.f32 %v333, %v595
    %597 = vmatprep.mubr.f32.mxu0 0.0
    %598 = vmatmul.mubr.f32.gmra.mxu0 %v459
    %v599 = vpop.f32.mrf.mxu0
    %v600 = vadd.f32 %v337, %v599
    %v601 = vpop.f32.mrf.mxu0
    %v602 = vadd.f32 %v339, %v601
    %603 = vmatprep.mubr.f32.mxu0 0.0
    %604 = vmatmul.mubr.f32.gmra.mxu0 %v461
    %v605 = vpop.f32.mrf.mxu0
    %v606 = vadd.f32 %v343, %v605
    %v607 = vpop.f32.mrf.mxu0
    %v608 = vadd.f32 %v345, %v607
    %609 = vmatprep.mubr.f32.mxu0 0.0
    %610 = vmatmul.mubr.f32.gmra.mxu0 %v463
    %v611 = vpop.f32.mrf.mxu0
    %v612 = vadd.f32 %v349, %v611
    %v613 = vpop.f32.mrf.mxu0
    %v614 = vadd.f32 %v351, %v613
    %615 = vmatprep.mubr.f32.mxu0 0.0
    %616 = vmatmul.mubr.f32.gmra.mxu0 %v465
    %v617 = vpop.f32.mrf.mxu0
    %v618 = vadd.f32 %v355, %v617
    %v619 = vpop.f32.mrf.mxu0
    %v620 = vadd.f32 %v357, %v619
    %621 = vmatprep.mubr.f32.mxu0 0.0
    %622 = vmatmul.mubr.f32.gmra.mxu0 %v467
    %v623 = vpop.f32.mrf.mxu0
    %v624 = vadd.f32 %v361, %v623
    %v625 = vpop.f32.mrf.mxu0
    %v626 = vadd.f32 %v363, %v625
    %627 = vmatprep.mubr.f32.mxu0 0.0
    %628 = vmatmul.mubr.f32.gmra.mxu0 %v469
    %v629 = vpop.f32.mrf.mxu0
    %v630 = vadd.f32 %v367, %v629
    %v631 = vpop.f32.mrf.mxu0
    %v632 = vadd.f32 %v369, %v631
    %633 = vmatprep.mubr.f32.mxu0 0.0
    %634 = vmatmul.mubr.f32.gmra.mxu0 %v471
    %v635 = vpop.f32.mrf.mxu0
    %v636 = vadd.f32 %v373, %v635
    %v637 = vpop.f32.mrf.mxu0
    %v638 = vadd.f32 %v375, %v637
    %639 = vmatprep.mubr.f32.mxu0 0.0
    %640 = vmatmul.mubr.f32.gmra.mxu0 %v473
    %v641 = vpop.f32.mrf.mxu0
    %v642 = vadd.f32 %v379, %v641
    %v643 = vpop.f32.mrf.mxu0
    %v644 = vadd.f32 %v381, %v643
    %645 = vmatprep.mubr.f32.mxu0 0.0
    %646 = vmatmul.mubr.f32.gmra.mxu0 %v475
    %v647 = vpop.f32.mrf.mxu0
    %v648 = vadd.f32 %v385, %v647
    %v649 = vpop.f32.mrf.mxu0
    %v650 = vadd.f32 %v387, %v649
    %651 = vmatprep.mubr.f32.mxu0 0.0
    %652 = vmatmul.mubr.f32.gmra.mxu0 %v477
    %v653 = vpop.f32.mrf.mxu0
    %v654 = vadd.f32 %v391, %v653
    %v655 = vpop.f32.mrf.mxu0
    %v656 = vadd.f32 %v393, %v655
    %657 = vmatprep.mubr.f32.mxu0 0.0
    %658 = vmatmul.mubr.f32.gmra.mxu0 %v479
    %v659 = vpop.f32.mrf.mxu0
    %v660 = vadd.f32 %v397, %v659
    %v661 = vpop.f32.mrf.mxu0
    %v662 = vadd.f32 %v399, %v661
    %663 = vmatprep.mubr.f32.mxu0 0.0
    %664 = vmatmul.mubr.f32.gmra.mxu0 %v481
    %v665 = vpop.f32.mrf.mxu0
    %v666 = vadd.f32 %v403, %v665
    %v667 = vpop.f32.mrf.mxu0
    %v668 = vadd.f32 %v405, %v667
    %669 = vmatprep.mubr.f32.mxu0 0.0
    %670 = vmatmul.mubr.f32.gmra.mxu0 %v483
    %v671 = vpop.f32.mrf.mxu0
    %v672 = vadd.f32 %v409, %v671
    %v673 = vpop.f32.mrf.mxu0
    %v674 = vadd.f32 %v411, %v673
    %675 = vmatprep.mubr.f32.mxu0 0.0
    %676 = vmatmul.mubr.f32.gmra.mxu0 %v485
    %v677 = vpop.f32.mrf.mxu0
    %v678 = vadd.f32 %v415, %v677
    %v679 = vpop.f32.mrf.mxu0
    %v680 = vadd.f32 %v417, %v679
    %681 = vmatprep.mubr.f32.mxu0 0.0
    %682 = vmatmul.mubr.f32.gmra.mxu0 %v487
    %v683 = vpop.f32.mrf.mxu0
    %v684 = vadd.f32 %v421, %v683
    %v685 = vpop.f32.mrf.mxu0
    %v686 = vadd.f32 %v423, %v685
    %687 = vmatprep.mubr.f32.mxu0 0.0
    %688 = vmatmul.mubr.f32.gmra.mxu0 %v489
    %v689 = vpop.f32.mrf.mxu0
    %v690 = vadd.f32 %v427, %v689
    %v691 = vpop.f32.mrf.mxu0
    %v692 = vadd.f32 %v429, %v691
    %693 = vmatprep.mubr.f32.mxu0 0.0
    %694 = vmatmul.mubr.f32.gmra.mxu0 %v491
    %v695 = vpop.f32.mrf.mxu0
    %v696 = vadd.f32 %v433, %v695
    %v697 = vpop.f32.mrf.mxu0
    %v698 = vadd.f32 %v435, %v697
    %699 = vmatprep.mubr.f32.mxu0 0.0
    %700 = vmatmul.mubr.f32.gmra.mxu0 %v493
    %v701 = vpop.f32.mrf.mxu0
    %v702 = vadd.f32 %v439, %v701
    %v703 = vpop.f32.mrf.mxu0
    %v704 = vadd.f32 %v441, %v703
    %705 = vmatprep.mubr.f32.mxu0 0.0
    %706 = vmatmul.mubr.f32.gmra.mxu0 %v495
    %v707 = vpop.f32.mrf.mxu0
    %v708 = vadd.f32 %v445, %v707
    %v709 = vpop.f32.mrf.mxu0
    %v710 = vadd.f32 %v447, %v709
    %711 = vdwg.mxu0
    %vm712 = vcmask 1045504
    %v713 = vrot.slane %v46, 2
    %v714 = vrot.slane %v47, 2
    %v715 = vsel %vm712, %v713, %v714
    %v716 = vrot.slane %v48, 2
    %v717 = vsel %vm712, %v714, %v716
    %v718 = vrot.slane %v49, 2
    %v719 = vsel %vm712, %v716, %v718
    %v720 = vrot.slane %v50, 2
    %v721 = vrot.slane %v51, 2
    %v722 = vsel %vm712, %v720, %v721
    %v723 = vrot.slane %v52, 2
    %v724 = vsel %vm712, %v721, %v723
    %v725 = vrot.slane %v53, 2
    %v726 = vsel %vm712, %v723, %v725
    %v727 = vrot.slane %v54, 2
    %v728 = vrot.slane %v55, 2
    %v729 = vsel %vm712, %v727, %v728
    %v730 = vrot.slane %v56, 2
    %v731 = vsel %vm712, %v728, %v730
    %v732 = vrot.slane %v57, 2
    %v733 = vsel %vm712, %v730, %v732
    %v734 = vrot.slane %v58, 2
    %v735 = vrot.slane %v59, 2
    %v736 = vsel %vm712, %v734, %v735
    %v737 = vrot.slane %v60, 2
    %v738 = vsel %vm712, %v735, %v737
    %v739 = vrot.slane %v61, 2
    %v740 = vsel %vm712, %v737, %v739
    %v741 = vrot.slane %v62, 2
    %v742 = vrot.slane %v63, 2
    %v743 = vsel %vm712, %v741, %v742
    %v744 = vrot.slane %v64, 2
    %v745 = vsel %vm712, %v742, %v744
    %v746 = vrot.slane %v65, 2
    %v747 = vsel %vm712, %v744, %v746
    %v748 = vrot.slane %v66, 2
    %v749 = vrot.slane %v67, 2
    %v750 = vsel %vm712, %v748, %v749
    %v751 = vrot.slane %v68, 2
    %v752 = vsel %vm712, %v749, %v751
    %v753 = vrot.slane %v69, 2
    %v754 = vsel %vm712, %v751, %v753
    %v755 = vrot.slane %v70, 2
    %v756 = vrot.slane %v71, 2
    %v757 = vsel %vm712, %v755, %v756
    %v758 = vrot.slane %v72, 2
    %v759 = vsel %vm712, %v756, %v758
    %v760 = vrot.slane %v73, 2
    %v761 = vsel %vm712, %v758, %v760
    %v762 = vrot.slane %v74, 2
    %v763 = vrot.slane %v75, 2
    %v764 = vsel %vm712, %v762, %v763
    %v765 = vrot.slane %v76, 2
    %v766 = vsel %vm712, %v763, %v765
    %v767 = vrot.slane %v77, 2
    %v768 = vsel %vm712, %v765, %v767
    %s769 = scalar_lea.vmem [#allocation2], 128
    %v770 = vld [vmem:[%s769] sm:$0xff]
    %v771 = vld [vmem:[%s769 + $0x8] sm:$0xff]
    %v772 = vld [vmem:[%s769 + $0x10] sm:$0xff]
    %v773 = vld [vmem:[%s769 + $0x18] sm:$0xff]
    %v774 = vld [vmem:[%s769 + $0x20] sm:$0xff]
    %v775 = vld [vmem:[%s769 + $0x28] sm:$0xff]
    %v776 = vld [vmem:[%s769 + $0x30] sm:$0xf]
    %v777 = vld [vmem:[%s769 + $0x38] sm:$0xf]
    %v778 = vsel %vm184, %v715, 0
    %v780 = vsel %vm184, %v717, 0
    %v782 = vsel %vm184, %v719, 0
    %v784 = vsel %vm184, %v722, 0
    %v786 = vsel %vm184, %v724, 0
    %v788 = vsel %vm184, %v726, 0
    %v790 = vsel %vm184, %v729, 0
    %v792 = vsel %vm184, %v731, 0
    %v794 = vsel %vm184, %v733, 0
    %v796 = vsel %vm184, %v736, 0
    %v798 = vsel %vm184, %v738, 0
    %v800 = vsel %vm184, %v740, 0
    %v802 = vsel %vm184, %v743, 0
    %v804 = vsel %vm184, %v745, 0
    %v806 = vsel %vm184, %v747, 0
    %v808 = vsel %vm184, %v750, 0
    %v810 = vsel %vm184, %v752, 0
    %v812 = vsel %vm184, %v754, 0
    %v814 = vsel %vm184, %v757, 0
    %v816 = vsel %vm184, %v759, 0
    %v818 = vsel %vm184, %v761, 0
    %v820 = vsel %vm184, %v764, 0
    %v822 = vsel %vm184, %v766, 0
    %v824 = vsel %vm184, %v768, 0
    %v827 = vsel %vm233, %v776, 0
    %v830 = vsel %vm233, %v777, 0
    %832 = vmatprep.subr.mxu0 0.0
    %833 = vmatpush1.msra.mxu0 0.0
    %834 = vmatprep.subr.mxu0 0.0
    %835 = vmatpush1.msra.mxu0 0.0
    %836 = vmatprep.subr.mxu0 0.0
    %837 = vmatpush1.msra.mxu0 0.0
    %838 = vmatprep.subr.mxu0 0.0
    %839 = vmatpush1.msra.mxu0 0.0
    %840 = vmatprep.subr.mxu0 0.0
    %841 = vmatpush1.msra.mxu0 0.0
    %842 = vmatprep.subr.mxu0 0.0
    %843 = vmatpush1.msra.mxu0 0.0
    %844 = vmatprep.subr.mxu0 0.0
    %845 = vmatpush1.msra.mxu0 0.0
    %846 = vmatprep.subr.mxu0 0.0
    %847 = vmatpush1.msra.mxu0 0.0
    %848 = vmatprep.subr.mxu0 0.0
    %849 = vmatpush1.msra.mxu0 0.0
    %850 = vmatprep.subr.mxu0 0.0
    %851 = vmatpush1.msra.mxu0 0.0
    %852 = vmatprep.subr.mxu0 0.0
    %853 = vmatpush1.msra.mxu0 0.0
    %854 = vmatprep.subr.mxu0 0.0
    %855 = vmatpush1.msra.mxu0 0.0
    %856 = vmatprep.subr.mxu0 %v830
    %857 = vmatpush1.msra.mxu0 %v827
    %858 = vmatprep.subr.mxu0 %v775
    %859 = vmatpush1.msra.mxu0 %v774
    %860 = vmatprep.subr.mxu0 %v773
    %861 = vmatpush1.msra.mxu0 %v772
    %862 = vmatprep.subr.mxu0 %v771
    %863 = vmatpush1.msra.mxu0 %v770
    %864 = vmatprep.subr.mxu0 0.0
    %865 = vmatpush2.msra.mxu0 0.0
    %866 = vmatprep.subr.mxu0 0.0
    %867 = vmatpush2.msra.mxu0 0.0
    %868 = vmatprep.subr.mxu0 0.0
    %869 = vmatpush2.msra.mxu0 0.0
    %870 = vmatprep.subr.mxu0 0.0
    %871 = vmatpush2.msra.mxu0 0.0
    %872 = vmatprep.subr.mxu0 0.0
    %873 = vmatpush2.msra.mxu0 0.0
    %874 = vmatprep.subr.mxu0 0.0
    %875 = vmatpush2.msra.mxu0 0.0
    %876 = vmatprep.subr.mxu0 0.0
    %877 = vmatpush2.msra.mxu0 0.0
    %878 = vmatprep.subr.mxu0 0.0
    %879 = vmatpush2.msra.mxu0 0.0
    %880 = vmatprep.subr.mxu0 0.0
    %881 = vmatpush2.msra.mxu0 0.0
    %882 = vmatprep.subr.mxu0 0.0
    %883 = vmatpush2.msra.mxu0 0.0
    %884 = vmatprep.subr.mxu0 0.0
    %885 = vmatpush2.msra.mxu0 0.0
    %886 = vmatprep.subr.mxu0 0.0
    %887 = vmatpush2.msra.mxu0 0.0
    %888 = vmatprep.subr.mxu0 0.0
    %889 = vmatpush2.msra.mxu0 0.0
    %890 = vmatprep.subr.mxu0 0.0
    %891 = vmatpush2.msra.mxu0 0.0
    %892 = vmatprep.subr.mxu0 0.0
    %893 = vmatpush2.msra.mxu0 0.0
    %894 = vmatprep.subr.mxu0 0.0
    %895 = vmatpush2.msra.mxu0 0.0
    %896 = vmatprep.mubr.f32.mxu0 0.0
    %897 = vmatmul.mubr.f32.gmra.mxu0 %v778
    %v898 = vpop.f32.mrf.mxu0
    %v899 = vadd.f32 0.0, %v898
    %v900 = vpop.f32.mrf.mxu0
    %v901 = vadd.f32 0.0, %v900
    %902 = vmatprep.mubr.f32.mxu0 0.0
    %903 = vmatmul.mubr.f32.gmra.mxu0 %v780
    %v904 = vpop.f32.mrf.mxu0
    %v905 = vadd.f32 0.0, %v904
    %v906 = vpop.f32.mrf.mxu0
    %v907 = vadd.f32 0.0, %v906
    %908 = vmatprep.mubr.f32.mxu0 0.0
    %909 = vmatmul.mubr.f32.gmra.mxu0 %v782
    %v910 = vpop.f32.mrf.mxu0
    %v911 = vadd.f32 0.0, %v910
    %v912 = vpop.f32.mrf.mxu0
    %v913 = vadd.f32 0.0, %v912
    %914 = vmatprep.mubr.f32.mxu0 0.0
    %915 = vmatmul.mubr.f32.gmra.mxu0 %v784
    %v916 = vpop.f32.mrf.mxu0
    %v917 = vadd.f32 0.0, %v916
    %v918 = vpop.f32.mrf.mxu0
    %v919 = vadd.f32 0.0, %v918
    %920 = vmatprep.mubr.f32.mxu0 0.0
    %921 = vmatmul.mubr.f32.gmra.mxu0 %v786
    %v922 = vpop.f32.mrf.mxu0
    %v923 = vadd.f32 0.0, %v922
    %v924 = vpop.f32.mrf.mxu0
    %v925 = vadd.f32 0.0, %v924
    %926 = vmatprep.mubr.f32.mxu0 0.0
    %927 = vmatmul.mubr.f32.gmra.mxu0 %v788
    %v928 = vpop.f32.mrf.mxu0
    %v929 = vadd.f32 0.0, %v928
    %v930 = vpop.f32.mrf.mxu0
    %v931 = vadd.f32 0.0, %v930
    %932 = vmatprep.mubr.f32.mxu0 0.0
    %933 = vmatmul.mubr.f32.gmra.mxu0 %v790
    %v934 = vpop.f32.mrf.mxu0
    %v935 = vadd.f32 0.0, %v934
    %v936 = vpop.f32.mrf.mxu0
    %v937 = vadd.f32 0.0, %v936
    %938 = vmatprep.mubr.f32.mxu0 0.0
    %939 = vmatmul.mubr.f32.gmra.mxu0 %v792
    %v940 = vpop.f32.mrf.mxu0
    %v941 = vadd.f32 0.0, %v940
    %v942 = vpop.f32.mrf.mxu0
    %v943 = vadd.f32 0.0, %v942
    %944 = vmatprep.mubr.f32.mxu0 0.0
    %945 = vmatmul.mubr.f32.gmra.mxu0 %v794
    %v946 = vpop.f32.mrf.mxu0
    %v947 = vadd.f32 0.0, %v946
    %v948 = vpop.f32.mrf.mxu0
    %v949 = vadd.f32 0.0, %v948
    %950 = vmatprep.mubr.f32.mxu0 0.0
    %951 = vmatmul.mubr.f32.gmra.mxu0 %v796
    %v952 = vpop.f32.mrf.mxu0
    %v953 = vadd.f32 0.0, %v952
    %v954 = vpop.f32.mrf.mxu0
    %v955 = vadd.f32 0.0, %v954
    %956 = vmatprep.mubr.f32.mxu0 0.0
    %957 = vmatmul.mubr.f32.gmra.mxu0 %v798
    %v958 = vpop.f32.mrf.mxu0
    %v959 = vadd.f32 0.0, %v958
    %v960 = vpop.f32.mrf.mxu0
    %v961 = vadd.f32 0.0, %v960
    %962 = vmatprep.mubr.f32.mxu0 0.0
    %963 = vmatmul.mubr.f32.gmra.mxu0 %v800
    %v964 = vpop.f32.mrf.mxu0
    %v965 = vadd.f32 0.0, %v964
    %v966 = vpop.f32.mrf.mxu0
    %v967 = vadd.f32 0.0, %v966
    %968 = vmatprep.mubr.f32.mxu0 0.0
    %969 = vmatmul.mubr.f32.gmra.mxu0 %v802
    %v970 = vpop.f32.mrf.mxu0
    %v971 = vadd.f32 0.0, %v970
    %v972 = vpop.f32.mrf.mxu0
    %v973 = vadd.f32 0.0, %v972
    %974 = vmatprep.mubr.f32.mxu0 0.0
    %975 = vmatmul.mubr.f32.gmra.mxu0 %v804
    %v976 = vpop.f32.mrf.mxu0
    %v977 = vadd.f32 0.0, %v976
    %v978 = vpop.f32.mrf.mxu0
    %v979 = vadd.f32 0.0, %v978
    %980 = vmatprep.mubr.f32.mxu0 0.0
    %981 = vmatmul.mubr.f32.gmra.mxu0 %v806
    %v982 = vpop.f32.mrf.mxu0
    %v983 = vadd.f32 0.0, %v982
    %v984 = vpop.f32.mrf.mxu0
    %v985 = vadd.f32 0.0, %v984
    %986 = vmatprep.mubr.f32.mxu0 0.0
    %987 = vmatmul.mubr.f32.gmra.mxu0 %v808
    %v988 = vpop.f32.mrf.mxu0
    %v989 = vadd.f32 0.0, %v988
    %v990 = vpop.f32.mrf.mxu0
    %v991 = vadd.f32 0.0, %v990
    %992 = vmatprep.mubr.f32.mxu0 0.0
    %993 = vmatmul.mubr.f32.gmra.mxu0 %v810
    %v994 = vpop.f32.mrf.mxu0
    %v995 = vadd.f32 0.0, %v994
    %v996 = vpop.f32.mrf.mxu0
    %v997 = vadd.f32 0.0, %v996
    %998 = vmatprep.mubr.f32.mxu0 0.0
    %999 = vmatmul.mubr.f32.gmra.mxu0 %v812
    %v1000 = vpop.f32.mrf.mxu0
    %v1001 = vadd.f32 0.0, %v1000
    %v1002 = vpop.f32.mrf.mxu0
    %v1003 = vadd.f32 0.0, %v1002
    %1004 = vmatprep.mubr.f32.mxu0 0.0
    %1005 = vmatmul.mubr.f32.gmra.mxu0 %v814
    %v1006 = vpop.f32.mrf.mxu0
    %v1007 = vadd.f32 0.0, %v1006
    %v1008 = vpop.f32.mrf.mxu0
    %v1009 = vadd.f32 0.0, %v1008
    %1010 = vmatprep.mubr.f32.mxu0 0.0
    %1011 = vmatmul.mubr.f32.gmra.mxu0 %v816
    %v1012 = vpop.f32.mrf.mxu0
    %v1013 = vadd.f32 0.0, %v1012
    %v1014 = vpop.f32.mrf.mxu0
    %v1015 = vadd.f32 0.0, %v1014
    %1016 = vmatprep.mubr.f32.mxu0 0.0
    %1017 = vmatmul.mubr.f32.gmra.mxu0 %v818
    %v1018 = vpop.f32.mrf.mxu0
    %v1019 = vadd.f32 0.0, %v1018
    %v1020 = vpop.f32.mrf.mxu0
    %v1021 = vadd.f32 0.0, %v1020
    %1022 = vmatprep.mubr.f32.mxu0 0.0
    %1023 = vmatmul.mubr.f32.gmra.mxu0 %v820
    %v1024 = vpop.f32.mrf.mxu0
    %v1025 = vadd.f32 0.0, %v1024
    %v1026 = vpop.f32.mrf.mxu0
    %v1027 = vadd.f32 0.0, %v1026
    %1028 = vmatprep.mubr.f32.mxu0 0.0
    %1029 = vmatmul.mubr.f32.gmra.mxu0 %v822
    %v1030 = vpop.f32.mrf.mxu0
    %v1031 = vadd.f32 0.0, %v1030
    %v1032 = vpop.f32.mrf.mxu0
    %v1033 = vadd.f32 0.0, %v1032
    %1034 = vmatprep.mubr.f32.mxu0 0.0
    %1035 = vmatmul.mubr.f32.gmra.mxu0 %v824
    %v1036 = vpop.f32.mrf.mxu0
    %v1037 = vadd.f32 0.0, %v1036
    %v1038 = vpop.f32.mrf.mxu0
    %v1039 = vadd.f32 0.0, %v1038
    %1040 = vdwg.mxu0
    %v1041 = vadd.f32 %v570, %v899
    %v1042 = vadd.f32 %v572, %v901
    %v1043 = vadd.f32 %v576, %v905
    %v1044 = vadd.f32 %v578, %v907
    %v1045 = vadd.f32 %v582, %v911
    %v1046 = vadd.f32 %v584, %v913
    %v1047 = vadd.f32 %v588, %v917
    %v1048 = vadd.f32 %v590, %v919
    %v1049 = vadd.f32 %v594, %v923
    %v1050 = vadd.f32 %v596, %v925
    %v1051 = vadd.f32 %v600, %v929
    %v1052 = vadd.f32 %v602, %v931
    %v1053 = vadd.f32 %v606, %v935
    %v1054 = vadd.f32 %v608, %v937
    %v1055 = vadd.f32 %v612, %v941
    %v1056 = vadd.f32 %v614, %v943
    %v1057 = vadd.f32 %v618, %v947
    %v1058 = vadd.f32 %v620, %v949
    %v1059 = vadd.f32 %v624, %v953
    %v1060 = vadd.f32 %v626, %v955
    %v1061 = vadd.f32 %v630, %v959
    %v1062 = vadd.f32 %v632, %v961
    %v1063 = vadd.f32 %v636, %v965
    %v1064 = vadd.f32 %v638, %v967
    %v1065 = vadd.f32 %v642, %v971
    %v1066 = vadd.f32 %v644, %v973
    %v1067 = vadd.f32 %v648, %v977
    %v1068 = vadd.f32 %v650, %v979
    %v1069 = vadd.f32 %v654, %v983
    %v1070 = vadd.f32 %v656, %v985
    %v1071 = vadd.f32 %v660, %v989
    %v1072 = vadd.f32 %v662, %v991
    %v1073 = vadd.f32 %v666, %v995
    %v1074 = vadd.f32 %v668, %v997
    %v1075 = vadd.f32 %v672, %v1001
    %v1076 = vadd.f32 %v674, %v1003
    %v1077 = vadd.f32 %v678, %v1007
    %v1078 = vadd.f32 %v680, %v1009
    %v1079 = vadd.f32 %v684, %v1013
    %v1080 = vadd.f32 %v686, %v1015
    %v1081 = vadd.f32 %v690, %v1019
    %v1082 = vadd.f32 %v692, %v1021
    %v1083 = vadd.f32 %v696, %v1025
    %v1084 = vadd.f32 %v698, %v1027
    %v1085 = vadd.f32 %v702, %v1031
    %v1086 = vadd.f32 %v704, %v1033
    %v1087 = vadd.f32 %v708, %v1037
    %v1088 = vadd.f32 %v710, %v1039
    %vm1089 = vcmask 1044480
    %v1090 = vrot.slane %v46, 3
    %v1091 = vrot.slane %v47, 3
    %v1092 = vsel %vm1089, %v1090, %v1091
    %v1093 = vrot.slane %v48, 3
    %v1094 = vsel %vm1089, %v1091, %v1093
    %v1095 = vrot.slane %v49, 3
    %v1096 = vsel %vm1089, %v1093, %v1095
    %v1097 = vrot.slane %v50, 3
    %v1098 = vrot.slane %v51, 3
    %v1099 = vsel %vm1089, %v1097, %v1098
    %v1100 = vrot.slane %v52, 3
    %v1101 = vsel %vm1089, %v1098, %v1100
    %v1102 = vrot.slane %v53, 3
    %v1103 = vsel %vm1089, %v1100, %v1102
    %v1104 = vrot.slane %v54, 3
    %v1105 = vrot.slane %v55, 3
    %v1106 = vsel %vm1089, %v1104, %v1105
    %v1107 = vrot.slane %v56, 3
    %v1108 = vsel %vm1089, %v1105, %v1107
    %v1109 = vrot.slane %v57, 3
    %v1110 = vsel %vm1089, %v1107, %v1109
    %v1111 = vrot.slane %v58, 3
    %v1112 = vrot.slane %v59, 3
    %v1113 = vsel %vm1089, %v1111, %v1112
    %v1114 = vrot.slane %v60, 3
    %v1115 = vsel %vm1089, %v1112, %v1114
    %v1116 = vrot.slane %v61, 3
    %v1117 = vsel %vm1089, %v1114, %v1116
    %v1118 = vrot.slane %v62, 3
    %v1119 = vrot.slane %v63, 3
    %v1120 = vsel %vm1089, %v1118, %v1119
    %v1121 = vrot.slane %v64, 3
    %v1122 = vsel %vm1089, %v1119, %v1121
    %v1123 = vrot.slane %v65, 3
    %v1124 = vsel %vm1089, %v1121, %v1123
    %v1125 = vrot.slane %v66, 3
    %v1126 = vrot.slane %v67, 3
    %v1127 = vsel %vm1089, %v1125, %v1126
    %v1128 = vrot.slane %v68, 3
    %v1129 = vsel %vm1089, %v1126, %v1128
    %v1130 = vrot.slane %v69, 3
    %v1131 = vsel %vm1089, %v1128, %v1130
    %v1132 = vrot.slane %v70, 3
    %v1133 = vrot.slane %v71, 3
    %v1134 = vsel %vm1089, %v1132, %v1133
    %v1135 = vrot.slane %v72, 3
    %v1136 = vsel %vm1089, %v1133, %v1135
    %v1137 = vrot.slane %v73, 3
    %v1138 = vsel %vm1089, %v1135, %v1137
    %v1139 = vrot.slane %v74, 3
    %v1140 = vrot.slane %v75, 3
    %v1141 = vsel %vm1089, %v1139, %v1140
    %v1142 = vrot.slane %v76, 3
    %v1143 = vsel %vm1089, %v1140, %v1142
    %v1144 = vrot.slane %v77, 3
    %v1145 = vsel %vm1089, %v1142, %v1144
    %s1146 = scalar_lea.vmem [#allocation2], 192
    %v1147 = vld [vmem:[%s1146] sm:$0xff]
    %v1148 = vld [vmem:[%s1146 + $0x8] sm:$0xff]
    %v1149 = vld [vmem:[%s1146 + $0x10] sm:$0xff]
    %v1150 = vld [vmem:[%s1146 + $0x18] sm:$0xff]
    %v1151 = vld [vmem:[%s1146 + $0x20] sm:$0xff]
    %v1152 = vld [vmem:[%s1146 + $0x28] sm:$0xff]
    %v1153 = vld [vmem:[%s1146 + $0x30] sm:$0xf]
    %v1154 = vld [vmem:[%s1146 + $0x38] sm:$0xf]
    %v1155 = vsel %vm184, %v1092, 0
    %v1157 = vsel %vm184, %v1094, 0
    %v1159 = vsel %vm184, %v1096, 0
    %v1161 = vsel %vm184, %v1099, 0
    %v1163 = vsel %vm184, %v1101, 0
    %v1165 = vsel %vm184, %v1103, 0
    %v1167 = vsel %vm184, %v1106, 0
    %v1169 = vsel %vm184, %v1108, 0
    %v1171 = vsel %vm184, %v1110, 0
    %v1173 = vsel %vm184, %v1113, 0
    %v1175 = vsel %vm184, %v1115, 0
    %v1177 = vsel %vm184, %v1117, 0
    %v1179 = vsel %vm184, %v1120, 0
    %v1181 = vsel %vm184, %v1122, 0
    %v1183 = vsel %vm184, %v1124, 0
    %v1185 = vsel %vm184, %v1127, 0
    %v1187 = vsel %vm184, %v1129, 0
    %v1189 = vsel %vm184, %v1131, 0
    %v1191 = vsel %vm184, %v1134, 0
    %v1193 = vsel %vm184, %v1136, 0
    %v1195 = vsel %vm184, %v1138, 0
    %v1197 = vsel %vm184, %v1141, 0
    %v1199 = vsel %vm184, %v1143, 0
    %v1201 = vsel %vm184, %v1145, 0
    %v1204 = vsel %vm233, %v1153, 0
    %v1207 = vsel %vm233, %v1154, 0
    %1209 = vmatprep.subr.mxu0 0.0
    %1210 = vmatpush1.msra.mxu0 0.0
    %1211 = vmatprep.subr.mxu0 0.0
    %1212 = vmatpush1.msra.mxu0 0.0
    %1213 = vmatprep.subr.mxu0 0.0
    %1214 = vmatpush1.msra.mxu0 0.0
    %1215 = vmatprep.subr.mxu0 0.0
    %1216 = vmatpush1.msra.mxu0 0.0
    %1217 = vmatprep.subr.mxu0 0.0
    %1218 = vmatpush1.msra.mxu0 0.0
    %1219 = vmatprep.subr.mxu0 0.0
    %1220 = vmatpush1.msra.mxu0 0.0
    %1221 = vmatprep.subr.mxu0 0.0
    %1222 = vmatpush1.msra.mxu0 0.0
    %1223 = vmatprep.subr.mxu0 0.0
    %1224 = vmatpush1.msra.mxu0 0.0
    %1225 = vmatprep.subr.mxu0 0.0
    %1226 = vmatpush1.msra.mxu0 0.0
    %1227 = vmatprep.subr.mxu0 0.0
    %1228 = vmatpush1.msra.mxu0 0.0
    %1229 = vmatprep.subr.mxu0 0.0
    %1230 = vmatpush1.msra.mxu0 0.0
    %1231 = vmatprep.subr.mxu0 0.0
    %1232 = vmatpush1.msra.mxu0 0.0
    %1233 = vmatprep.subr.mxu0 %v1207
    %1234 = vmatpush1.msra.mxu0 %v1204
    %1235 = vmatprep.subr.mxu0 %v1152
    %1236 = vmatpush1.msra.mxu0 %v1151
    %1237 = vmatprep.subr.mxu0 %v1150
    %1238 = vmatpush1.msra.mxu0 %v1149
    %1239 = vmatprep.subr.mxu0 %v1148
    %1240 = vmatpush1.msra.mxu0 %v1147
    %1241 = vmatprep.subr.mxu0 0.0
    %1242 = vmatpush2.msra.mxu0 0.0
    %1243 = vmatprep.subr.mxu0 0.0
    %1244 = vmatpush2.msra.mxu0 0.0
    %1245 = vmatprep.subr.mxu0 0.0
    %1246 = vmatpush2.msra.mxu0 0.0
    %1247 = vmatprep.subr.mxu0 0.0
    %1248 = vmatpush2.msra.mxu0 0.0
    %1249 = vmatprep.subr.mxu0 0.0
    %1250 = vmatpush2.msra.mxu0 0.0
    %1251 = vmatprep.subr.mxu0 0.0
    %1252 = vmatpush2.msra.mxu0 0.0
    %1253 = vmatprep.subr.mxu0 0.0
    %1254 = vmatpush2.msra.mxu0 0.0
    %1255 = vmatprep.subr.mxu0 0.0
    %1256 = vmatpush2.msra.mxu0 0.0
    %1257 = vmatprep.subr.mxu0 0.0
    %1258 = vmatpush2.msra.mxu0 0.0
    %1259 = vmatprep.subr.mxu0 0.0
    %1260 = vmatpush2.msra.mxu0 0.0
    %1261 = vmatprep.subr.mxu0 0.0
    %1262 = vmatpush2.msra.mxu0 0.0
    %1263 = vmatprep.subr.mxu0 0.0
    %1264 = vmatpush2.msra.mxu0 0.0
    %1265 = vmatprep.subr.mxu0 0.0
    %1266 = vmatpush2.msra.mxu0 0.0
    %1267 = vmatprep.subr.mxu0 0.0
    %1268 = vmatpush2.msra.mxu0 0.0
    %1269 = vmatprep.subr.mxu0 0.0
    %1270 = vmatpush2.msra.mxu0 0.0
    %1271 = vmatprep.subr.mxu0 0.0
    %1272 = vmatpush2.msra.mxu0 0.0
    %1273 = vmatprep.mubr.f32.mxu0 0.0
    %1274 = vmatmul.mubr.f32.gmra.mxu0 %v1155
    %v1275 = vpop.f32.mrf.mxu0
    %v1276 = vadd.f32 0.0, %v1275
    %v1277 = vpop.f32.mrf.mxu0
    %v1278 = vadd.f32 0.0, %v1277
    %1279 = vmatprep.mubr.f32.mxu0 0.0
    %1280 = vmatmul.mubr.f32.gmra.mxu0 %v1157
    %v1281 = vpop.f32.mrf.mxu0
    %v1282 = vadd.f32 0.0, %v1281
    %v1283 = vpop.f32.mrf.mxu0
    %v1284 = vadd.f32 0.0, %v1283
    %1285 = vmatprep.mubr.f32.mxu0 0.0
    %1286 = vmatmul.mubr.f32.gmra.mxu0 %v1159
    %v1287 = vpop.f32.mrf.mxu0
    %v1288 = vadd.f32 0.0, %v1287
    %v1289 = vpop.f32.mrf.mxu0
    %v1290 = vadd.f32 0.0, %v1289
    %1291 = vmatprep.mubr.f32.mxu0 0.0
    %1292 = vmatmul.mubr.f32.gmra.mxu0 %v1161
    %v1293 = vpop.f32.mrf.mxu0
    %v1294 = vadd.f32 0.0, %v1293
    %v1295 = vpop.f32.mrf.mxu0
    %v1296 = vadd.f32 0.0, %v1295
    %1297 = vmatprep.mubr.f32.mxu0 0.0
    %1298 = vmatmul.mubr.f32.gmra.mxu0 %v1163
    %v1299 = vpop.f32.mrf.mxu0
    %v1300 = vadd.f32 0.0, %v1299
    %v1301 = vpop.f32.mrf.mxu0
    %v1302 = vadd.f32 0.0, %v1301
    %1303 = vmatprep.mubr.f32.mxu0 0.0
    %1304 = vmatmul.mubr.f32.gmra.mxu0 %v1165
    %v1305 = vpop.f32.mrf.mxu0
    %v1306 = vadd.f32 0.0, %v1305
    %v1307 = vpop.f32.mrf.mxu0
    %v1308 = vadd.f32 0.0, %v1307
    %1309 = vmatprep.mubr.f32.mxu0 0.0
    %1310 = vmatmul.mubr.f32.gmra.mxu0 %v1167
    %v1311 = vpop.f32.mrf.mxu0
    %v1312 = vadd.f32 0.0, %v1311
    %v1313 = vpop.f32.mrf.mxu0
    %v1314 = vadd.f32 0.0, %v1313
    %1315 = vmatprep.mubr.f32.mxu0 0.0
    %1316 = vmatmul.mubr.f32.gmra.mxu0 %v1169
    %v1317 = vpop.f32.mrf.mxu0
    %v1318 = vadd.f32 0.0, %v1317
    %v1319 = vpop.f32.mrf.mxu0
    %v1320 = vadd.f32 0.0, %v1319
    %1321 = vmatprep.mubr.f32.mxu0 0.0
    %1322 = vmatmul.mubr.f32.gmra.mxu0 %v1171
    %v1323 = vpop.f32.mrf.mxu0
    %v1324 = vadd.f32 0.0, %v1323
    %v1325 = vpop.f32.mrf.mxu0
    %v1326 = vadd.f32 0.0, %v1325
    %1327 = vmatprep.mubr.f32.mxu0 0.0
    %1328 = vmatmul.mubr.f32.gmra.mxu0 %v1173
    %v1329 = vpop.f32.mrf.mxu0
    %v1330 = vadd.f32 0.0, %v1329
    %v1331 = vpop.f32.mrf.mxu0
    %v1332 = vadd.f32 0.0, %v1331
    %1333 = vmatprep.mubr.f32.mxu0 0.0
    %1334 = vmatmul.mubr.f32.gmra.mxu0 %v1175
    %v1335 = vpop.f32.mrf.mxu0
    %v1336 = vadd.f32 0.0, %v1335
    %v1337 = vpop.f32.mrf.mxu0
    %v1338 = vadd.f32 0.0, %v1337
    %1339 = vmatprep.mubr.f32.mxu0 0.0
    %1340 = vmatmul.mubr.f32.gmra.mxu0 %v1177
    %v1341 = vpop.f32.mrf.mxu0
    %v1342 = vadd.f32 0.0, %v1341
    %v1343 = vpop.f32.mrf.mxu0
    %v1344 = vadd.f32 0.0, %v1343
    %1345 = vmatprep.mubr.f32.mxu0 0.0
    %1346 = vmatmul.mubr.f32.gmra.mxu0 %v1179
    %v1347 = vpop.f32.mrf.mxu0
    %v1348 = vadd.f32 0.0, %v1347
    %v1349 = vpop.f32.mrf.mxu0
    %v1350 = vadd.f32 0.0, %v1349
    %1351 = vmatprep.mubr.f32.mxu0 0.0
    %1352 = vmatmul.mubr.f32.gmra.mxu0 %v1181
    %v1353 = vpop.f32.mrf.mxu0
    %v1354 = vadd.f32 0.0, %v1353
    %v1355 = vpop.f32.mrf.mxu0
    %v1356 = vadd.f32 0.0, %v1355
    %1357 = vmatprep.mubr.f32.mxu0 0.0
    %1358 = vmatmul.mubr.f32.gmra.mxu0 %v1183
    %v1359 = vpop.f32.mrf.mxu0
    %v1360 = vadd.f32 0.0, %v1359
    %v1361 = vpop.f32.mrf.mxu0
    %v1362 = vadd.f32 0.0, %v1361
    %1363 = vmatprep.mubr.f32.mxu0 0.0
    %1364 = vmatmul.mubr.f32.gmra.mxu0 %v1185
    %v1365 = vpop.f32.mrf.mxu0
    %v1366 = vadd.f32 0.0, %v1365
    %v1367 = vpop.f32.mrf.mxu0
    %v1368 = vadd.f32 0.0, %v1367
    %1369 = vmatprep.mubr.f32.mxu0 0.0
    %1370 = vmatmul.mubr.f32.gmra.mxu0 %v1187
    %v1371 = vpop.f32.mrf.mxu0
    %v1372 = vadd.f32 0.0, %v1371
    %v1373 = vpop.f32.mrf.mxu0
    %v1374 = vadd.f32 0.0, %v1373
    %1375 = vmatprep.mubr.f32.mxu0 0.0
    %1376 = vmatmul.mubr.f32.gmra.mxu0 %v1189
    %v1377 = vpop.f32.mrf.mxu0
    %v1378 = vadd.f32 0.0, %v1377
    %v1379 = vpop.f32.mrf.mxu0
    %v1380 = vadd.f32 0.0, %v1379
    %1381 = vmatprep.mubr.f32.mxu0 0.0
    %1382 = vmatmul.mubr.f32.gmra.mxu0 %v1191
    %v1383 = vpop.f32.mrf.mxu0
    %v1384 = vadd.f32 0.0, %v1383
    %v1385 = vpop.f32.mrf.mxu0
    %v1386 = vadd.f32 0.0, %v1385
    %1387 = vmatprep.mubr.f32.mxu0 0.0
    %1388 = vmatmul.mubr.f32.gmra.mxu0 %v1193
    %v1389 = vpop.f32.mrf.mxu0
    %v1390 = vadd.f32 0.0, %v1389
    %v1391 = vpop.f32.mrf.mxu0
    %v1392 = vadd.f32 0.0, %v1391
    %1393 = vmatprep.mubr.f32.mxu0 0.0
    %1394 = vmatmul.mubr.f32.gmra.mxu0 %v1195
    %v1395 = vpop.f32.mrf.mxu0
    %v1396 = vadd.f32 0.0, %v1395
    %v1397 = vpop.f32.mrf.mxu0
    %v1398 = vadd.f32 0.0, %v1397
    %1399 = vmatprep.mubr.f32.mxu0 0.0
    %1400 = vmatmul.mubr.f32.gmra.mxu0 %v1197
    %v1401 = vpop.f32.mrf.mxu0
    %v1402 = vadd.f32 0.0, %v1401
    %v1403 = vpop.f32.mrf.mxu0
    %v1404 = vadd.f32 0.0, %v1403
    %1405 = vmatprep.mubr.f32.mxu0 0.0
    %1406 = vmatmul.mubr.f32.gmra.mxu0 %v1199
    %v1407 = vpop.f32.mrf.mxu0
    %v1408 = vadd.f32 0.0, %v1407
    %v1409 = vpop.f32.mrf.mxu0
    %v1410 = vadd.f32 0.0, %v1409
    %1411 = vmatprep.mubr.f32.mxu0 0.0
    %1412 = vmatmul.mubr.f32.gmra.mxu0 %v1201
    %v1413 = vpop.f32.mrf.mxu0
    %v1414 = vadd.f32 0.0, %v1413
    %v1415 = vpop.f32.mrf.mxu0
    %v1416 = vadd.f32 0.0, %v1415
    %1417 = vdwg.mxu0
    %v1418 = vadd.f32 %v1041, %v1276
    %v1419 = vadd.f32 %v1042, %v1278
    %v1420 = vadd.f32 %v1043, %v1282
    %v1421 = vadd.f32 %v1044, %v1284
    %v1422 = vadd.f32 %v1045, %v1288
    %v1423 = vadd.f32 %v1046, %v1290
    %v1424 = vadd.f32 %v1047, %v1294
    %v1425 = vadd.f32 %v1048, %v1296
    %v1426 = vadd.f32 %v1049, %v1300
    %v1427 = vadd.f32 %v1050, %v1302
    %v1428 = vadd.f32 %v1051, %v1306
    %v1429 = vadd.f32 %v1052, %v1308
    %v1430 = vadd.f32 %v1053, %v1312
    %v1431 = vadd.f32 %v1054, %v1314
    %v1432 = vadd.f32 %v1055, %v1318
    %v1433 = vadd.f32 %v1056, %v1320
    %v1434 = vadd.f32 %v1057, %v1324
    %v1435 = vadd.f32 %v1058, %v1326
    %v1436 = vadd.f32 %v1059, %v1330
    %v1437 = vadd.f32 %v1060, %v1332
    %v1438 = vadd.f32 %v1061, %v1336
    %v1439 = vadd.f32 %v1062, %v1338
    %v1440 = vadd.f32 %v1063, %v1342
    %v1441 = vadd.f32 %v1064, %v1344
    %v1442 = vadd.f32 %v1065, %v1348
    %v1443 = vadd.f32 %v1066, %v1350
    %v1444 = vadd.f32 %v1067, %v1354
    %v1445 = vadd.f32 %v1068, %v1356
    %v1446 = vadd.f32 %v1069, %v1360
    %v1447 = vadd.f32 %v1070, %v1362
    %v1448 = vadd.f32 %v1071, %v1366
    %v1449 = vadd.f32 %v1072, %v1368
    %v1450 = vadd.f32 %v1073, %v1372
    %v1451 = vadd.f32 %v1074, %v1374
    %v1452 = vadd.f32 %v1075, %v1378
    %v1453 = vadd.f32 %v1076, %v1380
    %v1454 = vadd.f32 %v1077, %v1384
    %v1455 = vadd.f32 %v1078, %v1386
    %v1456 = vadd.f32 %v1079, %v1390
    %v1457 = vadd.f32 %v1080, %v1392
    %v1458 = vadd.f32 %v1081, %v1396
    %v1459 = vadd.f32 %v1082, %v1398
    %v1460 = vadd.f32 %v1083, %v1402
    %v1461 = vadd.f32 %v1084, %v1404
    %v1462 = vadd.f32 %v1085, %v1408
    %v1463 = vadd.f32 %v1086, %v1410
    %v1464 = vadd.f32 %v1087, %v1414
    %v1465 = vadd.f32 %v1088, %v1416
    %v1466 = vrot.slane %v46, 4
    %v1467 = vrot.slane %v47, 4
    %v1468 = vsel %vm233, %v1466, %v1467
    %v1469 = vrot.slane %v48, 4
    %v1470 = vsel %vm233, %v1467, %v1469
    %v1471 = vrot.slane %v49, 4
    %v1472 = vsel %vm233, %v1469, %v1471
    %v1473 = vrot.slane %v50, 4
    %v1474 = vrot.slane %v51, 4
    %v1475 = vsel %vm233, %v1473, %v1474
    %v1476 = vrot.slane %v52, 4
    %v1477 = vsel %vm233, %v1474, %v1476
    %v1478 = vrot.slane %v53, 4
    %v1479 = vsel %vm233, %v1476, %v1478
    %v1480 = vrot.slane %v54, 4
    %v1481 = vrot.slane %v55, 4
    %v1482 = vsel %vm233, %v1480, %v1481
    %v1483 = vrot.slane %v56, 4
    %v1484 = vsel %vm233, %v1481, %v1483
    %v1485 = vrot.slane %v57, 4
    %v1486 = vsel %vm233, %v1483, %v1485
    %v1487 = vrot.slane %v58, 4
    %v1488 = vrot.slane %v59, 4
    %v1489 = vsel %vm233, %v1487, %v1488
    %v1490 = vrot.slane %v60, 4
    %v1491 = vsel %vm233, %v1488, %v1490
    %v1492 = vrot.slane %v61, 4
    %v1493 = vsel %vm233, %v1490, %v1492
    %v1494 = vrot.slane %v62, 4
    %v1495 = vrot.slane %v63, 4
    %v1496 = vsel %vm233, %v1494, %v1495
    %v1497 = vrot.slane %v64, 4
    %v1498 = vsel %vm233, %v1495, %v1497
    %v1499 = vrot.slane %v65, 4
    %v1500 = vsel %vm233, %v1497, %v1499
    %v1501 = vrot.slane %v66, 4
    %v1502 = vrot.slane %v67, 4
    %v1503 = vsel %vm233, %v1501, %v1502
    %v1504 = vrot.slane %v68, 4
    %v1505 = vsel %vm233, %v1502, %v1504
    %v1506 = vrot.slane %v69, 4
    %v1507 = vsel %vm233, %v1504, %v1506
    %v1508 = vrot.slane %v70, 4
    %v1509 = vrot.slane %v71, 4
    %v1510 = vsel %vm233, %v1508, %v1509
    %v1511 = vrot.slane %v72, 4
    %v1512 = vsel %vm233, %v1509, %v1511
    %v1513 = vrot.slane %v73, 4
    %v1514 = vsel %vm233, %v1511, %v1513
    %v1515 = vrot.slane %v74, 4
    %v1516 = vrot.slane %v75, 4
    %v1517 = vsel %vm233, %v1515, %v1516
    %v1518 = vrot.slane %v76, 4
    %v1519 = vsel %vm233, %v1516, %v1518
    %v1520 = vrot.slane %v77, 4
    %v1521 = vsel %vm233, %v1518, %v1520
    %s1522 = scalar_lea.vmem [#allocation2], 256
    %v1523 = vld [vmem:[%s1522] sm:$0xff]
    %v1524 = vld [vmem:[%s1522 + $0x8] sm:$0xff]
    %v1525 = vld [vmem:[%s1522 + $0x10] sm:$0xff]
    %v1526 = vld [vmem:[%s1522 + $0x18] sm:$0xff]
    %v1527 = vld [vmem:[%s1522 + $0x20] sm:$0xff]
    %v1528 = vld [vmem:[%s1522 + $0x28] sm:$0xff]
    %v1529 = vld [vmem:[%s1522 + $0x30] sm:$0xf]
    %v1530 = vld [vmem:[%s1522 + $0x38] sm:$0xf]
    %v1531 = vsel %vm184, %v1468, 0
    %v1533 = vsel %vm184, %v1470, 0
    %v1535 = vsel %vm184, %v1472, 0
    %v1537 = vsel %vm184, %v1475, 0
    %v1539 = vsel %vm184, %v1477, 0
    %v1541 = vsel %vm184, %v1479, 0
    %v1543 = vsel %vm184, %v1482, 0
    %v1545 = vsel %vm184, %v1484, 0
    %v1547 = vsel %vm184, %v1486, 0
    %v1549 = vsel %vm184, %v1489, 0
    %v1551 = vsel %vm184, %v1491, 0
    %v1553 = vsel %vm184, %v1493, 0
    %v1555 = vsel %vm184, %v1496, 0
    %v1557 = vsel %vm184, %v1498, 0
    %v1559 = vsel %vm184, %v1500, 0
    %v1561 = vsel %vm184, %v1503, 0
    %v1563 = vsel %vm184, %v1505, 0
    %v1565 = vsel %vm184, %v1507, 0
    %v1567 = vsel %vm184, %v1510, 0
    %v1569 = vsel %vm184, %v1512, 0
    %v1571 = vsel %vm184, %v1514, 0
    %v1573 = vsel %vm184, %v1517, 0
    %v1575 = vsel %vm184, %v1519, 0
    %v1577 = vsel %vm184, %v1521, 0
    %v1580 = vsel %vm233, %v1529, 0
    %v1583 = vsel %vm233, %v1530, 0
    %1585 = vmatprep.subr.mxu0 0.0
    %1586 = vmatpush1.msra.mxu0 0.0
    %1587 = vmatprep.subr.mxu0 0.0
    %1588 = vmatpush1.msra.mxu0 0.0
    %1589 = vmatprep.subr.mxu0 0.0
    %1590 = vmatpush1.msra.mxu0 0.0
    %1591 = vmatprep.subr.mxu0 0.0
    %1592 = vmatpush1.msra.mxu0 0.0
    %1593 = vmatprep.subr.mxu0 0.0
    %1594 = vmatpush1.msra.mxu0 0.0
    %1595 = vmatprep.subr.mxu0 0.0
    %1596 = vmatpush1.msra.mxu0 0.0
    %1597 = vmatprep.subr.mxu0 0.0
    %1598 = vmatpush1.msra.mxu0 0.0
    %1599 = vmatprep.subr.mxu0 0.0
    %1600 = vmatpush1.msra.mxu0 0.0
    %1601 = vmatprep.subr.mxu0 0.0
    %1602 = vmatpush1.msra.mxu0 0.0
    %1603 = vmatprep.subr.mxu0 0.0
    %1604 = vmatpush1.msra.mxu0 0.0
    %1605 = vmatprep.subr.mxu0 0.0
    %1606 = vmatpush1.msra.mxu0 0.0
    %1607 = vmatprep.subr.mxu0 0.0
    %1608 = vmatpush1.msra.mxu0 0.0
    %1609 = vmatprep.subr.mxu0 %v1583
    %1610 = vmatpush1.msra.mxu0 %v1580
    %1611 = vmatprep.subr.mxu0 %v1528
    %1612 = vmatpush1.msra.mxu0 %v1527
    %1613 = vmatprep.subr.mxu0 %v1526
    %1614 = vmatpush1.msra.mxu0 %v1525
    %1615 = vmatprep.subr.mxu0 %v1524
    %1616 = vmatpush1.msra.mxu0 %v1523
    %1617 = vmatprep.subr.mxu0 0.0
    %1618 = vmatpush2.msra.mxu0 0.0
    %1619 = vmatprep.subr.mxu0 0.0
    %1620 = vmatpush2.msra.mxu0 0.0
    %1621 = vmatprep.subr.mxu0 0.0
    %1622 = vmatpush2.msra.mxu0 0.0
    %1623 = vmatprep.subr.mxu0 0.0
    %1624 = vmatpush2.msra.mxu0 0.0
    %1625 = vmatprep.subr.mxu0 0.0
    %1626 = vmatpush2.msra.mxu0 0.0
    %1627 = vmatprep.subr.mxu0 0.0
    %1628 = vmatpush2.msra.mxu0 0.0
    %1629 = vmatprep.subr.mxu0 0.0
    %1630 = vmatpush2.msra.mxu0 0.0
    %1631 = vmatprep.subr.mxu0 0.0
    %1632 = vmatpush2.msra.mxu0 0.0
    %1633 = vmatprep.subr.mxu0 0.0
    %1634 = vmatpush2.msra.mxu0 0.0
    %1635 = vmatprep.subr.mxu0 0.0
    %1636 = vmatpush2.msra.mxu0 0.0
    %1637 = vmatprep.subr.mxu0 0.0
    %1638 = vmatpush2.msra.mxu0 0.0
    %1639 = vmatprep.subr.mxu0 0.0
    %1640 = vmatpush2.msra.mxu0 0.0
    %1641 = vmatprep.subr.mxu0 0.0
    %1642 = vmatpush2.msra.mxu0 0.0
    %1643 = vmatprep.subr.mxu0 0.0
    %1644 = vmatpush2.msra.mxu0 0.0
    %1645 = vmatprep.subr.mxu0 0.0
    %1646 = vmatpush2.msra.mxu0 0.0
    %1647 = vmatprep.subr.mxu0 0.0
    %1648 = vmatpush2.msra.mxu0 0.0
    %1649 = vmatprep.mubr.f32.mxu0 0.0
    %1650 = vmatmul.mubr.f32.gmra.mxu0 %v1531
    %v1651 = vpop.f32.mrf.mxu0
    %v1652 = vadd.f32 0.0, %v1651
    %v1653 = vpop.f32.mrf.mxu0
    %v1654 = vadd.f32 0.0, %v1653
    %1655 = vmatprep.mubr.f32.mxu0 0.0
    %1656 = vmatmul.mubr.f32.gmra.mxu0 %v1533
    %v1657 = vpop.f32.mrf.mxu0
    %v1658 = vadd.f32 0.0, %v1657
    %v1659 = vpop.f32.mrf.mxu0
    %v1660 = vadd.f32 0.0, %v1659
    %1661 = vmatprep.mubr.f32.mxu0 0.0
    %1662 = vmatmul.mubr.f32.gmra.mxu0 %v1535
    %v1663 = vpop.f32.mrf.mxu0
    %v1664 = vadd.f32 0.0, %v1663
    %v1665 = vpop.f32.mrf.mxu0
    %v1666 = vadd.f32 0.0, %v1665
    %1667 = vmatprep.mubr.f32.mxu0 0.0
    %1668 = vmatmul.mubr.f32.gmra.mxu0 %v1537
    %v1669 = vpop.f32.mrf.mxu0
    %v1670 = vadd.f32 0.0, %v1669
    %v1671 = vpop.f32.mrf.mxu0
    %v1672 = vadd.f32 0.0, %v1671
    %1673 = vmatprep.mubr.f32.mxu0 0.0
    %1674 = vmatmul.mubr.f32.gmra.mxu0 %v1539
    %v1675 = vpop.f32.mrf.mxu0
    %v1676 = vadd.f32 0.0, %v1675
    %v1677 = vpop.f32.mrf.mxu0
    %v1678 = vadd.f32 0.0, %v1677
    %1679 = vmatprep.mubr.f32.mxu0 0.0
    %1680 = vmatmul.mubr.f32.gmra.mxu0 %v1541
    %v1681 = vpop.f32.mrf.mxu0
    %v1682 = vadd.f32 0.0, %v1681
    %v1683 = vpop.f32.mrf.mxu0
    %v1684 = vadd.f32 0.0, %v1683
    %1685 = vmatprep.mubr.f32.mxu0 0.0
    %1686 = vmatmul.mubr.f32.gmra.mxu0 %v1543
    %v1687 = vpop.f32.mrf.mxu0
    %v1688 = vadd.f32 0.0, %v1687
    %v1689 = vpop.f32.mrf.mxu0
    %v1690 = vadd.f32 0.0, %v1689
    %1691 = vmatprep.mubr.f32.mxu0 0.0
    %1692 = vmatmul.mubr.f32.gmra.mxu0 %v1545
    %v1693 = vpop.f32.mrf.mxu0
    %v1694 = vadd.f32 0.0, %v1693
    %v1695 = vpop.f32.mrf.mxu0
    %v1696 = vadd.f32 0.0, %v1695
    %1697 = vmatprep.mubr.f32.mxu0 0.0
    %1698 = vmatmul.mubr.f32.gmra.mxu0 %v1547
    %v1699 = vpop.f32.mrf.mxu0
    %v1700 = vadd.f32 0.0, %v1699
    %v1701 = vpop.f32.mrf.mxu0
    %v1702 = vadd.f32 0.0, %v1701
    %1703 = vmatprep.mubr.f32.mxu0 0.0
    %1704 = vmatmul.mubr.f32.gmra.mxu0 %v1549
    %v1705 = vpop.f32.mrf.mxu0
    %v1706 = vadd.f32 0.0, %v1705
    %v1707 = vpop.f32.mrf.mxu0
    %v1708 = vadd.f32 0.0, %v1707
    %1709 = vmatprep.mubr.f32.mxu0 0.0
    %1710 = vmatmul.mubr.f32.gmra.mxu0 %v1551
    %v1711 = vpop.f32.mrf.mxu0
    %v1712 = vadd.f32 0.0, %v1711
    %v1713 = vpop.f32.mrf.mxu0
    %v1714 = vadd.f32 0.0, %v1713
    %1715 = vmatprep.mubr.f32.mxu0 0.0
    %1716 = vmatmul.mubr.f32.gmra.mxu0 %v1553
    %v1717 = vpop.f32.mrf.mxu0
    %v1718 = vadd.f32 0.0, %v1717
    %v1719 = vpop.f32.mrf.mxu0
    %v1720 = vadd.f32 0.0, %v1719
    %1721 = vmatprep.mubr.f32.mxu0 0.0
    %1722 = vmatmul.mubr.f32.gmra.mxu0 %v1555
    %v1723 = vpop.f32.mrf.mxu0
    %v1724 = vadd.f32 0.0, %v1723
    %v1725 = vpop.f32.mrf.mxu0
    %v1726 = vadd.f32 0.0, %v1725
    %1727 = vmatprep.mubr.f32.mxu0 0.0
    %1728 = vmatmul.mubr.f32.gmra.mxu0 %v1557
    %v1729 = vpop.f32.mrf.mxu0
    %v1730 = vadd.f32 0.0, %v1729
    %v1731 = vpop.f32.mrf.mxu0
    %v1732 = vadd.f32 0.0, %v1731
    %1733 = vmatprep.mubr.f32.mxu0 0.0
    %1734 = vmatmul.mubr.f32.gmra.mxu0 %v1559
    %v1735 = vpop.f32.mrf.mxu0
    %v1736 = vadd.f32 0.0, %v1735
    %v1737 = vpop.f32.mrf.mxu0
    %v1738 = vadd.f32 0.0, %v1737
    %1739 = vmatprep.mubr.f32.mxu0 0.0
    %1740 = vmatmul.mubr.f32.gmra.mxu0 %v1561
    %v1741 = vpop.f32.mrf.mxu0
    %v1742 = vadd.f32 0.0, %v1741
    %v1743 = vpop.f32.mrf.mxu0
    %v1744 = vadd.f32 0.0, %v1743
    %1745 = vmatprep.mubr.f32.mxu0 0.0
    %1746 = vmatmul.mubr.f32.gmra.mxu0 %v1563
    %v1747 = vpop.f32.mrf.mxu0
    %v1748 = vadd.f32 0.0, %v1747
    %v1749 = vpop.f32.mrf.mxu0
    %v1750 = vadd.f32 0.0, %v1749
    %1751 = vmatprep.mubr.f32.mxu0 0.0
    %1752 = vmatmul.mubr.f32.gmra.mxu0 %v1565
    %v1753 = vpop.f32.mrf.mxu0
    %v1754 = vadd.f32 0.0, %v1753
    %v1755 = vpop.f32.mrf.mxu0
    %v1756 = vadd.f32 0.0, %v1755
    %1757 = vmatprep.mubr.f32.mxu0 0.0
    %1758 = vmatmul.mubr.f32.gmra.mxu0 %v1567
    %v1759 = vpop.f32.mrf.mxu0
    %v1760 = vadd.f32 0.0, %v1759
    %v1761 = vpop.f32.mrf.mxu0
    %v1762 = vadd.f32 0.0, %v1761
    %1763 = vmatprep.mubr.f32.mxu0 0.0
    %1764 = vmatmul.mubr.f32.gmra.mxu0 %v1569
    %v1765 = vpop.f32.mrf.mxu0
    %v1766 = vadd.f32 0.0, %v1765
    %v1767 = vpop.f32.mrf.mxu0
    %v1768 = vadd.f32 0.0, %v1767
    %1769 = vmatprep.mubr.f32.mxu0 0.0
    %1770 = vmatmul.mubr.f32.gmra.mxu0 %v1571
    %v1771 = vpop.f32.mrf.mxu0
    %v1772 = vadd.f32 0.0, %v1771
    %v1773 = vpop.f32.mrf.mxu0
    %v1774 = vadd.f32 0.0, %v1773
    %1775 = vmatprep.mubr.f32.mxu0 0.0
    %1776 = vmatmul.mubr.f32.gmra.mxu0 %v1573
    %v1777 = vpop.f32.mrf.mxu0
    %v1778 = vadd.f32 0.0, %v1777
    %v1779 = vpop.f32.mrf.mxu0
    %v1780 = vadd.f32 0.0, %v1779
    %1781 = vmatprep.mubr.f32.mxu0 0.0
    %1782 = vmatmul.mubr.f32.gmra.mxu0 %v1575
    %v1783 = vpop.f32.mrf.mxu0
    %v1784 = vadd.f32 0.0, %v1783
    %v1785 = vpop.f32.mrf.mxu0
    %v1786 = vadd.f32 0.0, %v1785
    %1787 = vmatprep.mubr.f32.mxu0 0.0
    %1788 = vmatmul.mubr.f32.gmra.mxu0 %v1577
    %v1789 = vpop.f32.mrf.mxu0
    %v1790 = vadd.f32 0.0, %v1789
    %v1791 = vpop.f32.mrf.mxu0
    %v1792 = vadd.f32 0.0, %v1791
    %1793 = vdwg.mxu0
    %v1794 = vadd.f32 %v1418, %v1652
    %v1795 = vadd.f32 %v1419, %v1654
    %v1796 = vadd.f32 %v1420, %v1658
    %v1797 = vadd.f32 %v1421, %v1660
    %v1798 = vadd.f32 %v1422, %v1664
    %v1799 = vadd.f32 %v1423, %v1666
    %v1800 = vadd.f32 %v1424, %v1670
    %v1801 = vadd.f32 %v1425, %v1672
    %v1802 = vadd.f32 %v1426, %v1676
    %v1803 = vadd.f32 %v1427, %v1678
    %v1804 = vadd.f32 %v1428, %v1682
    %v1805 = vadd.f32 %v1429, %v1684
    %v1806 = vadd.f32 %v1430, %v1688
    %v1807 = vadd.f32 %v1431, %v1690
    %v1808 = vadd.f32 %v1432, %v1694
    %v1809 = vadd.f32 %v1433, %v1696
    %v1810 = vadd.f32 %v1434, %v1700
    %v1811 = vadd.f32 %v1435, %v1702
    %v1812 = vadd.f32 %v1436, %v1706
    %v1813 = vadd.f32 %v1437, %v1708
    %v1814 = vadd.f32 %v1438, %v1712
    %v1815 = vadd.f32 %v1439, %v1714
    %v1816 = vadd.f32 %v1440, %v1718
    %v1817 = vadd.f32 %v1441, %v1720
    %v1818 = vadd.f32 %v1442, %v1724
    %v1819 = vadd.f32 %v1443, %v1726
    %v1820 = vadd.f32 %v1444, %v1730
    %v1821 = vadd.f32 %v1445, %v1732
    %v1822 = vadd.f32 %v1446, %v1736
    %v1823 = vadd.f32 %v1447, %v1738
    %v1824 = vadd.f32 %v1448, %v1742
    %v1825 = vadd.f32 %v1449, %v1744
    %v1826 = vadd.f32 %v1450, %v1748
    %v1827 = vadd.f32 %v1451, %v1750
    %v1828 = vadd.f32 %v1452, %v1754
    %v1829 = vadd.f32 %v1453, %v1756
    %v1830 = vadd.f32 %v1454, %v1760
    %v1831 = vadd.f32 %v1455, %v1762
    %v1832 = vadd.f32 %v1456, %v1766
    %v1833 = vadd.f32 %v1457, %v1768
    %v1834 = vadd.f32 %v1458, %v1772
    %v1835 = vadd.f32 %v1459, %v1774
    %v1836 = vadd.f32 %v1460, %v1778
    %v1837 = vadd.f32 %v1461, %v1780
    %v1838 = vadd.f32 %v1462, %v1784
    %v1839 = vadd.f32 %v1463, %v1786
    %v1840 = vadd.f32 %v1464, %v1790
    %v1841 = vadd.f32 %v1465, %v1792
    %v1842 = vld [vmem:[%s2] sm:$0x3]
    %v1844 = vlaneseq
    %v1845 = vshrl.u32 %v1844, 7
    %v1846 = vsub.s32 0, %v1845
    %v1847 = vrot.slane %v1842, %v1846
    %v1848 = vlaneseq
    %v1849 = vshrl.u32 %v1848, 7
    %v1850 = vsub.s32 1, %v1849
    %v1851 = vrot.slane %v1842, %v1850
    %v1854 = vadd.f32 %v1794, %v1847
    %v1855 = vadd.f32 %v1795, %v1851
    %v1856 = vadd.f32 %v1796, %v1847
    %v1857 = vadd.f32 %v1797, %v1851
    %v1858 = vadd.f32 %v1798, %v1847
    %v1859 = vadd.f32 %v1799, %v1851
    %v1860 = vadd.f32 %v1800, %v1847
    %v1861 = vadd.f32 %v1801, %v1851
    %v1862 = vadd.f32 %v1802, %v1847
    %v1863 = vadd.f32 %v1803, %v1851
    %v1864 = vadd.f32 %v1804, %v1847
    %v1865 = vadd.f32 %v1805, %v1851
    %v1866 = vadd.f32 %v1806, %v1847
    %v1867 = vadd.f32 %v1807, %v1851
    %v1868 = vadd.f32 %v1808, %v1847
    %v1869 = vadd.f32 %v1809, %v1851
    %v1870 = vadd.f32 %v1810, %v1847
    %v1871 = vadd.f32 %v1811, %v1851
    %v1872 = vadd.f32 %v1812, %v1847
    %v1873 = vadd.f32 %v1813, %v1851
    %v1874 = vadd.f32 %v1814, %v1847
    %v1875 = vadd.f32 %v1815, %v1851
    %v1876 = vadd.f32 %v1816, %v1847
    %v1877 = vadd.f32 %v1817, %v1851
    %v1878 = vadd.f32 %v1818, %v1847
    %v1879 = vadd.f32 %v1819, %v1851
    %v1880 = vadd.f32 %v1820, %v1847
    %v1881 = vadd.f32 %v1821, %v1851
    %v1882 = vadd.f32 %v1822, %v1847
    %v1883 = vadd.f32 %v1823, %v1851
    %v1884 = vadd.f32 %v1824, %v1847
    %v1885 = vadd.f32 %v1825, %v1851
    %v1886 = vadd.f32 %v1826, %v1847
    %v1887 = vadd.f32 %v1827, %v1851
    %v1888 = vadd.f32 %v1828, %v1847
    %v1889 = vadd.f32 %v1829, %v1851
    %v1890 = vadd.f32 %v1830, %v1847
    %v1891 = vadd.f32 %v1831, %v1851
    %v1892 = vadd.f32 %v1832, %v1847
    %v1893 = vadd.f32 %v1833, %v1851
    %v1894 = vadd.f32 %v1834, %v1847
    %v1895 = vadd.f32 %v1835, %v1851
    %v1896 = vadd.f32 %v1836, %v1847
    %v1897 = vadd.f32 %v1837, %v1851
    %v1898 = vadd.f32 %v1838, %v1847
    %v1899 = vadd.f32 %v1839, %v1851
    %v1900 = vadd.f32 %v1840, %v1847
    %v1901 = vadd.f32 %v1841, %v1851
    %v1902 = vmax.f32 %v1854, %v1855
    %v1903 = vmax.f32 %v1856, %v1857
    %v1904 = vmax.f32 %v1858, %v1859
    %v1905 = vmax.f32 %v1860, %v1861
    %v1906 = vmax.f32 %v1862, %v1863
    %v1907 = vmax.f32 %v1864, %v1865
    %v1908 = vmax.f32 %v1866, %v1867
    %v1909 = vmax.f32 %v1868, %v1869
    %v1910 = vmax.f32 %v1870, %v1871
    %v1911 = vmax.f32 %v1872, %v1873
    %v1912 = vmax.f32 %v1874, %v1875
    %v1913 = vmax.f32 %v1876, %v1877
    %v1914 = vmax.f32 %v1878, %v1879
    %v1915 = vmax.f32 %v1880, %v1881
    %v1916 = vmax.f32 %v1882, %v1883
    %v1917 = vmax.f32 %v1884, %v1885
    %v1918 = vmax.f32 %v1886, %v1887
    %v1919 = vmax.f32 %v1888, %v1889
    %v1920 = vmax.f32 %v1890, %v1891
    %v1921 = vmax.f32 %v1892, %v1893
    %v1922 = vmax.f32 %v1894, %v1895
    %v1923 = vmax.f32 %v1896, %v1897
    %v1924 = vmax.f32 %v1898, %v1899
    %v1925 = vmax.f32 %v1900, %v1901
    %v1950 = vcombine.high %v1902, %v1902
    %v1952 = vunpack.c.l.s4 1983009808
    %v1953 = vunpack.c.0.s8 %v1952
    %v1954 = vlaneseq
    %v1955 = vshrl.u32 %v1954, 7
    %v1956 = vsub.s32 %v1953, %v1955
    %v1957 = vrot.slane %v1902, %v1956
    %v1959 = vunpack.c.l.s4 1983009808
    %v1960 = vunpack.c.0.s8 %v1959
    %v1961 = vlaneseq
    %v1962 = vshrl.u32 %v1961, 7
    %v1963 = vsub.s32 %v1960, %v1962
    %v1964 = vrot.slane %v1950, %v1963
    %v1965 = vcombine.high %v1957, %v1957
    %v1966 = vcombine.high %v1964, %v1964
    %v1967 = vcombine.high %v1903, %v1903
    %v1969 = vunpack.c.l.s4 1983009808
    %v1970 = vunpack.c.0.s8 %v1969
    %v1971 = vlaneseq
    %v1972 = vshrl.u32 %v1971, 7
    %v1973 = vsub.s32 %v1970, %v1972
    %v1974 = vrot.slane %v1903, %v1973
    %v1976 = vunpack.c.l.s4 1983009808
    %v1977 = vunpack.c.0.s8 %v1976
    %v1978 = vlaneseq
    %v1979 = vshrl.u32 %v1978, 7
    %v1980 = vsub.s32 %v1977, %v1979
    %v1981 = vrot.slane %v1967, %v1980
    %v1982 = vcombine.high %v1974, %v1974
    %v1983 = vcombine.high %v1981, %v1981
    %v1984 = vcombine.high %v1904, %v1904
    %v1986 = vunpack.c.l.s4 1983009808
    %v1987 = vunpack.c.0.s8 %v1986
    %v1988 = vlaneseq
    %v1989 = vshrl.u32 %v1988, 7
    %v1990 = vsub.s32 %v1987, %v1989
    %v1991 = vrot.slane %v1904, %v1990
    %v1993 = vunpack.c.l.s4 1983009808
    %v1994 = vunpack.c.0.s8 %v1993
    %v1995 = vlaneseq
    %v1996 = vshrl.u32 %v1995, 7
    %v1997 = vsub.s32 %v1994, %v1996
    %v1998 = vrot.slane %v1984, %v1997
    %v1999 = vcombine.high %v1991, %v1991
    %v2000 = vcombine.high %v1998, %v1998
    %v2001 = vcombine.high %v1905, %v1905
    %v2003 = vunpack.c.l.s4 1983009808
    %v2004 = vunpack.c.0.s8 %v2003
    %v2005 = vlaneseq
    %v2006 = vshrl.u32 %v2005, 7
    %v2007 = vsub.s32 %v2004, %v2006
    %v2008 = vrot.slane %v1905, %v2007
    %v2010 = vunpack.c.l.s4 1983009808
    %v2011 = vunpack.c.0.s8 %v2010
    %v2012 = vlaneseq
    %v2013 = vshrl.u32 %v2012, 7
    %v2014 = vsub.s32 %v2011, %v2013
    %v2015 = vrot.slane %v2001, %v2014
    %v2016 = vcombine.high %v2008, %v2008
    %v2017 = vcombine.high %v2015, %v2015
    %v2018 = vcombine.high %v1906, %v1906
    %v2020 = vunpack.c.l.s4 1983009808
    %v2021 = vunpack.c.0.s8 %v2020
    %v2022 = vlaneseq
    %v2023 = vshrl.u32 %v2022, 7
    %v2024 = vsub.s32 %v2021, %v2023
    %v2025 = vrot.slane %v1906, %v2024
    %v2027 = vunpack.c.l.s4 1983009808
    %v2028 = vunpack.c.0.s8 %v2027
    %v2029 = vlaneseq
    %v2030 = vshrl.u32 %v2029, 7
    %v2031 = vsub.s32 %v2028, %v2030
    %v2032 = vrot.slane %v2018, %v2031
    %v2033 = vcombine.high %v2025, %v2025
    %v2034 = vcombine.high %v2032, %v2032
    %v2035 = vcombine.high %v1907, %v1907
    %v2037 = vunpack.c.l.s4 1983009808
    %v2038 = vunpack.c.0.s8 %v2037
    %v2039 = vlaneseq
    %v2040 = vshrl.u32 %v2039, 7
    %v2041 = vsub.s32 %v2038, %v2040
    %v2042 = vrot.slane %v1907, %v2041
    %v2044 = vunpack.c.l.s4 1983009808
    %v2045 = vunpack.c.0.s8 %v2044
    %v2046 = vlaneseq
    %v2047 = vshrl.u32 %v2046, 7
    %v2048 = vsub.s32 %v2045, %v2047
    %v2049 = vrot.slane %v2035, %v2048
    %v2050 = vcombine.high %v2042, %v2042
    %v2051 = vcombine.high %v2049, %v2049
    %v2052 = vcombine.high %v1908, %v1908
    %v2054 = vunpack.c.l.s4 1983009808
    %v2055 = vunpack.c.0.s8 %v2054
    %v2056 = vlaneseq
    %v2057 = vshrl.u32 %v2056, 7
    %v2058 = vsub.s32 %v2055, %v2057
    %v2059 = vrot.slane %v1908, %v2058
    %v2061 = vunpack.c.l.s4 1983009808
    %v2062 = vunpack.c.0.s8 %v2061
    %v2063 = vlaneseq
    %v2064 = vshrl.u32 %v2063, 7
    %v2065 = vsub.s32 %v2062, %v2064
    %v2066 = vrot.slane %v2052, %v2065
    %v2067 = vcombine.high %v2059, %v2059
    %v2068 = vcombine.high %v2066, %v2066
    %v2069 = vcombine.high %v1909, %v1909
    %v2071 = vunpack.c.l.s4 1983009808
    %v2072 = vunpack.c.0.s8 %v2071
    %v2073 = vlaneseq
    %v2074 = vshrl.u32 %v2073, 7
    %v2075 = vsub.s32 %v2072, %v2074
    %v2076 = vrot.slane %v1909, %v2075
    %v2078 = vunpack.c.l.s4 1983009808
    %v2079 = vunpack.c.0.s8 %v2078
    %v2080 = vlaneseq
    %v2081 = vshrl.u32 %v2080, 7
    %v2082 = vsub.s32 %v2079, %v2081
    %v2083 = vrot.slane %v2069, %v2082
    %v2084 = vcombine.high %v2076, %v2076
    %v2085 = vcombine.high %v2083, %v2083
    %v2086 = vcombine.high %v1910, %v1910
    %v2088 = vunpack.c.l.s4 1983009808
    %v2089 = vunpack.c.0.s8 %v2088
    %v2090 = vlaneseq
    %v2091 = vshrl.u32 %v2090, 7
    %v2092 = vsub.s32 %v2089, %v2091
    %v2093 = vrot.slane %v1910, %v2092
    %v2095 = vunpack.c.l.s4 1983009808
    %v2096 = vunpack.c.0.s8 %v2095
    %v2097 = vlaneseq
    %v2098 = vshrl.u32 %v2097, 7
    %v2099 = vsub.s32 %v2096, %v2098
    %v2100 = vrot.slane %v2086, %v2099
    %v2101 = vcombine.high %v2093, %v2093
    %v2102 = vcombine.high %v2100, %v2100
    %v2103 = vcombine.high %v1911, %v1911
    %v2105 = vunpack.c.l.s4 1983009808
    %v2106 = vunpack.c.0.s8 %v2105
    %v2107 = vlaneseq
    %v2108 = vshrl.u32 %v2107, 7
    %v2109 = vsub.s32 %v2106, %v2108
    %v2110 = vrot.slane %v1911, %v2109
    %v2112 = vunpack.c.l.s4 1983009808
    %v2113 = vunpack.c.0.s8 %v2112
    %v2114 = vlaneseq
    %v2115 = vshrl.u32 %v2114, 7
    %v2116 = vsub.s32 %v2113, %v2115
    %v2117 = vrot.slane %v2103, %v2116
    %v2118 = vcombine.high %v2110, %v2110
    %v2119 = vcombine.high %v2117, %v2117
    %v2120 = vcombine.high %v1912, %v1912
    %v2122 = vunpack.c.l.s4 1983009808
    %v2123 = vunpack.c.0.s8 %v2122
    %v2124 = vlaneseq
    %v2125 = vshrl.u32 %v2124, 7
    %v2126 = vsub.s32 %v2123, %v2125
    %v2127 = vrot.slane %v1912, %v2126
    %v2129 = vunpack.c.l.s4 1983009808
    %v2130 = vunpack.c.0.s8 %v2129
    %v2131 = vlaneseq
    %v2132 = vshrl.u32 %v2131, 7
    %v2133 = vsub.s32 %v2130, %v2132
    %v2134 = vrot.slane %v2120, %v2133
    %v2135 = vcombine.high %v2127, %v2127
    %v2136 = vcombine.high %v2134, %v2134
    %v2137 = vcombine.high %v1913, %v1913
    %v2139 = vunpack.c.l.s4 1983009808
    %v2140 = vunpack.c.0.s8 %v2139
    %v2141 = vlaneseq
    %v2142 = vshrl.u32 %v2141, 7
    %v2143 = vsub.s32 %v2140, %v2142
    %v2144 = vrot.slane %v1913, %v2143
    %v2146 = vunpack.c.l.s4 1983009808
    %v2147 = vunpack.c.0.s8 %v2146
    %v2148 = vlaneseq
    %v2149 = vshrl.u32 %v2148, 7
    %v2150 = vsub.s32 %v2147, %v2149
    %v2151 = vrot.slane %v2137, %v2150
    %v2152 = vcombine.high %v2144, %v2144
    %v2153 = vcombine.high %v2151, %v2151
    %v2154 = vcombine.high %v1914, %v1914
    %v2156 = vunpack.c.l.s4 1983009808
    %v2157 = vunpack.c.0.s8 %v2156
    %v2158 = vlaneseq
    %v2159 = vshrl.u32 %v2158, 7
    %v2160 = vsub.s32 %v2157, %v2159
    %v2161 = vrot.slane %v1914, %v2160
    %v2163 = vunpack.c.l.s4 1983009808
    %v2164 = vunpack.c.0.s8 %v2163
    %v2165 = vlaneseq
    %v2166 = vshrl.u32 %v2165, 7
    %v2167 = vsub.s32 %v2164, %v2166
    %v2168 = vrot.slane %v2154, %v2167
    %v2169 = vcombine.high %v2161, %v2161
    %v2170 = vcombine.high %v2168, %v2168
    %v2171 = vcombine.high %v1915, %v1915
    %v2173 = vunpack.c.l.s4 1983009808
    %v2174 = vunpack.c.0.s8 %v2173
    %v2175 = vlaneseq
    %v2176 = vshrl.u32 %v2175, 7
    %v2177 = vsub.s32 %v2174, %v2176
    %v2178 = vrot.slane %v1915, %v2177
    %v2180 = vunpack.c.l.s4 1983009808
    %v2181 = vunpack.c.0.s8 %v2180
    %v2182 = vlaneseq
    %v2183 = vshrl.u32 %v2182, 7
    %v2184 = vsub.s32 %v2181, %v2183
    %v2185 = vrot.slane %v2171, %v2184
    %v2186 = vcombine.high %v2178, %v2178
    %v2187 = vcombine.high %v2185, %v2185
    %v2188 = vcombine.high %v1916, %v1916
    %v2190 = vunpack.c.l.s4 1983009808
    %v2191 = vunpack.c.0.s8 %v2190
    %v2192 = vlaneseq
    %v2193 = vshrl.u32 %v2192, 7
    %v2194 = vsub.s32 %v2191, %v2193
    %v2195 = vrot.slane %v1916, %v2194
    %v2197 = vunpack.c.l.s4 1983009808
    %v2198 = vunpack.c.0.s8 %v2197
    %v2199 = vlaneseq
    %v2200 = vshrl.u32 %v2199, 7
    %v2201 = vsub.s32 %v2198, %v2200
    %v2202 = vrot.slane %v2188, %v2201
    %v2203 = vcombine.high %v2195, %v2195
    %v2204 = vcombine.high %v2202, %v2202
    %v2205 = vcombine.high %v1917, %v1917
    %v2207 = vunpack.c.l.s4 1983009808
    %v2208 = vunpack.c.0.s8 %v2207
    %v2209 = vlaneseq
    %v2210 = vshrl.u32 %v2209, 7
    %v2211 = vsub.s32 %v2208, %v2210
    %v2212 = vrot.slane %v1917, %v2211
    %v2214 = vunpack.c.l.s4 1983009808
    %v2215 = vunpack.c.0.s8 %v2214
    %v2216 = vlaneseq
    %v2217 = vshrl.u32 %v2216, 7
    %v2218 = vsub.s32 %v2215, %v2217
    %v2219 = vrot.slane %v2205, %v2218
    %v2220 = vcombine.high %v2212, %v2212
    %v2221 = vcombine.high %v2219, %v2219
    %v2222 = vcombine.high %v1918, %v1918
    %v2224 = vunpack.c.l.s4 1983009808
    %v2225 = vunpack.c.0.s8 %v2224
    %v2226 = vlaneseq
    %v2227 = vshrl.u32 %v2226, 7
    %v2228 = vsub.s32 %v2225, %v2227
    %v2229 = vrot.slane %v1918, %v2228
    %v2231 = vunpack.c.l.s4 1983009808
    %v2232 = vunpack.c.0.s8 %v2231
    %v2233 = vlaneseq
    %v2234 = vshrl.u32 %v2233, 7
    %v2235 = vsub.s32 %v2232, %v2234
    %v2236 = vrot.slane %v2222, %v2235
    %v2237 = vcombine.high %v2229, %v2229
    %v2238 = vcombine.high %v2236, %v2236
    %v2239 = vcombine.high %v1919, %v1919
    %v2241 = vunpack.c.l.s4 1983009808
    %v2242 = vunpack.c.0.s8 %v2241
    %v2243 = vlaneseq
    %v2244 = vshrl.u32 %v2243, 7
    %v2245 = vsub.s32 %v2242, %v2244
    %v2246 = vrot.slane %v1919, %v2245
    %v2248 = vunpack.c.l.s4 1983009808
    %v2249 = vunpack.c.0.s8 %v2248
    %v2250 = vlaneseq
    %v2251 = vshrl.u32 %v2250, 7
    %v2252 = vsub.s32 %v2249, %v2251
    %v2253 = vrot.slane %v2239, %v2252
    %v2254 = vcombine.high %v2246, %v2246
    %v2255 = vcombine.high %v2253, %v2253
    %v2256 = vcombine.high %v1920, %v1920
    %v2258 = vunpack.c.l.s4 1983009808
    %v2259 = vunpack.c.0.s8 %v2258
    %v2260 = vlaneseq
    %v2261 = vshrl.u32 %v2260, 7
    %v2262 = vsub.s32 %v2259, %v2261
    %v2263 = vrot.slane %v1920, %v2262
    %v2265 = vunpack.c.l.s4 1983009808
    %v2266 = vunpack.c.0.s8 %v2265
    %v2267 = vlaneseq
    %v2268 = vshrl.u32 %v2267, 7
    %v2269 = vsub.s32 %v2266, %v2268
    %v2270 = vrot.slane %v2256, %v2269
    %v2271 = vcombine.high %v2263, %v2263
    %v2272 = vcombine.high %v2270, %v2270
    %v2273 = vcombine.high %v1921, %v1921
    %v2275 = vunpack.c.l.s4 1983009808
    %v2276 = vunpack.c.0.s8 %v2275
    %v2277 = vlaneseq
    %v2278 = vshrl.u32 %v2277, 7
    %v2279 = vsub.s32 %v2276, %v2278
    %v2280 = vrot.slane %v1921, %v2279
    %v2282 = vunpack.c.l.s4 1983009808
    %v2283 = vunpack.c.0.s8 %v2282
    %v2284 = vlaneseq
    %v2285 = vshrl.u32 %v2284, 7
    %v2286 = vsub.s32 %v2283, %v2285
    %v2287 = vrot.slane %v2273, %v2286
    %v2288 = vcombine.high %v2280, %v2280
    %v2289 = vcombine.high %v2287, %v2287
    %v2290 = vcombine.high %v1922, %v1922
    %v2292 = vunpack.c.l.s4 1983009808
    %v2293 = vunpack.c.0.s8 %v2292
    %v2294 = vlaneseq
    %v2295 = vshrl.u32 %v2294, 7
    %v2296 = vsub.s32 %v2293, %v2295
    %v2297 = vrot.slane %v1922, %v2296
    %v2299 = vunpack.c.l.s4 1983009808
    %v2300 = vunpack.c.0.s8 %v2299
    %v2301 = vlaneseq
    %v2302 = vshrl.u32 %v2301, 7
    %v2303 = vsub.s32 %v2300, %v2302
    %v2304 = vrot.slane %v2290, %v2303
    %v2305 = vcombine.high %v2297, %v2297
    %v2306 = vcombine.high %v2304, %v2304
    %v2307 = vcombine.high %v1923, %v1923
    %v2309 = vunpack.c.l.s4 1983009808
    %v2310 = vunpack.c.0.s8 %v2309
    %v2311 = vlaneseq
    %v2312 = vshrl.u32 %v2311, 7
    %v2313 = vsub.s32 %v2310, %v2312
    %v2314 = vrot.slane %v1923, %v2313
    %v2316 = vunpack.c.l.s4 1983009808
    %v2317 = vunpack.c.0.s8 %v2316
    %v2318 = vlaneseq
    %v2319 = vshrl.u32 %v2318, 7
    %v2320 = vsub.s32 %v2317, %v2319
    %v2321 = vrot.slane %v2307, %v2320
    %v2322 = vcombine.high %v2314, %v2314
    %v2323 = vcombine.high %v2321, %v2321
    %v2324 = vcombine.high %v1924, %v1924
    %v2326 = vunpack.c.l.s4 1983009808
    %v2327 = vunpack.c.0.s8 %v2326
    %v2328 = vlaneseq
    %v2329 = vshrl.u32 %v2328, 7
    %v2330 = vsub.s32 %v2327, %v2329
    %v2331 = vrot.slane %v1924, %v2330
    %v2333 = vunpack.c.l.s4 1983009808
    %v2334 = vunpack.c.0.s8 %v2333
    %v2335 = vlaneseq
    %v2336 = vshrl.u32 %v2335, 7
    %v2337 = vsub.s32 %v2334, %v2336
    %v2338 = vrot.slane %v2324, %v2337
    %v2339 = vcombine.high %v2331, %v2331
    %v2340 = vcombine.high %v2338, %v2338
    %v2341 = vcombine.high %v1925, %v1925
    %v2343 = vunpack.c.l.s4 1983009808
    %v2344 = vunpack.c.0.s8 %v2343
    %v2345 = vlaneseq
    %v2346 = vshrl.u32 %v2345, 7
    %v2347 = vsub.s32 %v2344, %v2346
    %v2348 = vrot.slane %v1925, %v2347
    %v2350 = vunpack.c.l.s4 1983009808
    %v2351 = vunpack.c.0.s8 %v2350
    %v2352 = vlaneseq
    %v2353 = vshrl.u32 %v2352, 7
    %v2354 = vsub.s32 %v2351, %v2353
    %v2355 = vrot.slane %v2341, %v2354
    %v2356 = vcombine.high %v2348, %v2348
    %v2357 = vcombine.high %v2355, %v2355
    %vm2454 = vcmask 1041408
    %v2455 = vsel %vm2454, %v1957, -inf
    %v2456 = vrot.slane %v2455, 4
    %v2457 = vmax.f32 %v2455, %v2456
    %v2458 = vrot.slane %v2457, 2
    %v2459 = vmax.f32 %v2457, %v2458
    %v2460 = vrot.slane %v2459, 1
    %v2461 = vmax.f32 %v2459, %v2460
    %v2462 = vsel %vm2454, %v1965, -inf
    %v2463 = vrot.slane %v2462, 4
    %v2464 = vmax.f32 %v2462, %v2463
    %v2465 = vrot.slane %v2464, 2
    %v2466 = vmax.f32 %v2464, %v2465
    %v2467 = vrot.slane %v2466, 1
    %v2468 = vmax.f32 %v2466, %v2467
    %v2469 = vsel %vm2454, %v1964, -inf
    %v2470 = vrot.slane %v2469, 4
    %v2471 = vmax.f32 %v2469, %v2470
    %v2472 = vrot.slane %v2471, 2
    %v2473 = vmax.f32 %v2471, %v2472
    %v2474 = vrot.slane %v2473, 1
    %v2475 = vmax.f32 %v2473, %v2474
    %v2476 = vsel %vm2454, %v1966, -inf
    %v2477 = vrot.slane %v2476, 4
    %v2478 = vmax.f32 %v2476, %v2477
    %v2479 = vrot.slane %v2478, 2
    %v2480 = vmax.f32 %v2478, %v2479
    %v2481 = vrot.slane %v2480, 1
    %v2482 = vmax.f32 %v2480, %v2481
    %v2483 = vsel %vm2454, %v1974, -inf
    %v2484 = vrot.slane %v2483, 4
    %v2485 = vmax.f32 %v2483, %v2484
    %v2486 = vrot.slane %v2485, 2
    %v2487 = vmax.f32 %v2485, %v2486
    %v2488 = vrot.slane %v2487, 1
    %v2489 = vmax.f32 %v2487, %v2488
    %v2490 = vsel %vm2454, %v1982, -inf
    %v2491 = vrot.slane %v2490, 4
    %v2492 = vmax.f32 %v2490, %v2491
    %v2493 = vrot.slane %v2492, 2
    %v2494 = vmax.f32 %v2492, %v2493
    %v2495 = vrot.slane %v2494, 1
    %v2496 = vmax.f32 %v2494, %v2495
    %v2497 = vsel %vm2454, %v1981, -inf
    %v2498 = vrot.slane %v2497, 4
    %v2499 = vmax.f32 %v2497, %v2498
    %v2500 = vrot.slane %v2499, 2
    %v2501 = vmax.f32 %v2499, %v2500
    %v2502 = vrot.slane %v2501, 1
    %v2503 = vmax.f32 %v2501, %v2502
    %v2504 = vsel %vm2454, %v1983, -inf
    %v2505 = vrot.slane %v2504, 4
    %v2506 = vmax.f32 %v2504, %v2505
    %v2507 = vrot.slane %v2506, 2
    %v2508 = vmax.f32 %v2506, %v2507
    %v2509 = vrot.slane %v2508, 1
    %v2510 = vmax.f32 %v2508, %v2509
    %v2511 = vsel %vm2454, %v1991, -inf
    %v2512 = vrot.slane %v2511, 4
    %v2513 = vmax.f32 %v2511, %v2512
    %v2514 = vrot.slane %v2513, 2
    %v2515 = vmax.f32 %v2513, %v2514
    %v2516 = vrot.slane %v2515, 1
    %v2517 = vmax.f32 %v2515, %v2516
    %v2518 = vsel %vm2454, %v1999, -inf
    %v2519 = vrot.slane %v2518, 4
    %v2520 = vmax.f32 %v2518, %v2519
    %v2521 = vrot.slane %v2520, 2
    %v2522 = vmax.f32 %v2520, %v2521
    %v2523 = vrot.slane %v2522, 1
    %v2524 = vmax.f32 %v2522, %v2523
    %v2525 = vsel %vm2454, %v1998, -inf
    %v2526 = vrot.slane %v2525, 4
    %v2527 = vmax.f32 %v2525, %v2526
    %v2528 = vrot.slane %v2527, 2
    %v2529 = vmax.f32 %v2527, %v2528
    %v2530 = vrot.slane %v2529, 1
    %v2531 = vmax.f32 %v2529, %v2530
    %v2532 = vsel %vm2454, %v2000, -inf
    %v2533 = vrot.slane %v2532, 4
    %v2534 = vmax.f32 %v2532, %v2533
    %v2535 = vrot.slane %v2534, 2
    %v2536 = vmax.f32 %v2534, %v2535
    %v2537 = vrot.slane %v2536, 1
    %v2538 = vmax.f32 %v2536, %v2537
    %v2539 = vsel %vm2454, %v2008, -inf
    %v2540 = vrot.slane %v2539, 4
    %v2541 = vmax.f32 %v2539, %v2540
    %v2542 = vrot.slane %v2541, 2
    %v2543 = vmax.f32 %v2541, %v2542
    %v2544 = vrot.slane %v2543, 1
    %v2545 = vmax.f32 %v2543, %v2544
    %v2546 = vsel %vm2454, %v2016, -inf
    %v2547 = vrot.slane %v2546, 4
    %v2548 = vmax.f32 %v2546, %v2547
    %v2549 = vrot.slane %v2548, 2
    %v2550 = vmax.f32 %v2548, %v2549
    %v2551 = vrot.slane %v2550, 1
    %v2552 = vmax.f32 %v2550, %v2551
    %v2553 = vsel %vm2454, %v2015, -inf
    %v2554 = vrot.slane %v2553, 4
    %v2555 = vmax.f32 %v2553, %v2554
    %v2556 = vrot.slane %v2555, 2
    %v2557 = vmax.f32 %v2555, %v2556
    %v2558 = vrot.slane %v2557, 1
    %v2559 = vmax.f32 %v2557, %v2558
    %v2560 = vsel %vm2454, %v2017, -inf
    %v2561 = vrot.slane %v2560, 4
    %v2562 = vmax.f32 %v2560, %v2561
    %v2563 = vrot.slane %v2562, 2
    %v2564 = vmax.f32 %v2562, %v2563
    %v2565 = vrot.slane %v2564, 1
    %v2566 = vmax.f32 %v2564, %v2565
    %v2567 = vsel %vm2454, %v2025, -inf
    %v2568 = vrot.slane %v2567, 4
    %v2569 = vmax.f32 %v2567, %v2568
    %v2570 = vrot.slane %v2569, 2
    %v2571 = vmax.f32 %v2569, %v2570
    %v2572 = vrot.slane %v2571, 1
    %v2573 = vmax.f32 %v2571, %v2572
    %v2574 = vsel %vm2454, %v2033, -inf
    %v2575 = vrot.slane %v2574, 4
    %v2576 = vmax.f32 %v2574, %v2575
    %v2577 = vrot.slane %v2576, 2
    %v2578 = vmax.f32 %v2576, %v2577
    %v2579 = vrot.slane %v2578, 1
    %v2580 = vmax.f32 %v2578, %v2579
    %v2581 = vsel %vm2454, %v2032, -inf
    %v2582 = vrot.slane %v2581, 4
    %v2583 = vmax.f32 %v2581, %v2582
    %v2584 = vrot.slane %v2583, 2
    %v2585 = vmax.f32 %v2583, %v2584
    %v2586 = vrot.slane %v2585, 1
    %v2587 = vmax.f32 %v2585, %v2586
    %v2588 = vsel %vm2454, %v2034, -inf
    %v2589 = vrot.slane %v2588, 4
    %v2590 = vmax.f32 %v2588, %v2589
    %v2591 = vrot.slane %v2590, 2
    %v2592 = vmax.f32 %v2590, %v2591
    %v2593 = vrot.slane %v2592, 1
    %v2594 = vmax.f32 %v2592, %v2593
    %v2595 = vsel %vm2454, %v2042, -inf
    %v2596 = vrot.slane %v2595, 4
    %v2597 = vmax.f32 %v2595, %v2596
    %v2598 = vrot.slane %v2597, 2
    %v2599 = vmax.f32 %v2597, %v2598
    %v2600 = vrot.slane %v2599, 1
    %v2601 = vmax.f32 %v2599, %v2600
    %v2602 = vsel %vm2454, %v2050, -inf
    %v2603 = vrot.slane %v2602, 4
    %v2604 = vmax.f32 %v2602, %v2603
    %v2605 = vrot.slane %v2604, 2
    %v2606 = vmax.f32 %v2604, %v2605
    %v2607 = vrot.slane %v2606, 1
    %v2608 = vmax.f32 %v2606, %v2607
    %v2609 = vsel %vm2454, %v2049, -inf
    %v2610 = vrot.slane %v2609, 4
    %v2611 = vmax.f32 %v2609, %v2610
    %v2612 = vrot.slane %v2611, 2
    %v2613 = vmax.f32 %v2611, %v2612
    %v2614 = vrot.slane %v2613, 1
    %v2615 = vmax.f32 %v2613, %v2614
    %v2616 = vsel %vm2454, %v2051, -inf
    %v2617 = vrot.slane %v2616, 4
    %v2618 = vmax.f32 %v2616, %v2617
    %v2619 = vrot.slane %v2618, 2
    %v2620 = vmax.f32 %v2618, %v2619
    %v2621 = vrot.slane %v2620, 1
    %v2622 = vmax.f32 %v2620, %v2621
    %v2623 = vsel %vm2454, %v2059, -inf
    %v2624 = vrot.slane %v2623, 4
    %v2625 = vmax.f32 %v2623, %v2624
    %v2626 = vrot.slane %v2625, 2
    %v2627 = vmax.f32 %v2625, %v2626
    %v2628 = vrot.slane %v2627, 1
    %v2629 = vmax.f32 %v2627, %v2628
    %v2630 = vsel %vm2454, %v2067, -inf
    %v2631 = vrot.slane %v2630, 4
    %v2632 = vmax.f32 %v2630, %v2631
    %v2633 = vrot.slane %v2632, 2
    %v2634 = vmax.f32 %v2632, %v2633
    %v2635 = vrot.slane %v2634, 1
    %v2636 = vmax.f32 %v2634, %v2635
    %v2637 = vsel %vm2454, %v2066, -inf
    %v2638 = vrot.slane %v2637, 4
    %v2639 = vmax.f32 %v2637, %v2638
    %v2640 = vrot.slane %v2639, 2
    %v2641 = vmax.f32 %v2639, %v2640
    %v2642 = vrot.slane %v2641, 1
    %v2643 = vmax.f32 %v2641, %v2642
    %v2644 = vsel %vm2454, %v2068, -inf
    %v2645 = vrot.slane %v2644, 4
    %v2646 = vmax.f32 %v2644, %v2645
    %v2647 = vrot.slane %v2646, 2
    %v2648 = vmax.f32 %v2646, %v2647
    %v2649 = vrot.slane %v2648, 1
    %v2650 = vmax.f32 %v2648, %v2649
    %v2651 = vsel %vm2454, %v2076, -inf
    %v2652 = vrot.slane %v2651, 4
    %v2653 = vmax.f32 %v2651, %v2652
    %v2654 = vrot.slane %v2653, 2
    %v2655 = vmax.f32 %v2653, %v2654
    %v2656 = vrot.slane %v2655, 1
    %v2657 = vmax.f32 %v2655, %v2656
    %v2658 = vsel %vm2454, %v2084, -inf
    %v2659 = vrot.slane %v2658, 4
    %v2660 = vmax.f32 %v2658, %v2659
    %v2661 = vrot.slane %v2660, 2
    %v2662 = vmax.f32 %v2660, %v2661
    %v2663 = vrot.slane %v2662, 1
    %v2664 = vmax.f32 %v2662, %v2663
    %v2665 = vsel %vm2454, %v2083, -inf
    %v2666 = vrot.slane %v2665, 4
    %v2667 = vmax.f32 %v2665, %v2666
    %v2668 = vrot.slane %v2667, 2
    %v2669 = vmax.f32 %v2667, %v2668
    %v2670 = vrot.slane %v2669, 1
    %v2671 = vmax.f32 %v2669, %v2670
    %v2672 = vsel %vm2454, %v2085, -inf
    %v2673 = vrot.slane %v2672, 4
    %v2674 = vmax.f32 %v2672, %v2673
    %v2675 = vrot.slane %v2674, 2
    %v2676 = vmax.f32 %v2674, %v2675
    %v2677 = vrot.slane %v2676, 1
    %v2678 = vmax.f32 %v2676, %v2677
    %v2679 = vsel %vm2454, %v2093, -inf
    %v2680 = vrot.slane %v2679, 4
    %v2681 = vmax.f32 %v2679, %v2680
    %v2682 = vrot.slane %v2681, 2
    %v2683 = vmax.f32 %v2681, %v2682
    %v2684 = vrot.slane %v2683, 1
    %v2685 = vmax.f32 %v2683, %v2684
    %v2686 = vsel %vm2454, %v2101, -inf
    %v2687 = vrot.slane %v2686, 4
    %v2688 = vmax.f32 %v2686, %v2687
    %v2689 = vrot.slane %v2688, 2
    %v2690 = vmax.f32 %v2688, %v2689
    %v2691 = vrot.slane %v2690, 1
    %v2692 = vmax.f32 %v2690, %v2691
    %v2693 = vsel %vm2454, %v2100, -inf
    %v2694 = vrot.slane %v2693, 4
    %v2695 = vmax.f32 %v2693, %v2694
    %v2696 = vrot.slane %v2695, 2
    %v2697 = vmax.f32 %v2695, %v2696
    %v2698 = vrot.slane %v2697, 1
    %v2699 = vmax.f32 %v2697, %v2698
    %v2700 = vsel %vm2454, %v2102, -inf
    %v2701 = vrot.slane %v2700, 4
    %v2702 = vmax.f32 %v2700, %v2701
    %v2703 = vrot.slane %v2702, 2
    %v2704 = vmax.f32 %v2702, %v2703
    %v2705 = vrot.slane %v2704, 1
    %v2706 = vmax.f32 %v2704, %v2705
    %v2707 = vsel %vm2454, %v2110, -inf
    %v2708 = vrot.slane %v2707, 4
    %v2709 = vmax.f32 %v2707, %v2708
    %v2710 = vrot.slane %v2709, 2
    %v2711 = vmax.f32 %v2709, %v2710
    %v2712 = vrot.slane %v2711, 1
    %v2713 = vmax.f32 %v2711, %v2712
    %v2714 = vsel %vm2454, %v2118, -inf
    %v2715 = vrot.slane %v2714, 4
    %v2716 = vmax.f32 %v2714, %v2715
    %v2717 = vrot.slane %v2716, 2
    %v2718 = vmax.f32 %v2716, %v2717
    %v2719 = vrot.slane %v2718, 1
    %v2720 = vmax.f32 %v2718, %v2719
    %v2721 = vsel %vm2454, %v2117, -inf
    %v2722 = vrot.slane %v2721, 4
    %v2723 = vmax.f32 %v2721, %v2722
    %v2724 = vrot.slane %v2723, 2
    %v2725 = vmax.f32 %v2723, %v2724
    %v2726 = vrot.slane %v2725, 1
    %v2727 = vmax.f32 %v2725, %v2726
    %v2728 = vsel %vm2454, %v2119, -inf
    %v2729 = vrot.slane %v2728, 4
    %v2730 = vmax.f32 %v2728, %v2729
    %v2731 = vrot.slane %v2730, 2
    %v2732 = vmax.f32 %v2730, %v2731
    %v2733 = vrot.slane %v2732, 1
    %v2734 = vmax.f32 %v2732, %v2733
    %v2735 = vsel %vm2454, %v2127, -inf
    %v2736 = vrot.slane %v2735, 4
    %v2737 = vmax.f32 %v2735, %v2736
    %v2738 = vrot.slane %v2737, 2
    %v2739 = vmax.f32 %v2737, %v2738
    %v2740 = vrot.slane %v2739, 1
    %v2741 = vmax.f32 %v2739, %v2740
    %v2742 = vsel %vm2454, %v2135, -inf
    %v2743 = vrot.slane %v2742, 4
    %v2744 = vmax.f32 %v2742, %v2743
    %v2745 = vrot.slane %v2744, 2
    %v2746 = vmax.f32 %v2744, %v2745
    %v2747 = vrot.slane %v2746, 1
    %v2748 = vmax.f32 %v2746, %v2747
    %v2749 = vsel %vm2454, %v2134, -inf
    %v2750 = vrot.slane %v2749, 4
    %v2751 = vmax.f32 %v2749, %v2750
    %v2752 = vrot.slane %v2751, 2
    %v2753 = vmax.f32 %v2751, %v2752
    %v2754 = vrot.slane %v2753, 1
    %v2755 = vmax.f32 %v2753, %v2754
    %v2756 = vsel %vm2454, %v2136, -inf
    %v2757 = vrot.slane %v2756, 4
    %v2758 = vmax.f32 %v2756, %v2757
    %v2759 = vrot.slane %v2758, 2
    %v2760 = vmax.f32 %v2758, %v2759
    %v2761 = vrot.slane %v2760, 1
    %v2762 = vmax.f32 %v2760, %v2761
    %v2763 = vsel %vm2454, %v2144, -inf
    %v2764 = vrot.slane %v2763, 4
    %v2765 = vmax.f32 %v2763, %v2764
    %v2766 = vrot.slane %v2765, 2
    %v2767 = vmax.f32 %v2765, %v2766
    %v2768 = vrot.slane %v2767, 1
    %v2769 = vmax.f32 %v2767, %v2768
    %v2770 = vsel %vm2454, %v2152, -inf
    %v2771 = vrot.slane %v2770, 4
    %v2772 = vmax.f32 %v2770, %v2771
    %v2773 = vrot.slane %v2772, 2
    %v2774 = vmax.f32 %v2772, %v2773
    %v2775 = vrot.slane %v2774, 1
    %v2776 = vmax.f32 %v2774, %v2775
    %v2777 = vsel %vm2454, %v2151, -inf
    %v2778 = vrot.slane %v2777, 4
    %v2779 = vmax.f32 %v2777, %v2778
    %v2780 = vrot.slane %v2779, 2
    %v2781 = vmax.f32 %v2779, %v2780
    %v2782 = vrot.slane %v2781, 1
    %v2783 = vmax.f32 %v2781, %v2782
    %v2784 = vsel %vm2454, %v2153, -inf
    %v2785 = vrot.slane %v2784, 4
    %v2786 = vmax.f32 %v2784, %v2785
    %v2787 = vrot.slane %v2786, 2
    %v2788 = vmax.f32 %v2786, %v2787
    %v2789 = vrot.slane %v2788, 1
    %v2790 = vmax.f32 %v2788, %v2789
    %v2791 = vsel %vm2454, %v2161, -inf
    %v2792 = vrot.slane %v2791, 4
    %v2793 = vmax.f32 %v2791, %v2792
    %v2794 = vrot.slane %v2793, 2
    %v2795 = vmax.f32 %v2793, %v2794
    %v2796 = vrot.slane %v2795, 1
    %v2797 = vmax.f32 %v2795, %v2796
    %v2798 = vsel %vm2454, %v2169, -inf
    %v2799 = vrot.slane %v2798, 4
    %v2800 = vmax.f32 %v2798, %v2799
    %v2801 = vrot.slane %v2800, 2
    %v2802 = vmax.f32 %v2800, %v2801
    %v2803 = vrot.slane %v2802, 1
    %v2804 = vmax.f32 %v2802, %v2803
    %v2805 = vsel %vm2454, %v2168, -inf
    %v2806 = vrot.slane %v2805, 4
    %v2807 = vmax.f32 %v2805, %v2806
    %v2808 = vrot.slane %v2807, 2
    %v2809 = vmax.f32 %v2807, %v2808
    %v2810 = vrot.slane %v2809, 1
    %v2811 = vmax.f32 %v2809, %v2810
    %v2812 = vsel %vm2454, %v2170, -inf
    %v2813 = vrot.slane %v2812, 4
    %v2814 = vmax.f32 %v2812, %v2813
    %v2815 = vrot.slane %v2814, 2
    %v2816 = vmax.f32 %v2814, %v2815
    %v2817 = vrot.slane %v2816, 1
    %v2818 = vmax.f32 %v2816, %v2817
    %v2819 = vsel %vm2454, %v2178, -inf
    %v2820 = vrot.slane %v2819, 4
    %v2821 = vmax.f32 %v2819, %v2820
    %v2822 = vrot.slane %v2821, 2
    %v2823 = vmax.f32 %v2821, %v2822
    %v2824 = vrot.slane %v2823, 1
    %v2825 = vmax.f32 %v2823, %v2824
    %v2826 = vsel %vm2454, %v2186, -inf
    %v2827 = vrot.slane %v2826, 4
    %v2828 = vmax.f32 %v2826, %v2827
    %v2829 = vrot.slane %v2828, 2
    %v2830 = vmax.f32 %v2828, %v2829
    %v2831 = vrot.slane %v2830, 1
    %v2832 = vmax.f32 %v2830, %v2831
    %v2833 = vsel %vm2454, %v2185, -inf
    %v2834 = vrot.slane %v2833, 4
    %v2835 = vmax.f32 %v2833, %v2834
    %v2836 = vrot.slane %v2835, 2
    %v2837 = vmax.f32 %v2835, %v2836
    %v2838 = vrot.slane %v2837, 1
    %v2839 = vmax.f32 %v2837, %v2838
    %v2840 = vsel %vm2454, %v2187, -inf
    %v2841 = vrot.slane %v2840, 4
    %v2842 = vmax.f32 %v2840, %v2841
    %v2843 = vrot.slane %v2842, 2
    %v2844 = vmax.f32 %v2842, %v2843
    %v2845 = vrot.slane %v2844, 1
    %v2846 = vmax.f32 %v2844, %v2845
    %v2847 = vsel %vm2454, %v2195, -inf
    %v2848 = vrot.slane %v2847, 4
    %v2849 = vmax.f32 %v2847, %v2848
    %v2850 = vrot.slane %v2849, 2
    %v2851 = vmax.f32 %v2849, %v2850
    %v2852 = vrot.slane %v2851, 1
    %v2853 = vmax.f32 %v2851, %v2852
    %v2854 = vsel %vm2454, %v2203, -inf
    %v2855 = vrot.slane %v2854, 4
    %v2856 = vmax.f32 %v2854, %v2855
    %v2857 = vrot.slane %v2856, 2
    %v2858 = vmax.f32 %v2856, %v2857
    %v2859 = vrot.slane %v2858, 1
    %v2860 = vmax.f32 %v2858, %v2859
    %v2861 = vsel %vm2454, %v2202, -inf
    %v2862 = vrot.slane %v2861, 4
    %v2863 = vmax.f32 %v2861, %v2862
    %v2864 = vrot.slane %v2863, 2
    %v2865 = vmax.f32 %v2863, %v2864
    %v2866 = vrot.slane %v2865, 1
    %v2867 = vmax.f32 %v2865, %v2866
    %v2868 = vsel %vm2454, %v2204, -inf
    %v2869 = vrot.slane %v2868, 4
    %v2870 = vmax.f32 %v2868, %v2869
    %v2871 = vrot.slane %v2870, 2
    %v2872 = vmax.f32 %v2870, %v2871
    %v2873 = vrot.slane %v2872, 1
    %v2874 = vmax.f32 %v2872, %v2873
    %v2875 = vsel %vm2454, %v2212, -inf
    %v2876 = vrot.slane %v2875, 4
    %v2877 = vmax.f32 %v2875, %v2876
    %v2878 = vrot.slane %v2877, 2
    %v2879 = vmax.f32 %v2877, %v2878
    %v2880 = vrot.slane %v2879, 1
    %v2881 = vmax.f32 %v2879, %v2880
    %v2882 = vsel %vm2454, %v2220, -inf
    %v2883 = vrot.slane %v2882, 4
    %v2884 = vmax.f32 %v2882, %v2883
    %v2885 = vrot.slane %v2884, 2
    %v2886 = vmax.f32 %v2884, %v2885
    %v2887 = vrot.slane %v2886, 1
    %v2888 = vmax.f32 %v2886, %v2887
    %v2889 = vsel %vm2454, %v2219, -inf
    %v2890 = vrot.slane %v2889, 4
    %v2891 = vmax.f32 %v2889, %v2890
    %v2892 = vrot.slane %v2891, 2
    %v2893 = vmax.f32 %v2891, %v2892
    %v2894 = vrot.slane %v2893, 1
    %v2895 = vmax.f32 %v2893, %v2894
    %v2896 = vsel %vm2454, %v2221, -inf
    %v2897 = vrot.slane %v2896, 4
    %v2898 = vmax.f32 %v2896, %v2897
    %v2899 = vrot.slane %v2898, 2
    %v2900 = vmax.f32 %v2898, %v2899
    %v2901 = vrot.slane %v2900, 1
    %v2902 = vmax.f32 %v2900, %v2901
    %v2903 = vsel %vm2454, %v2229, -inf
    %v2904 = vrot.slane %v2903, 4
    %v2905 = vmax.f32 %v2903, %v2904
    %v2906 = vrot.slane %v2905, 2
    %v2907 = vmax.f32 %v2905, %v2906
    %v2908 = vrot.slane %v2907, 1
    %v2909 = vmax.f32 %v2907, %v2908
    %v2910 = vsel %vm2454, %v2237, -inf
    %v2911 = vrot.slane %v2910, 4
    %v2912 = vmax.f32 %v2910, %v2911
    %v2913 = vrot.slane %v2912, 2
    %v2914 = vmax.f32 %v2912, %v2913
    %v2915 = vrot.slane %v2914, 1
    %v2916 = vmax.f32 %v2914, %v2915
    %v2917 = vsel %vm2454, %v2236, -inf
    %v2918 = vrot.slane %v2917, 4
    %v2919 = vmax.f32 %v2917, %v2918
    %v2920 = vrot.slane %v2919, 2
    %v2921 = vmax.f32 %v2919, %v2920
    %v2922 = vrot.slane %v2921, 1
    %v2923 = vmax.f32 %v2921, %v2922
    %v2924 = vsel %vm2454, %v2238, -inf
    %v2925 = vrot.slane %v2924, 4
    %v2926 = vmax.f32 %v2924, %v2925
    %v2927 = vrot.slane %v2926, 2
    %v2928 = vmax.f32 %v2926, %v2927
    %v2929 = vrot.slane %v2928, 1
    %v2930 = vmax.f32 %v2928, %v2929
    %v2931 = vsel %vm2454, %v2246, -inf
    %v2932 = vrot.slane %v2931, 4
    %v2933 = vmax.f32 %v2931, %v2932
    %v2934 = vrot.slane %v2933, 2
    %v2935 = vmax.f32 %v2933, %v2934
    %v2936 = vrot.slane %v2935, 1
    %v2937 = vmax.f32 %v2935, %v2936
    %v2938 = vsel %vm2454, %v2254, -inf
    %v2939 = vrot.slane %v2938, 4
    %v2940 = vmax.f32 %v2938, %v2939
    %v2941 = vrot.slane %v2940, 2
    %v2942 = vmax.f32 %v2940, %v2941
    %v2943 = vrot.slane %v2942, 1
    %v2944 = vmax.f32 %v2942, %v2943
    %v2945 = vsel %vm2454, %v2253, -inf
    %v2946 = vrot.slane %v2945, 4
    %v2947 = vmax.f32 %v2945, %v2946
    %v2948 = vrot.slane %v2947, 2
    %v2949 = vmax.f32 %v2947, %v2948
    %v2950 = vrot.slane %v2949, 1
    %v2951 = vmax.f32 %v2949, %v2950
    %v2952 = vsel %vm2454, %v2255, -inf
    %v2953 = vrot.slane %v2952, 4
    %v2954 = vmax.f32 %v2952, %v2953
    %v2955 = vrot.slane %v2954, 2
    %v2956 = vmax.f32 %v2954, %v2955
    %v2957 = vrot.slane %v2956, 1
    %v2958 = vmax.f32 %v2956, %v2957
    %v2959 = vsel %vm2454, %v2263, -inf
    %v2960 = vrot.slane %v2959, 4
    %v2961 = vmax.f32 %v2959, %v2960
    %v2962 = vrot.slane %v2961, 2
    %v2963 = vmax.f32 %v2961, %v2962
    %v2964 = vrot.slane %v2963, 1
    %v2965 = vmax.f32 %v2963, %v2964
    %v2966 = vsel %vm2454, %v2271, -inf
    %v2967 = vrot.slane %v2966, 4
    %v2968 = vmax.f32 %v2966, %v2967
    %v2969 = vrot.slane %v2968, 2
    %v2970 = vmax.f32 %v2968, %v2969
    %v2971 = vrot.slane %v2970, 1
    %v2972 = vmax.f32 %v2970, %v2971
    %v2973 = vsel %vm2454, %v2270, -inf
    %v2974 = vrot.slane %v2973, 4
    %v2975 = vmax.f32 %v2973, %v2974
    %v2976 = vrot.slane %v2975, 2
    %v2977 = vmax.f32 %v2975, %v2976
    %v2978 = vrot.slane %v2977, 1
    %v2979 = vmax.f32 %v2977, %v2978
    %v2980 = vsel %vm2454, %v2272, -inf
    %v2981 = vrot.slane %v2980, 4
    %v2982 = vmax.f32 %v2980, %v2981
    %v2983 = vrot.slane %v2982, 2
    %v2984 = vmax.f32 %v2982, %v2983
    %v2985 = vrot.slane %v2984, 1
    %v2986 = vmax.f32 %v2984, %v2985
    %v2987 = vsel %vm2454, %v2280, -inf
    %v2988 = vrot.slane %v2987, 4
    %v2989 = vmax.f32 %v2987, %v2988
    %v2990 = vrot.slane %v2989, 2
    %v2991 = vmax.f32 %v2989, %v2990
    %v2992 = vrot.slane %v2991, 1
    %v2993 = vmax.f32 %v2991, %v2992
    %v2994 = vsel %vm2454, %v2288, -inf
    %v2995 = vrot.slane %v2994, 4
    %v2996 = vmax.f32 %v2994, %v2995
    %v2997 = vrot.slane %v2996, 2
    %v2998 = vmax.f32 %v2996, %v2997
    %v2999 = vrot.slane %v2998, 1
    %v3000 = vmax.f32 %v2998, %v2999
    %v3001 = vsel %vm2454, %v2287, -inf
    %v3002 = vrot.slane %v3001, 4
    %v3003 = vmax.f32 %v3001, %v3002
    %v3004 = vrot.slane %v3003, 2
    %v3005 = vmax.f32 %v3003, %v3004
    %v3006 = vrot.slane %v3005, 1
    %v3007 = vmax.f32 %v3005, %v3006
    %v3008 = vsel %vm2454, %v2289, -inf
    %v3009 = vrot.slane %v3008, 4
    %v3010 = vmax.f32 %v3008, %v3009
    %v3011 = vrot.slane %v3010, 2
    %v3012 = vmax.f32 %v3010, %v3011
    %v3013 = vrot.slane %v3012, 1
    %v3014 = vmax.f32 %v3012, %v3013
    %v3015 = vsel %vm2454, %v2297, -inf
    %v3016 = vrot.slane %v3015, 4
    %v3017 = vmax.f32 %v3015, %v3016
    %v3018 = vrot.slane %v3017, 2
    %v3019 = vmax.f32 %v3017, %v3018
    %v3020 = vrot.slane %v3019, 1
    %v3021 = vmax.f32 %v3019, %v3020
    %v3022 = vsel %vm2454, %v2305, -inf
    %v3023 = vrot.slane %v3022, 4
    %v3024 = vmax.f32 %v3022, %v3023
    %v3025 = vrot.slane %v3024, 2
    %v3026 = vmax.f32 %v3024, %v3025
    %v3027 = vrot.slane %v3026, 1
    %v3028 = vmax.f32 %v3026, %v3027
    %v3029 = vsel %vm2454, %v2304, -inf
    %v3030 = vrot.slane %v3029, 4
    %v3031 = vmax.f32 %v3029, %v3030
    %v3032 = vrot.slane %v3031, 2
    %v3033 = vmax.f32 %v3031, %v3032
    %v3034 = vrot.slane %v3033, 1
    %v3035 = vmax.f32 %v3033, %v3034
    %v3036 = vsel %vm2454, %v2306, -inf
    %v3037 = vrot.slane %v3036, 4
    %v3038 = vmax.f32 %v3036, %v3037
    %v3039 = vrot.slane %v3038, 2
    %v3040 = vmax.f32 %v3038, %v3039
    %v3041 = vrot.slane %v3040, 1
    %v3042 = vmax.f32 %v3040, %v3041
    %v3043 = vsel %vm2454, %v2314, -inf
    %v3044 = vrot.slane %v3043, 4
    %v3045 = vmax.f32 %v3043, %v3044
    %v3046 = vrot.slane %v3045, 2
    %v3047 = vmax.f32 %v3045, %v3046
    %v3048 = vrot.slane %v3047, 1
    %v3049 = vmax.f32 %v3047, %v3048
    %v3050 = vsel %vm2454, %v2322, -inf
    %v3051 = vrot.slane %v3050, 4
    %v3052 = vmax.f32 %v3050, %v3051
    %v3053 = vrot.slane %v3052, 2
    %v3054 = vmax.f32 %v3052, %v3053
    %v3055 = vrot.slane %v3054, 1
    %v3056 = vmax.f32 %v3054, %v3055
    %v3057 = vsel %vm2454, %v2321, -inf
    %v3058 = vrot.slane %v3057, 4
    %v3059 = vmax.f32 %v3057, %v3058
    %v3060 = vrot.slane %v3059, 2
    %v3061 = vmax.f32 %v3059, %v3060
    %v3062 = vrot.slane %v3061, 1
    %v3063 = vmax.f32 %v3061, %v3062
    %v3064 = vsel %vm2454, %v2323, -inf
    %v3065 = vrot.slane %v3064, 4
    %v3066 = vmax.f32 %v3064, %v3065
    %v3067 = vrot.slane %v3066, 2
    %v3068 = vmax.f32 %v3066, %v3067
    %v3069 = vrot.slane %v3068, 1
    %v3070 = vmax.f32 %v3068, %v3069
    %v3071 = vsel %vm2454, %v2331, -inf
    %v3072 = vrot.slane %v3071, 4
    %v3073 = vmax.f32 %v3071, %v3072
    %v3074 = vrot.slane %v3073, 2
    %v3075 = vmax.f32 %v3073, %v3074
    %v3076 = vrot.slane %v3075, 1
    %v3077 = vmax.f32 %v3075, %v3076
    %v3078 = vsel %vm2454, %v2339, -inf
    %v3079 = vrot.slane %v3078, 4
    %v3080 = vmax.f32 %v3078, %v3079
    %v3081 = vrot.slane %v3080, 2
    %v3082 = vmax.f32 %v3080, %v3081
    %v3083 = vrot.slane %v3082, 1
    %v3084 = vmax.f32 %v3082, %v3083
    %v3085 = vsel %vm2454, %v2338, -inf
    %v3086 = vrot.slane %v3085, 4
    %v3087 = vmax.f32 %v3085, %v3086
    %v3088 = vrot.slane %v3087, 2
    %v3089 = vmax.f32 %v3087, %v3088
    %v3090 = vrot.slane %v3089, 1
    %v3091 = vmax.f32 %v3089, %v3090
    %v3092 = vsel %vm2454, %v2340, -inf
    %v3093 = vrot.slane %v3092, 4
    %v3094 = vmax.f32 %v3092, %v3093
    %v3095 = vrot.slane %v3094, 2
    %v3096 = vmax.f32 %v3094, %v3095
    %v3097 = vrot.slane %v3096, 1
    %v3098 = vmax.f32 %v3096, %v3097
    %v3099 = vsel %vm2454, %v2348, -inf
    %v3100 = vrot.slane %v3099, 4
    %v3101 = vmax.f32 %v3099, %v3100
    %v3102 = vrot.slane %v3101, 2
    %v3103 = vmax.f32 %v3101, %v3102
    %v3104 = vrot.slane %v3103, 1
    %v3105 = vmax.f32 %v3103, %v3104
    %v3106 = vsel %vm2454, %v2356, -inf
    %v3107 = vrot.slane %v3106, 4
    %v3108 = vmax.f32 %v3106, %v3107
    %v3109 = vrot.slane %v3108, 2
    %v3110 = vmax.f32 %v3108, %v3109
    %v3111 = vrot.slane %v3110, 1
    %v3112 = vmax.f32 %v3110, %v3111
    %v3113 = vsel %vm2454, %v2355, -inf
    %v3114 = vrot.slane %v3113, 4
    %v3115 = vmax.f32 %v3113, %v3114
    %v3116 = vrot.slane %v3115, 2
    %v3117 = vmax.f32 %v3115, %v3116
    %v3118 = vrot.slane %v3117, 1
    %v3119 = vmax.f32 %v3117, %v3118
    %v3120 = vsel %vm2454, %v2357, -inf
    %v3121 = vrot.slane %v3120, 4
    %v3122 = vmax.f32 %v3120, %v3121
    %v3123 = vrot.slane %v3122, 2
    %v3124 = vmax.f32 %v3122, %v3123
    %v3125 = vrot.slane %v3124, 1
    %v3126 = vmax.f32 %v3124, %v3125
    %v3127 = vmax.f32 %v2461, 0.0
    %v3128 = vmax.f32 %v2468, 0.0
    %v3129 = vmax.f32 %v2475, 0.0
    %v3130 = vmax.f32 %v2482, 0.0
    %v3131 = vmax.f32 %v2489, 0.0
    %v3132 = vmax.f32 %v2496, 0.0
    %v3133 = vmax.f32 %v2503, 0.0
    %v3134 = vmax.f32 %v2510, 0.0
    %v3135 = vmax.f32 %v2517, 0.0
    %v3136 = vmax.f32 %v2524, 0.0
    %v3137 = vmax.f32 %v2531, 0.0
    %v3138 = vmax.f32 %v2538, 0.0
    %v3139 = vmax.f32 %v2545, 0.0
    %v3140 = vmax.f32 %v2552, 0.0
    %v3141 = vmax.f32 %v2559, 0.0
    %v3142 = vmax.f32 %v2566, 0.0
    %v3143 = vmax.f32 %v2573, 0.0
    %v3144 = vmax.f32 %v2580, 0.0
    %v3145 = vmax.f32 %v2587, 0.0
    %v3146 = vmax.f32 %v2594, 0.0
    %v3147 = vmax.f32 %v2601, 0.0
    %v3148 = vmax.f32 %v2608, 0.0
    %v3149 = vmax.f32 %v2615, 0.0
    %v3150 = vmax.f32 %v2622, 0.0
    %v3151 = vmax.f32 %v2629, 0.0
    %v3152 = vmax.f32 %v2636, 0.0
    %v3153 = vmax.f32 %v2643, 0.0
    %v3154 = vmax.f32 %v2650, 0.0
    %v3155 = vmax.f32 %v2657, 0.0
    %v3156 = vmax.f32 %v2664, 0.0
    %v3157 = vmax.f32 %v2671, 0.0
    %v3158 = vmax.f32 %v2678, 0.0
    %v3159 = vmax.f32 %v2685, 0.0
    %v3160 = vmax.f32 %v2692, 0.0
    %v3161 = vmax.f32 %v2699, 0.0
    %v3162 = vmax.f32 %v2706, 0.0
    %v3163 = vmax.f32 %v2713, 0.0
    %v3164 = vmax.f32 %v2720, 0.0
    %v3165 = vmax.f32 %v2727, 0.0
    %v3166 = vmax.f32 %v2734, 0.0
    %v3167 = vmax.f32 %v2741, 0.0
    %v3168 = vmax.f32 %v2748, 0.0
    %v3169 = vmax.f32 %v2755, 0.0
    %v3170 = vmax.f32 %v2762, 0.0
    %v3171 = vmax.f32 %v2769, 0.0
    %v3172 = vmax.f32 %v2776, 0.0
    %v3173 = vmax.f32 %v2783, 0.0
    %v3174 = vmax.f32 %v2790, 0.0
    %v3175 = vmax.f32 %v2797, 0.0
    %v3176 = vmax.f32 %v2804, 0.0
    %v3177 = vmax.f32 %v2811, 0.0
    %v3178 = vmax.f32 %v2818, 0.0
    %v3179 = vmax.f32 %v2825, 0.0
    %v3180 = vmax.f32 %v2832, 0.0
    %v3181 = vmax.f32 %v2839, 0.0
    %v3182 = vmax.f32 %v2846, 0.0
    %v3183 = vmax.f32 %v2853, 0.0
    %v3184 = vmax.f32 %v2860, 0.0
    %v3185 = vmax.f32 %v2867, 0.0
    %v3186 = vmax.f32 %v2874, 0.0
    %v3187 = vmax.f32 %v2881, 0.0
    %v3188 = vmax.f32 %v2888, 0.0
    %v3189 = vmax.f32 %v2895, 0.0
    %v3190 = vmax.f32 %v2902, 0.0
    %v3191 = vmax.f32 %v2909, 0.0
    %v3192 = vmax.f32 %v2916, 0.0
    %v3193 = vmax.f32 %v2923, 0.0
    %v3194 = vmax.f32 %v2930, 0.0
    %v3195 = vmax.f32 %v2937, 0.0
    %v3196 = vmax.f32 %v2944, 0.0
    %v3197 = vmax.f32 %v2951, 0.0
    %v3198 = vmax.f32 %v2958, 0.0
    %v3199 = vmax.f32 %v2965, 0.0
    %v3200 = vmax.f32 %v2972, 0.0
    %v3201 = vmax.f32 %v2979, 0.0
    %v3202 = vmax.f32 %v2986, 0.0
    %v3203 = vmax.f32 %v2993, 0.0
    %v3204 = vmax.f32 %v3000, 0.0
    %v3205 = vmax.f32 %v3007, 0.0
    %v3206 = vmax.f32 %v3014, 0.0
    %v3207 = vmax.f32 %v3021, 0.0
    %v3208 = vmax.f32 %v3028, 0.0
    %v3209 = vmax.f32 %v3035, 0.0
    %v3210 = vmax.f32 %v3042, 0.0
    %v3211 = vmax.f32 %v3049, 0.0
    %v3212 = vmax.f32 %v3056, 0.0
    %v3213 = vmax.f32 %v3063, 0.0
    %v3214 = vmax.f32 %v3070, 0.0
    %v3215 = vmax.f32 %v3077, 0.0
    %v3216 = vmax.f32 %v3084, 0.0
    %v3217 = vmax.f32 %v3091, 0.0
    %v3218 = vmax.f32 %v3098, 0.0
    %v3219 = vmax.f32 %v3105, 0.0
    %v3220 = vmax.f32 %v3112, 0.0
    %v3221 = vmax.f32 %v3119, 0.0
    %v3222 = vmax.f32 %v3126, 0.0
    %v3223 = vld [vmem:[%s3] sm:$0xff]
    %v3224 = vld [vmem:[%s3 + $0x8] sm:$0xff]
    %v3225 = vld [vmem:[%s3 + $0x10] sm:$0xff]
    %v3226 = vld [vmem:[%s3 + $0x18] sm:$0xff]
    %v3227 = vld [vmem:[%s3 + $0x20] sm:$0xff]
    %v3228 = vld [vmem:[%s3 + $0x28] sm:$0xff]
    %v3229 = vld [vmem:[%s3 + $0x30] sm:$0xff]
    %v3230 = vld [vmem:[%s3 + $0x38] sm:$0xff]
    %v3231 = vld [vmem:[%s3 + $0x40] sm:$0xff]
    %v3232 = vld [vmem:[%s3 + $0x48] sm:$0xff]
    %v3233 = vld [vmem:[%s3 + $0x50] sm:$0xff]
    %v3234 = vld [vmem:[%s3 + $0x58] sm:$0xff]
    %v3235 = vld [vmem:[%s3 + $0x60] sm:$0xff]
    %v3236 = vld [vmem:[%s3 + $0x68] sm:$0xff]
    %v3237 = vld [vmem:[%s3 + $0x70] sm:$0xff]
    %v3238 = vld [vmem:[%s3 + $0x78] sm:$0xff]
    %v3239 = vld [vmem:[%s3 + $0x80] sm:$0xff]
    %v3240 = vld [vmem:[%s3 + $0x88] sm:$0xff]
    %v3241 = vld [vmem:[%s3 + $0x90] sm:$0xff]
    %v3242 = vld [vmem:[%s3 + $0x98] sm:$0xff]
    %v3243 = vld [vmem:[%s3 + $0xa0] sm:$0xff]
    %v3244 = vld [vmem:[%s3 + $0xa8] sm:$0xff]
    %v3245 = vld [vmem:[%s3 + $0xb0] sm:$0xff]
    %v3246 = vld [vmem:[%s3 + $0xb8] sm:$0xff]
    %v3247 = vld [vmem:[%s3 + $0xc0] sm:$0xff]
    %v3248 = vld [vmem:[%s3 + $0xc8] sm:$0xff]
    %v3249 = vld [vmem:[%s3 + $0xd0] sm:$0xff]
    %v3250 = vld [vmem:[%s3 + $0xd8] sm:$0xff]
    %v3251 = vld [vmem:[%s3 + $0xe0] sm:$0xff]
    %v3252 = vld [vmem:[%s3 + $0xe8] sm:$0xff]
    %v3253 = vld [vmem:[%s3 + $0xf0] sm:$0xff]
    %v3254 = vld [vmem:[%s3 + $0xf8] sm:$0xff]
    %s3255 = scalar_lea.vmem %s3, 256
    %v3256 = vld [vmem:[%s3255] sm:$0xff]
    %v3257 = vld [vmem:[%s3255 + $0x8] sm:$0xff]
    %v3258 = vld [vmem:[%s3255 + $0x10] sm:$0xff]
    %v3259 = vld [vmem:[%s3255 + $0x18] sm:$0xff]
    %v3260 = vld [vmem:[%s3255 + $0x20] sm:$0xff]
    %v3261 = vld [vmem:[%s3255 + $0x28] sm:$0xff]
    %v3262 = vld [vmem:[%s3255 + $0x30] sm:$0xff]
    %v3263 = vld [vmem:[%s3255 + $0x38] sm:$0xff]
    %v3264 = vld [vmem:[%s3255 + $0x40] sm:$0xff]
    %v3265 = vld [vmem:[%s3255 + $0x48] sm:$0xff]
    %v3266 = vld [vmem:[%s3255 + $0x50] sm:$0xff]
    %v3267 = vld [vmem:[%s3255 + $0x58] sm:$0xff]
    %v3268 = vld [vmem:[%s3255 + $0x60] sm:$0xff]
    %v3269 = vld [vmem:[%s3255 + $0x68] sm:$0xff]
    %v3270 = vld [vmem:[%s3255 + $0x70] sm:$0xff]
    %v3271 = vld [vmem:[%s3255 + $0x78] sm:$0xff]
    %v3272 = vld [vmem:[%s3255 + $0x80] sm:$0xff]
    %v3273 = vld [vmem:[%s3255 + $0x88] sm:$0xff]
    %v3274 = vld [vmem:[%s3255 + $0x90] sm:$0xff]
    %v3275 = vld [vmem:[%s3255 + $0x98] sm:$0xff]
    %v3276 = vld [vmem:[%s3255 + $0xa0] sm:$0xff]
    %v3277 = vld [vmem:[%s3255 + $0xa8] sm:$0xff]
    %v3278 = vld [vmem:[%s3255 + $0xb0] sm:$0xff]
    %v3279 = vld [vmem:[%s3255 + $0xb8] sm:$0xff]
    %v3280 = vld [vmem:[%s3255 + $0xc0] sm:$0xff]
    %v3281 = vld [vmem:[%s3255 + $0xc8] sm:$0xff]
    %v3282 = vld [vmem:[%s3255 + $0xd0] sm:$0xff]
    %v3283 = vld [vmem:[%s3255 + $0xd8] sm:$0xff]
    %v3284 = vld [vmem:[%s3255 + $0xe0] sm:$0xff]
    %v3285 = vld [vmem:[%s3255 + $0xe8] sm:$0xff]
    %v3286 = vld [vmem:[%s3255 + $0xf0] sm:$0xff]
    %v3287 = vld [vmem:[%s3255 + $0xf8] sm:$0xff]
    %vm3352 = vcmask 1041409
    %v3353 = vsel %vm3352, %v3129, %v3128
    %vm3354 = vcmask 1042434
    %v3355 = vsel %vm3354, %v3130, %v3353
    %vm3356 = vcmask 1043459
    %v3357 = vsel %vm3356, %v3131, %v3355
    %vm3358 = vcmask 1044484
    %v3359 = vsel %vm3358, %v3132, %v3357
    %vm3360 = vcmask 1045509
    %v3361 = vsel %vm3360, %v3133, %v3359
    %vm3362 = vcmask 1046534
    %v3363 = vsel %vm3362, %v3134, %v3361
    %vm3364 = vcmask 1047559
    %v3365 = vsel %vm3364, %v3135, %v3363
    %v3366 = vsel %vm3352, %v3141, %v3140
    %v3367 = vsel %vm3354, %v3142, %v3366
    %v3368 = vsel %vm3356, %v3143, %v3367
    %v3369 = vsel %vm3358, %v3144, %v3368
    %v3370 = vsel %vm3360, %v3145, %v3369
    %v3371 = vsel %vm3362, %v3146, %v3370
    %v3372 = vsel %vm3364, %v3147, %v3371
    %v3373 = vsel %vm3352, %v3153, %v3152
    %v3374 = vsel %vm3354, %v3154, %v3373
    %v3375 = vsel %vm3356, %v3155, %v3374
    %v3376 = vsel %vm3358, %v3156, %v3375
    %v3377 = vsel %vm3360, %v3157, %v3376
    %v3378 = vsel %vm3362, %v3158, %v3377
    %v3379 = vsel %vm3364, %v3159, %v3378
    %v3380 = vsel %vm3352, %v3165, %v3164
    %v3381 = vsel %vm3354, %v3166, %v3380
    %v3382 = vsel %vm3356, %v3167, %v3381
    %v3383 = vsel %vm3358, %v3168, %v3382
    %v3384 = vsel %vm3360, %v3169, %v3383
    %v3385 = vsel %vm3362, %v3170, %v3384
    %v3386 = vsel %vm3364, %v3171, %v3385
    %v3387 = vsel %vm3352, %v3177, %v3176
    %v3388 = vsel %vm3354, %v3178, %v3387
    %v3389 = vsel %vm3356, %v3179, %v3388
    %v3390 = vsel %vm3358, %v3180, %v3389
    %v3391 = vsel %vm3360, %v3181, %v3390
    %v3392 = vsel %vm3362, %v3182, %v3391
    %v3393 = vsel %vm3364, %v3183, %v3392
    %v3394 = vsel %vm3352, %v3189, %v3188
    %v3395 = vsel %vm3354, %v3190, %v3394
    %v3396 = vsel %vm3356, %v3191, %v3395
    %v3397 = vsel %vm3358, %v3192, %v3396
    %v3398 = vsel %vm3360, %v3193, %v3397
    %v3399 = vsel %vm3362, %v3194, %v3398
    %v3400 = vsel %vm3364, %v3195, %v3399
    %v3401 = vsel %vm3352, %v3201, %v3200
    %v3402 = vsel %vm3354, %v3202, %v3401
    %v3403 = vsel %vm3356, %v3203, %v3402
    %v3404 = vsel %vm3358, %v3204, %v3403
    %v3405 = vsel %vm3360, %v3205, %v3404
    %v3406 = vsel %vm3362, %v3206, %v3405
    %v3407 = vsel %vm3364, %v3207, %v3406
    %v3408 = vsel %vm3352, %v3213, %v3212
    %v3409 = vsel %vm3354, %v3214, %v3408
    %v3410 = vsel %vm3356, %v3215, %v3409
    %v3411 = vsel %vm3358, %v3216, %v3410
    %v3412 = vsel %vm3360, %v3217, %v3411
    %v3413 = vsel %vm3362, %v3218, %v3412
    %v3414 = vsel %vm3364, %v3219, %v3413
    %3423 = vmatprep.subr.mxu0 %v3287
    %3424 = vmatpush1.msra.mxu0 %v3286
    %3425 = vmatprep.subr.mxu0 %v3285
    %3426 = vmatpush1.msra.mxu0 %v3284
    %3427 = vmatprep.subr.mxu0 %v3283
    %3428 = vmatpush1.msra.mxu0 %v3282
    %3429 = vmatprep.subr.mxu0 %v3281
    %3430 = vmatpush1.msra.mxu0 %v3280
    %3431 = vmatprep.subr.mxu0 %v3279
    %3432 = vmatpush1.msra.mxu0 %v3278
    %3433 = vmatprep.subr.mxu0 %v3277
    %3434 = vmatpush1.msra.mxu0 %v3276
    %3435 = vmatprep.subr.mxu0 %v3275
    %3436 = vmatpush1.msra.mxu0 %v3274
    %3437 = vmatprep.subr.mxu0 %v3273
    %3438 = vmatpush1.msra.mxu0 %v3272
    %3439 = vmatprep.subr.mxu0 %v3271
    %3440 = vmatpush1.msra.mxu0 %v3270
    %3441 = vmatprep.subr.mxu0 %v3269
    %3442 = vmatpush1.msra.mxu0 %v3268
    %3443 = vmatprep.subr.mxu0 %v3267
    %3444 = vmatpush1.msra.mxu0 %v3266
    %3445 = vmatprep.subr.mxu0 %v3265
    %3446 = vmatpush1.msra.mxu0 %v3264
    %3447 = vmatprep.subr.mxu0 %v3263
    %3448 = vmatpush1.msra.mxu0 %v3262
    %3449 = vmatprep.subr.mxu0 %v3261
    %3450 = vmatpush1.msra.mxu0 %v3260
    %3451 = vmatprep.subr.mxu0 %v3259
    %3452 = vmatpush1.msra.mxu0 %v3258
    %3453 = vmatprep.subr.mxu0 %v3257
    %3454 = vmatpush1.msra.mxu0 %v3256
    %3455 = vmatprep.subr.mxu0 0.0
    %3456 = vmatpush2.msra.mxu0 0.0
    %3457 = vmatprep.subr.mxu0 0.0
    %3458 = vmatpush2.msra.mxu0 0.0
    %3459 = vmatprep.subr.mxu0 0.0
    %3460 = vmatpush2.msra.mxu0 0.0
    %3461 = vmatprep.subr.mxu0 0.0
    %3462 = vmatpush2.msra.mxu0 0.0
    %3463 = vmatprep.subr.mxu0 0.0
    %3464 = vmatpush2.msra.mxu0 0.0
    %3465 = vmatprep.subr.mxu0 0.0
    %3466 = vmatpush2.msra.mxu0 0.0
    %3467 = vmatprep.subr.mxu0 0.0
    %3468 = vmatpush2.msra.mxu0 0.0
    %3469 = vmatprep.subr.mxu0 0.0
    %3470 = vmatpush2.msra.mxu0 0.0
    %3471 = vmatprep.subr.mxu0 0.0
    %3472 = vmatpush2.msra.mxu0 0.0
    %3473 = vmatprep.subr.mxu0 0.0
    %3474 = vmatpush2.msra.mxu0 0.0
    %3475 = vmatprep.subr.mxu0 0.0
    %3476 = vmatpush2.msra.mxu0 0.0
    %3477 = vmatprep.subr.mxu0 0.0
    %3478 = vmatpush2.msra.mxu0 0.0
    %3479 = vmatprep.subr.mxu0 0.0
    %3480 = vmatpush2.msra.mxu0 0.0
    %3481 = vmatprep.subr.mxu0 0.0
    %3482 = vmatpush2.msra.mxu0 0.0
    %3483 = vmatprep.subr.mxu0 0.0
    %3484 = vmatpush2.msra.mxu0 0.0
    %3485 = vmatprep.subr.mxu0 0.0
    %3486 = vmatpush2.msra.mxu0 0.0
    %3487 = vmatprep.mubr.f32.mxu0 0.0
    %3488 = vmatmul.mubr.f32.gmra.mxu0 %v3365
    %v3489 = vpop.f32.mrf.mxu0
    %v3490 = vadd.f32 0.0, %v3489
    %v3491 = vpop.f32.mrf.mxu0
    %v3492 = vadd.f32 0.0, %v3491
    %3493 = vmatprep.mubr.f32.mxu0 0.0
    %3494 = vmatmul.mubr.f32.gmra.mxu0 %v3372
    %v3495 = vpop.f32.mrf.mxu0
    %v3496 = vadd.f32 0.0, %v3495
    %v3497 = vpop.f32.mrf.mxu0
    %v3498 = vadd.f32 0.0, %v3497
    %3499 = vmatprep.mubr.f32.mxu0 0.0
    %3500 = vmatmul.mubr.f32.gmra.mxu0 %v3379
    %v3501 = vpop.f32.mrf.mxu0
    %v3502 = vadd.f32 0.0, %v3501
    %v3503 = vpop.f32.mrf.mxu0
    %v3504 = vadd.f32 0.0, %v3503
    %3505 = vmatprep.mubr.f32.mxu0 0.0
    %3506 = vmatmul.mubr.f32.gmra.mxu0 %v3386
    %v3507 = vpop.f32.mrf.mxu0
    %v3508 = vadd.f32 0.0, %v3507
    %v3509 = vpop.f32.mrf.mxu0
    %v3510 = vadd.f32 0.0, %v3509
    %3511 = vmatprep.mubr.f32.mxu0 0.0
    %3512 = vmatmul.mubr.f32.gmra.mxu0 %v3393
    %v3513 = vpop.f32.mrf.mxu0
    %v3514 = vadd.f32 0.0, %v3513
    %v3515 = vpop.f32.mrf.mxu0
    %v3516 = vadd.f32 0.0, %v3515
    %3517 = vmatprep.mubr.f32.mxu0 0.0
    %3518 = vmatmul.mubr.f32.gmra.mxu0 %v3400
    %v3519 = vpop.f32.mrf.mxu0
    %v3520 = vadd.f32 0.0, %v3519
    %v3521 = vpop.f32.mrf.mxu0
    %v3522 = vadd.f32 0.0, %v3521
    %3523 = vmatprep.mubr.f32.mxu0 0.0
    %3524 = vmatmul.mubr.f32.gmra.mxu0 %v3407
    %v3525 = vpop.f32.mrf.mxu0
    %v3526 = vadd.f32 0.0, %v3525
    %v3527 = vpop.f32.mrf.mxu0
    %v3528 = vadd.f32 0.0, %v3527
    %3529 = vmatprep.mubr.f32.mxu0 0.0
    %3530 = vmatmul.mubr.f32.gmra.mxu0 %v3414
    %v3531 = vpop.f32.mrf.mxu0
    %v3532 = vadd.f32 0.0, %v3531
    %v3533 = vpop.f32.mrf.mxu0
    %v3534 = vadd.f32 0.0, %v3533
    %3535 = vdwg.mxu0
    %v3544 = vsel %vm3352, %v3128, %v3127
    %v3545 = vsel %vm3354, %v3129, %v3544
    %v3546 = vsel %vm3356, %v3130, %v3545
    %v3547 = vsel %vm3358, %v3131, %v3546
    %v3548 = vsel %vm3360, %v3132, %v3547
    %v3549 = vsel %vm3362, %v3133, %v3548
    %v3550 = vsel %vm3364, %v3134, %v3549
    %v3551 = vsel %vm3352, %v3140, %v3139
    %v3552 = vsel %vm3354, %v3141, %v3551
    %v3553 = vsel %vm3356, %v3142, %v3552
    %v3554 = vsel %vm3358, %v3143, %v3553
    %v3555 = vsel %vm3360, %v3144, %v3554
    %v3556 = vsel %vm3362, %v3145, %v3555
    %v3557 = vsel %vm3364, %v3146, %v3556
    %v3558 = vsel %vm3352, %v3152, %v3151
    %v3559 = vsel %vm3354, %v3153, %v3558
    %v3560 = vsel %vm3356, %v3154, %v3559
    %v3561 = vsel %vm3358, %v3155, %v3560
    %v3562 = vsel %vm3360, %v3156, %v3561
    %v3563 = vsel %vm3362, %v3157, %v3562
    %v3564 = vsel %vm3364, %v3158, %v3563
    %v3565 = vsel %vm3352, %v3164, %v3163
    %v3566 = vsel %vm3354, %v3165, %v3565
    %v3567 = vsel %vm3356, %v3166, %v3566
    %v3568 = vsel %vm3358, %v3167, %v3567
    %v3569 = vsel %vm3360, %v3168, %v3568
    %v3570 = vsel %vm3362, %v3169, %v3569
    %v3571 = vsel %vm3364, %v3170, %v3570
    %v3572 = vsel %vm3352, %v3176, %v3175
    %v3573 = vsel %vm3354, %v3177, %v3572
    %v3574 = vsel %vm3356, %v3178, %v3573
    %v3575 = vsel %vm3358, %v3179, %v3574
    %v3576 = vsel %vm3360, %v3180, %v3575
    %v3577 = vsel %vm3362, %v3181, %v3576
    %v3578 = vsel %vm3364, %v3182, %v3577
    %v3579 = vsel %vm3352, %v3188, %v3187
    %v3580 = vsel %vm3354, %v3189, %v3579
    %v3581 = vsel %vm3356, %v3190, %v3580
    %v3582 = vsel %vm3358, %v3191, %v3581
    %v3583 = vsel %vm3360, %v3192, %v3582
    %v3584 = vsel %vm3362, %v3193, %v3583
    %v3585 = vsel %vm3364, %v3194, %v3584
    %v3586 = vsel %vm3352, %v3200, %v3199
    %v3587 = vsel %vm3354, %v3201, %v3586
    %v3588 = vsel %vm3356, %v3202, %v3587
    %v3589 = vsel %vm3358, %v3203, %v3588
    %v3590 = vsel %vm3360, %v3204, %v3589
    %v3591 = vsel %vm3362, %v3205, %v3590
    %v3592 = vsel %vm3364, %v3206, %v3591
    %v3593 = vsel %vm3352, %v3212, %v3211
    %v3594 = vsel %vm3354, %v3213, %v3593
    %v3595 = vsel %vm3356, %v3214, %v3594
    %v3596 = vsel %vm3358, %v3215, %v3595
    %v3597 = vsel %vm3360, %v3216, %v3596
    %v3598 = vsel %vm3362, %v3217, %v3597
    %v3599 = vsel %vm3364, %v3218, %v3598
    %3608 = vmatprep.subr.mxu0 %v3254
    %3609 = vmatpush1.msra.mxu0 %v3253
    %3610 = vmatprep.subr.mxu0 %v3252
    %3611 = vmatpush1.msra.mxu0 %v3251
    %3612 = vmatprep.subr.mxu0 %v3250
    %3613 = vmatpush1.msra.mxu0 %v3249
    %3614 = vmatprep.subr.mxu0 %v3248
    %3615 = vmatpush1.msra.mxu0 %v3247
    %3616 = vmatprep.subr.mxu0 %v3246
    %3617 = vmatpush1.msra.mxu0 %v3245
    %3618 = vmatprep.subr.mxu0 %v3244
    %3619 = vmatpush1.msra.mxu0 %v3243
    %3620 = vmatprep.subr.mxu0 %v3242
    %3621 = vmatpush1.msra.mxu0 %v3241
    %3622 = vmatprep.subr.mxu0 %v3240
    %3623 = vmatpush1.msra.mxu0 %v3239
    %3624 = vmatprep.subr.mxu0 %v3238
    %3625 = vmatpush1.msra.mxu0 %v3237
    %3626 = vmatprep.subr.mxu0 %v3236
    %3627 = vmatpush1.msra.mxu0 %v3235
    %3628 = vmatprep.subr.mxu0 %v3234
    %3629 = vmatpush1.msra.mxu0 %v3233
    %3630 = vmatprep.subr.mxu0 %v3232
    %3631 = vmatpush1.msra.mxu0 %v3231
    %3632 = vmatprep.subr.mxu0 %v3230
    %3633 = vmatpush1.msra.mxu0 %v3229
    %3634 = vmatprep.subr.mxu0 %v3228
    %3635 = vmatpush1.msra.mxu0 %v3227
    %3636 = vmatprep.subr.mxu0 %v3226
    %3637 = vmatpush1.msra.mxu0 %v3225
    %3638 = vmatprep.subr.mxu0 %v3224
    %3639 = vmatpush1.msra.mxu0 %v3223
    %3640 = vmatprep.subr.mxu0 0.0
    %3641 = vmatpush2.msra.mxu0 0.0
    %3642 = vmatprep.subr.mxu0 0.0
    %3643 = vmatpush2.msra.mxu0 0.0
    %3644 = vmatprep.subr.mxu0 0.0
    %3645 = vmatpush2.msra.mxu0 0.0
    %3646 = vmatprep.subr.mxu0 0.0
    %3647 = vmatpush2.msra.mxu0 0.0
    %3648 = vmatprep.subr.mxu0 0.0
    %3649 = vmatpush2.msra.mxu0 0.0
    %3650 = vmatprep.subr.mxu0 0.0
    %3651 = vmatpush2.msra.mxu0 0.0
    %3652 = vmatprep.subr.mxu0 0.0
    %3653 = vmatpush2.msra.mxu0 0.0
    %3654 = vmatprep.subr.mxu0 0.0
    %3655 = vmatpush2.msra.mxu0 0.0
    %3656 = vmatprep.subr.mxu0 0.0
    %3657 = vmatpush2.msra.mxu0 0.0
    %3658 = vmatprep.subr.mxu0 0.0
    %3659 = vmatpush2.msra.mxu0 0.0
    %3660 = vmatprep.subr.mxu0 0.0
    %3661 = vmatpush2.msra.mxu0 0.0
    %3662 = vmatprep.subr.mxu0 0.0
    %3663 = vmatpush2.msra.mxu0 0.0
    %3664 = vmatprep.subr.mxu0 0.0
    %3665 = vmatpush2.msra.mxu0 0.0
    %3666 = vmatprep.subr.mxu0 0.0
    %3667 = vmatpush2.msra.mxu0 0.0
    %3668 = vmatprep.subr.mxu0 0.0
    %3669 = vmatpush2.msra.mxu0 0.0
    %3670 = vmatprep.subr.mxu0 0.0
    %3671 = vmatpush2.msra.mxu0 0.0
    %3672 = vmatprep.mubr.f32.mxu0 0.0
    %3673 = vmatmul.mubr.f32.gmra.mxu0 %v3550
    %v3674 = vpop.f32.mrf.mxu0
    %v3675 = vadd.f32 %v3490, %v3674
    %v3676 = vpop.f32.mrf.mxu0
    %v3677 = vadd.f32 %v3492, %v3676
    %3678 = vmatprep.mubr.f32.mxu0 0.0
    %3679 = vmatmul.mubr.f32.gmra.mxu0 %v3557
    %v3680 = vpop.f32.mrf.mxu0
    %v3681 = vadd.f32 %v3496, %v3680
    %v3682 = vpop.f32.mrf.mxu0
    %v3683 = vadd.f32 %v3498, %v3682
    %3684 = vmatprep.mubr.f32.mxu0 0.0
    %3685 = vmatmul.mubr.f32.gmra.mxu0 %v3564
    %v3686 = vpop.f32.mrf.mxu0
    %v3687 = vadd.f32 %v3502, %v3686
    %v3688 = vpop.f32.mrf.mxu0
    %v3689 = vadd.f32 %v3504, %v3688
    %3690 = vmatprep.mubr.f32.mxu0 0.0
    %3691 = vmatmul.mubr.f32.gmra.mxu0 %v3571
    %v3692 = vpop.f32.mrf.mxu0
    %v3693 = vadd.f32 %v3508, %v3692
    %v3694 = vpop.f32.mrf.mxu0
    %v3695 = vadd.f32 %v3510, %v3694
    %3696 = vmatprep.mubr.f32.mxu0 0.0
    %3697 = vmatmul.mubr.f32.gmra.mxu0 %v3578
    %v3698 = vpop.f32.mrf.mxu0
    %v3699 = vadd.f32 %v3514, %v3698
    %v3700 = vpop.f32.mrf.mxu0
    %v3701 = vadd.f32 %v3516, %v3700
    %3702 = vmatprep.mubr.f32.mxu0 0.0
    %3703 = vmatmul.mubr.f32.gmra.mxu0 %v3585
    %v3704 = vpop.f32.mrf.mxu0
    %v3705 = vadd.f32 %v3520, %v3704
    %v3706 = vpop.f32.mrf.mxu0
    %v3707 = vadd.f32 %v3522, %v3706
    %3708 = vmatprep.mubr.f32.mxu0 0.0
    %3709 = vmatmul.mubr.f32.gmra.mxu0 %v3592
    %v3710 = vpop.f32.mrf.mxu0
    %v3711 = vadd.f32 %v3526, %v3710
    %v3712 = vpop.f32.mrf.mxu0
    %v3713 = vadd.f32 %v3528, %v3712
    %3714 = vmatprep.mubr.f32.mxu0 0.0
    %3715 = vmatmul.mubr.f32.gmra.mxu0 %v3599
    %v3716 = vpop.f32.mrf.mxu0
    %v3717 = vadd.f32 %v3532, %v3716
    %v3718 = vpop.f32.mrf.mxu0
    %v3719 = vadd.f32 %v3534, %v3718
    %3720 = vdwg.mxu0
    %s3721 = scalar_lea.vmem %s3, 512
    %v3722 = vld [vmem:[%s3721] sm:$0xff]
    %v3723 = vld [vmem:[%s3721 + $0x8] sm:$0xff]
    %v3724 = vld [vmem:[%s3721 + $0x10] sm:$0xff]
    %v3725 = vld [vmem:[%s3721 + $0x18] sm:$0xff]
    %v3726 = vld [vmem:[%s3721 + $0x20] sm:$0xff]
    %v3727 = vld [vmem:[%s3721 + $0x28] sm:$0xff]
    %v3728 = vld [vmem:[%s3721 + $0x30] sm:$0xff]
    %v3729 = vld [vmem:[%s3721 + $0x38] sm:$0xff]
    %v3730 = vld [vmem:[%s3721 + $0x40] sm:$0xff]
    %v3731 = vld [vmem:[%s3721 + $0x48] sm:$0xff]
    %v3732 = vld [vmem:[%s3721 + $0x50] sm:$0xff]
    %v3733 = vld [vmem:[%s3721 + $0x58] sm:$0xff]
    %v3734 = vld [vmem:[%s3721 + $0x60] sm:$0xff]
    %v3735 = vld [vmem:[%s3721 + $0x68] sm:$0xff]
    %v3736 = vld [vmem:[%s3721 + $0x70] sm:$0xff]
    %v3737 = vld [vmem:[%s3721 + $0x78] sm:$0xff]
    %v3738 = vld [vmem:[%s3721 + $0x80] sm:$0xff]
    %v3739 = vld [vmem:[%s3721 + $0x88] sm:$0xff]
    %v3740 = vld [vmem:[%s3721 + $0x90] sm:$0xff]
    %v3741 = vld [vmem:[%s3721 + $0x98] sm:$0xff]
    %v3742 = vld [vmem:[%s3721 + $0xa0] sm:$0xff]
    %v3743 = vld [vmem:[%s3721 + $0xa8] sm:$0xff]
    %v3744 = vld [vmem:[%s3721 + $0xb0] sm:$0xff]
    %v3745 = vld [vmem:[%s3721 + $0xb8] sm:$0xff]
    %v3746 = vld [vmem:[%s3721 + $0xc0] sm:$0xff]
    %v3747 = vld [vmem:[%s3721 + $0xc8] sm:$0xff]
    %v3748 = vld [vmem:[%s3721 + $0xd0] sm:$0xff]
    %v3749 = vld [vmem:[%s3721 + $0xd8] sm:$0xff]
    %v3750 = vld [vmem:[%s3721 + $0xe0] sm:$0xff]
    %v3751 = vld [vmem:[%s3721 + $0xe8] sm:$0xff]
    %v3752 = vld [vmem:[%s3721 + $0xf0] sm:$0xff]
    %v3753 = vld [vmem:[%s3721 + $0xf8] sm:$0xff]
    %v3762 = vsel %vm3352, %v3130, %v3129
    %v3763 = vsel %vm3354, %v3131, %v3762
    %v3764 = vsel %vm3356, %v3132, %v3763
    %v3765 = vsel %vm3358, %v3133, %v3764
    %v3766 = vsel %vm3360, %v3134, %v3765
    %v3767 = vsel %vm3362, %v3135, %v3766
    %v3768 = vsel %vm3364, %v3136, %v3767
    %v3769 = vsel %vm3352, %v3142, %v3141
    %v3770 = vsel %vm3354, %v3143, %v3769
    %v3771 = vsel %vm3356, %v3144, %v3770
    %v3772 = vsel %vm3358, %v3145, %v3771
    %v3773 = vsel %vm3360, %v3146, %v3772
    %v3774 = vsel %vm3362, %v3147, %v3773
    %v3775 = vsel %vm3364, %v3148, %v3774
    %v3776 = vsel %vm3352, %v3154, %v3153
    %v3777 = vsel %vm3354, %v3155, %v3776
    %v3778 = vsel %vm3356, %v3156, %v3777
    %v3779 = vsel %vm3358, %v3157, %v3778
    %v3780 = vsel %vm3360, %v3158, %v3779
    %v3781 = vsel %vm3362, %v3159, %v3780
    %v3782 = vsel %vm3364, %v3160, %v3781
    %v3783 = vsel %vm3352, %v3166, %v3165
    %v3784 = vsel %vm3354, %v3167, %v3783
    %v3785 = vsel %vm3356, %v3168, %v3784
    %v3786 = vsel %vm3358, %v3169, %v3785
    %v3787 = vsel %vm3360, %v3170, %v3786
    %v3788 = vsel %vm3362, %v3171, %v3787
    %v3789 = vsel %vm3364, %v3172, %v3788
    %v3790 = vsel %vm3352, %v3178, %v3177
    %v3791 = vsel %vm3354, %v3179, %v3790
    %v3792 = vsel %vm3356, %v3180, %v3791
    %v3793 = vsel %vm3358, %v3181, %v3792
    %v3794 = vsel %vm3360, %v3182, %v3793
    %v3795 = vsel %vm3362, %v3183, %v3794
    %v3796 = vsel %vm3364, %v3184, %v3795
    %v3797 = vsel %vm3352, %v3190, %v3189
    %v3798 = vsel %vm3354, %v3191, %v3797
    %v3799 = vsel %vm3356, %v3192, %v3798
    %v3800 = vsel %vm3358, %v3193, %v3799
    %v3801 = vsel %vm3360, %v3194, %v3800
    %v3802 = vsel %vm3362, %v3195, %v3801
    %v3803 = vsel %vm3364, %v3196, %v3802
    %v3804 = vsel %vm3352, %v3202, %v3201
    %v3805 = vsel %vm3354, %v3203, %v3804
    %v3806 = vsel %vm3356, %v3204, %v3805
    %v3807 = vsel %vm3358, %v3205, %v3806
    %v3808 = vsel %vm3360, %v3206, %v3807
    %v3809 = vsel %vm3362, %v3207, %v3808
    %v3810 = vsel %vm3364, %v3208, %v3809
    %v3811 = vsel %vm3352, %v3214, %v3213
    %v3812 = vsel %vm3354, %v3215, %v3811
    %v3813 = vsel %vm3356, %v3216, %v3812
    %v3814 = vsel %vm3358, %v3217, %v3813
    %v3815 = vsel %vm3360, %v3218, %v3814
    %v3816 = vsel %vm3362, %v3219, %v3815
    %v3817 = vsel %vm3364, %v3220, %v3816
    %3826 = vmatprep.subr.mxu0 %v3753
    %3827 = vmatpush1.msra.mxu0 %v3752
    %3828 = vmatprep.subr.mxu0 %v3751
    %3829 = vmatpush1.msra.mxu0 %v3750
    %3830 = vmatprep.subr.mxu0 %v3749
    %3831 = vmatpush1.msra.mxu0 %v3748
    %3832 = vmatprep.subr.mxu0 %v3747
    %3833 = vmatpush1.msra.mxu0 %v3746
    %3834 = vmatprep.subr.mxu0 %v3745
    %3835 = vmatpush1.msra.mxu0 %v3744
    %3836 = vmatprep.subr.mxu0 %v3743
    %3837 = vmatpush1.msra.mxu0 %v3742
    %3838 = vmatprep.subr.mxu0 %v3741
    %3839 = vmatpush1.msra.mxu0 %v3740
    %3840 = vmatprep.subr.mxu0 %v3739
    %3841 = vmatpush1.msra.mxu0 %v3738
    %3842 = vmatprep.subr.mxu0 %v3737
    %3843 = vmatpush1.msra.mxu0 %v3736
    %3844 = vmatprep.subr.mxu0 %v3735
    %3845 = vmatpush1.msra.mxu0 %v3734
    %3846 = vmatprep.subr.mxu0 %v3733
    %3847 = vmatpush1.msra.mxu0 %v3732
    %3848 = vmatprep.subr.mxu0 %v3731
    %3849 = vmatpush1.msra.mxu0 %v3730
    %3850 = vmatprep.subr.mxu0 %v3729
    %3851 = vmatpush1.msra.mxu0 %v3728
    %3852 = vmatprep.subr.mxu0 %v3727
    %3853 = vmatpush1.msra.mxu0 %v3726
    %3854 = vmatprep.subr.mxu0 %v3725
    %3855 = vmatpush1.msra.mxu0 %v3724
    %3856 = vmatprep.subr.mxu0 %v3723
    %3857 = vmatpush1.msra.mxu0 %v3722
    %3858 = vmatprep.subr.mxu0 0.0
    %3859 = vmatpush2.msra.mxu0 0.0
    %3860 = vmatprep.subr.mxu0 0.0
    %3861 = vmatpush2.msra.mxu0 0.0
    %3862 = vmatprep.subr.mxu0 0.0
    %3863 = vmatpush2.msra.mxu0 0.0
    %3864 = vmatprep.subr.mxu0 0.0
    %3865 = vmatpush2.msra.mxu0 0.0
    %3866 = vmatprep.subr.mxu0 0.0
    %3867 = vmatpush2.msra.mxu0 0.0
    %3868 = vmatprep.subr.mxu0 0.0
    %3869 = vmatpush2.msra.mxu0 0.0
    %3870 = vmatprep.subr.mxu0 0.0
    %3871 = vmatpush2.msra.mxu0 0.0
    %3872 = vmatprep.subr.mxu0 0.0
    %3873 = vmatpush2.msra.mxu0 0.0
    %3874 = vmatprep.subr.mxu0 0.0
    %3875 = vmatpush2.msra.mxu0 0.0
    %3876 = vmatprep.subr.mxu0 0.0
    %3877 = vmatpush2.msra.mxu0 0.0
    %3878 = vmatprep.subr.mxu0 0.0
    %3879 = vmatpush2.msra.mxu0 0.0
    %3880 = vmatprep.subr.mxu0 0.0
    %3881 = vmatpush2.msra.mxu0 0.0
    %3882 = vmatprep.subr.mxu0 0.0
    %3883 = vmatpush2.msra.mxu0 0.0
    %3884 = vmatprep.subr.mxu0 0.0
    %3885 = vmatpush2.msra.mxu0 0.0
    %3886 = vmatprep.subr.mxu0 0.0
    %3887 = vmatpush2.msra.mxu0 0.0
    %3888 = vmatprep.subr.mxu0 0.0
    %3889 = vmatpush2.msra.mxu0 0.0
    %3890 = vmatprep.mubr.f32.mxu0 0.0
    %3891 = vmatmul.mubr.f32.gmra.mxu0 %v3768
    %v3892 = vpop.f32.mrf.mxu0
    %v3893 = vadd.f32 0.0, %v3892
    %v3894 = vpop.f32.mrf.mxu0
    %v3895 = vadd.f32 0.0, %v3894
    %3896 = vmatprep.mubr.f32.mxu0 0.0
    %3897 = vmatmul.mubr.f32.gmra.mxu0 %v3775
    %v3898 = vpop.f32.mrf.mxu0
    %v3899 = vadd.f32 0.0, %v3898
    %v3900 = vpop.f32.mrf.mxu0
    %v3901 = vadd.f32 0.0, %v3900
    %3902 = vmatprep.mubr.f32.mxu0 0.0
    %3903 = vmatmul.mubr.f32.gmra.mxu0 %v3782
    %v3904 = vpop.f32.mrf.mxu0
    %v3905 = vadd.f32 0.0, %v3904
    %v3906 = vpop.f32.mrf.mxu0
    %v3907 = vadd.f32 0.0, %v3906
    %3908 = vmatprep.mubr.f32.mxu0 0.0
    %3909 = vmatmul.mubr.f32.gmra.mxu0 %v3789
    %v3910 = vpop.f32.mrf.mxu0
    %v3911 = vadd.f32 0.0, %v3910
    %v3912 = vpop.f32.mrf.mxu0
    %v3913 = vadd.f32 0.0, %v3912
    %3914 = vmatprep.mubr.f32.mxu0 0.0
    %3915 = vmatmul.mubr.f32.gmra.mxu0 %v3796
    %v3916 = vpop.f32.mrf.mxu0
    %v3917 = vadd.f32 0.0, %v3916
    %v3918 = vpop.f32.mrf.mxu0
    %v3919 = vadd.f32 0.0, %v3918
    %3920 = vmatprep.mubr.f32.mxu0 0.0
    %3921 = vmatmul.mubr.f32.gmra.mxu0 %v3803
    %v3922 = vpop.f32.mrf.mxu0
    %v3923 = vadd.f32 0.0, %v3922
    %v3924 = vpop.f32.mrf.mxu0
    %v3925 = vadd.f32 0.0, %v3924
    %3926 = vmatprep.mubr.f32.mxu0 0.0
    %3927 = vmatmul.mubr.f32.gmra.mxu0 %v3810
    %v3928 = vpop.f32.mrf.mxu0
    %v3929 = vadd.f32 0.0, %v3928
    %v3930 = vpop.f32.mrf.mxu0
    %v3931 = vadd.f32 0.0, %v3930
    %3932 = vmatprep.mubr.f32.mxu0 0.0
    %3933 = vmatmul.mubr.f32.gmra.mxu0 %v3817
    %v3934 = vpop.f32.mrf.mxu0
    %v3935 = vadd.f32 0.0, %v3934
    %v3936 = vpop.f32.mrf.mxu0
    %v3937 = vadd.f32 0.0, %v3936
    %3938 = vdwg.mxu0
    %v3939 = vadd.f32 %v3675, %v3893
    %v3940 = vadd.f32 %v3677, %v3895
    %v3941 = vadd.f32 %v3681, %v3899
    %v3942 = vadd.f32 %v3683, %v3901
    %v3943 = vadd.f32 %v3687, %v3905
    %v3944 = vadd.f32 %v3689, %v3907
    %v3945 = vadd.f32 %v3693, %v3911
    %v3946 = vadd.f32 %v3695, %v3913
    %v3947 = vadd.f32 %v3699, %v3917
    %v3948 = vadd.f32 %v3701, %v3919
    %v3949 = vadd.f32 %v3705, %v3923
    %v3950 = vadd.f32 %v3707, %v3925
    %v3951 = vadd.f32 %v3711, %v3929
    %v3952 = vadd.f32 %v3713, %v3931
    %v3953 = vadd.f32 %v3717, %v3935
    %v3954 = vadd.f32 %v3719, %v3937
    %s3955 = scalar_lea.vmem %s3, 768
    %v3956 = vld [vmem:[%s3955] sm:$0xff]
    %v3957 = vld [vmem:[%s3955 + $0x8] sm:$0xff]
    %v3958 = vld [vmem:[%s3955 + $0x10] sm:$0xff]
    %v3959 = vld [vmem:[%s3955 + $0x18] sm:$0xff]
    %v3960 = vld [vmem:[%s3955 + $0x20] sm:$0xff]
    %v3961 = vld [vmem:[%s3955 + $0x28] sm:$0xff]
    %v3962 = vld [vmem:[%s3955 + $0x30] sm:$0xff]
    %v3963 = vld [vmem:[%s3955 + $0x38] sm:$0xff]
    %v3964 = vld [vmem:[%s3955 + $0x40] sm:$0xff]
    %v3965 = vld [vmem:[%s3955 + $0x48] sm:$0xff]
    %v3966 = vld [vmem:[%s3955 + $0x50] sm:$0xff]
    %v3967 = vld [vmem:[%s3955 + $0x58] sm:$0xff]
    %v3968 = vld [vmem:[%s3955 + $0x60] sm:$0xff]
    %v3969 = vld [vmem:[%s3955 + $0x68] sm:$0xff]
    %v3970 = vld [vmem:[%s3955 + $0x70] sm:$0xff]
    %v3971 = vld [vmem:[%s3955 + $0x78] sm:$0xff]
    %v3972 = vld [vmem:[%s3955 + $0x80] sm:$0xff]
    %v3973 = vld [vmem:[%s3955 + $0x88] sm:$0xff]
    %v3974 = vld [vmem:[%s3955 + $0x90] sm:$0xff]
    %v3975 = vld [vmem:[%s3955 + $0x98] sm:$0xff]
    %v3976 = vld [vmem:[%s3955 + $0xa0] sm:$0xff]
    %v3977 = vld [vmem:[%s3955 + $0xa8] sm:$0xff]
    %v3978 = vld [vmem:[%s3955 + $0xb0] sm:$0xff]
    %v3979 = vld [vmem:[%s3955 + $0xb8] sm:$0xff]
    %v3980 = vld [vmem:[%s3955 + $0xc0] sm:$0xff]
    %v3981 = vld [vmem:[%s3955 + $0xc8] sm:$0xff]
    %v3982 = vld [vmem:[%s3955 + $0xd0] sm:$0xff]
    %v3983 = vld [vmem:[%s3955 + $0xd8] sm:$0xff]
    %v3984 = vld [vmem:[%s3955 + $0xe0] sm:$0xff]
    %v3985 = vld [vmem:[%s3955 + $0xe8] sm:$0xff]
    %v3986 = vld [vmem:[%s3955 + $0xf0] sm:$0xff]
    %v3987 = vld [vmem:[%s3955 + $0xf8] sm:$0xff]
    %v3996 = vsel %vm3352, %v3131, %v3130
    %v3997 = vsel %vm3354, %v3132, %v3996
    %v3998 = vsel %vm3356, %v3133, %v3997
    %v3999 = vsel %vm3358, %v3134, %v3998
    %v4000 = vsel %vm3360, %v3135, %v3999
    %v4001 = vsel %vm3362, %v3136, %v4000
    %v4002 = vsel %vm3364, %v3137, %v4001
    %v4003 = vsel %vm3352, %v3143, %v3142
    %v4004 = vsel %vm3354, %v3144, %v4003
    %v4005 = vsel %vm3356, %v3145, %v4004
    %v4006 = vsel %vm3358, %v3146, %v4005
    %v4007 = vsel %vm3360, %v3147, %v4006
    %v4008 = vsel %vm3362, %v3148, %v4007
    %v4009 = vsel %vm3364, %v3149, %v4008
    %v4010 = vsel %vm3352, %v3155, %v3154
    %v4011 = vsel %vm3354, %v3156, %v4010
    %v4012 = vsel %vm3356, %v3157, %v4011
    %v4013 = vsel %vm3358, %v3158, %v4012
    %v4014 = vsel %vm3360, %v3159, %v4013
    %v4015 = vsel %vm3362, %v3160, %v4014
    %v4016 = vsel %vm3364, %v3161, %v4015
    %v4017 = vsel %vm3352, %v3167, %v3166
    %v4018 = vsel %vm3354, %v3168, %v4017
    %v4019 = vsel %vm3356, %v3169, %v4018
    %v4020 = vsel %vm3358, %v3170, %v4019
    %v4021 = vsel %vm3360, %v3171, %v4020
    %v4022 = vsel %vm3362, %v3172, %v4021
    %v4023 = vsel %vm3364, %v3173, %v4022
    %v4024 = vsel %vm3352, %v3179, %v3178
    %v4025 = vsel %vm3354, %v3180, %v4024
    %v4026 = vsel %vm3356, %v3181, %v4025
    %v4027 = vsel %vm3358, %v3182, %v4026
    %v4028 = vsel %vm3360, %v3183, %v4027
    %v4029 = vsel %vm3362, %v3184, %v4028
    %v4030 = vsel %vm3364, %v3185, %v4029
    %v4031 = vsel %vm3352, %v3191, %v3190
    %v4032 = vsel %vm3354, %v3192, %v4031
    %v4033 = vsel %vm3356, %v3193, %v4032
    %v4034 = vsel %vm3358, %v3194, %v4033
    %v4035 = vsel %vm3360, %v3195, %v4034
    %v4036 = vsel %vm3362, %v3196, %v4035
    %v4037 = vsel %vm3364, %v3197, %v4036
    %v4038 = vsel %vm3352, %v3203, %v3202
    %v4039 = vsel %vm3354, %v3204, %v4038
    %v4040 = vsel %vm3356, %v3205, %v4039
    %v4041 = vsel %vm3358, %v3206, %v4040
    %v4042 = vsel %vm3360, %v3207, %v4041
    %v4043 = vsel %vm3362, %v3208, %v4042
    %v4044 = vsel %vm3364, %v3209, %v4043
    %v4045 = vsel %vm3352, %v3215, %v3214
    %v4046 = vsel %vm3354, %v3216, %v4045
    %v4047 = vsel %vm3356, %v3217, %v4046
    %v4048 = vsel %vm3358, %v3218, %v4047
    %v4049 = vsel %vm3360, %v3219, %v4048
    %v4050 = vsel %vm3362, %v3220, %v4049
    %v4051 = vsel %vm3364, %v3221, %v4050
    %4060 = vmatprep.subr.mxu0 %v3987
    %4061 = vmatpush1.msra.mxu0 %v3986
    %4062 = vmatprep.subr.mxu0 %v3985
    %4063 = vmatpush1.msra.mxu0 %v3984
    %4064 = vmatprep.subr.mxu0 %v3983
    %4065 = vmatpush1.msra.mxu0 %v3982
    %4066 = vmatprep.subr.mxu0 %v3981
    %4067 = vmatpush1.msra.mxu0 %v3980
    %4068 = vmatprep.subr.mxu0 %v3979
    %4069 = vmatpush1.msra.mxu0 %v3978
    %4070 = vmatprep.subr.mxu0 %v3977
    %4071 = vmatpush1.msra.mxu0 %v3976
    %4072 = vmatprep.subr.mxu0 %v3975
    %4073 = vmatpush1.msra.mxu0 %v3974
    %4074 = vmatprep.subr.mxu0 %v3973
    %4075 = vmatpush1.msra.mxu0 %v3972
    %4076 = vmatprep.subr.mxu0 %v3971
    %4077 = vmatpush1.msra.mxu0 %v3970
    %4078 = vmatprep.subr.mxu0 %v3969
    %4079 = vmatpush1.msra.mxu0 %v3968
    %4080 = vmatprep.subr.mxu0 %v3967
    %4081 = vmatpush1.msra.mxu0 %v3966
    %4082 = vmatprep.subr.mxu0 %v3965
    %4083 = vmatpush1.msra.mxu0 %v3964
    %4084 = vmatprep.subr.mxu0 %v3963
    %4085 = vmatpush1.msra.mxu0 %v3962
    %4086 = vmatprep.subr.mxu0 %v3961
    %4087 = vmatpush1.msra.mxu0 %v3960
    %4088 = vmatprep.subr.mxu0 %v3959
    %4089 = vmatpush1.msra.mxu0 %v3958
    %4090 = vmatprep.subr.mxu0 %v3957
    %4091 = vmatpush1.msra.mxu0 %v3956
    %4092 = vmatprep.subr.mxu0 0.0
    %4093 = vmatpush2.msra.mxu0 0.0
    %4094 = vmatprep.subr.mxu0 0.0
    %4095 = vmatpush2.msra.mxu0 0.0
    %4096 = vmatprep.subr.mxu0 0.0
    %4097 = vmatpush2.msra.mxu0 0.0
    %4098 = vmatprep.subr.mxu0 0.0
    %4099 = vmatpush2.msra.mxu0 0.0
    %4100 = vmatprep.subr.mxu0 0.0
    %4101 = vmatpush2.msra.mxu0 0.0
    %4102 = vmatprep.subr.mxu0 0.0
    %4103 = vmatpush2.msra.mxu0 0.0
    %4104 = vmatprep.subr.mxu0 0.0
    %4105 = vmatpush2.msra.mxu0 0.0
    %4106 = vmatprep.subr.mxu0 0.0
    %4107 = vmatpush2.msra.mxu0 0.0
    %4108 = vmatprep.subr.mxu0 0.0
    %4109 = vmatpush2.msra.mxu0 0.0
    %4110 = vmatprep.subr.mxu0 0.0
    %4111 = vmatpush2.msra.mxu0 0.0
    %4112 = vmatprep.subr.mxu0 0.0
    %4113 = vmatpush2.msra.mxu0 0.0
    %4114 = vmatprep.subr.mxu0 0.0
    %4115 = vmatpush2.msra.mxu0 0.0
    %4116 = vmatprep.subr.mxu0 0.0
    %4117 = vmatpush2.msra.mxu0 0.0
    %4118 = vmatprep.subr.mxu0 0.0
    %4119 = vmatpush2.msra.mxu0 0.0
    %4120 = vmatprep.subr.mxu0 0.0
    %4121 = vmatpush2.msra.mxu0 0.0
    %4122 = vmatprep.subr.mxu0 0.0
    %4123 = vmatpush2.msra.mxu0 0.0
    %4124 = vmatprep.mubr.f32.mxu0 0.0
    %4125 = vmatmul.mubr.f32.gmra.mxu0 %v4002
    %v4126 = vpop.f32.mrf.mxu0
    %v4127 = vadd.f32 0.0, %v4126
    %v4128 = vpop.f32.mrf.mxu0
    %v4129 = vadd.f32 0.0, %v4128
    %4130 = vmatprep.mubr.f32.mxu0 0.0
    %4131 = vmatmul.mubr.f32.gmra.mxu0 %v4009
    %v4132 = vpop.f32.mrf.mxu0
    %v4133 = vadd.f32 0.0, %v4132
    %v4134 = vpop.f32.mrf.mxu0
    %v4135 = vadd.f32 0.0, %v4134
    %4136 = vmatprep.mubr.f32.mxu0 0.0
    %4137 = vmatmul.mubr.f32.gmra.mxu0 %v4016
    %v4138 = vpop.f32.mrf.mxu0
    %v4139 = vadd.f32 0.0, %v4138
    %v4140 = vpop.f32.mrf.mxu0
    %v4141 = vadd.f32 0.0, %v4140
    %4142 = vmatprep.mubr.f32.mxu0 0.0
    %4143 = vmatmul.mubr.f32.gmra.mxu0 %v4023
    %v4144 = vpop.f32.mrf.mxu0
    %v4145 = vadd.f32 0.0, %v4144
    %v4146 = vpop.f32.mrf.mxu0
    %v4147 = vadd.f32 0.0, %v4146
    %4148 = vmatprep.mubr.f32.mxu0 0.0
    %4149 = vmatmul.mubr.f32.gmra.mxu0 %v4030
    %v4150 = vpop.f32.mrf.mxu0
    %v4151 = vadd.f32 0.0, %v4150
    %v4152 = vpop.f32.mrf.mxu0
    %v4153 = vadd.f32 0.0, %v4152
    %4154 = vmatprep.mubr.f32.mxu0 0.0
    %4155 = vmatmul.mubr.f32.gmra.mxu0 %v4037
    %v4156 = vpop.f32.mrf.mxu0
    %v4157 = vadd.f32 0.0, %v4156
    %v4158 = vpop.f32.mrf.mxu0
    %v4159 = vadd.f32 0.0, %v4158
    %4160 = vmatprep.mubr.f32.mxu0 0.0
    %4161 = vmatmul.mubr.f32.gmra.mxu0 %v4044
    %v4162 = vpop.f32.mrf.mxu0
    %v4163 = vadd.f32 0.0, %v4162
    %v4164 = vpop.f32.mrf.mxu0
    %v4165 = vadd.f32 0.0, %v4164
    %4166 = vmatprep.mubr.f32.mxu0 0.0
    %4167 = vmatmul.mubr.f32.gmra.mxu0 %v4051
    %v4168 = vpop.f32.mrf.mxu0
    %v4169 = vadd.f32 0.0, %v4168
    %v4170 = vpop.f32.mrf.mxu0
    %v4171 = vadd.f32 0.0, %v4170
    %4172 = vdwg.mxu0
    %v4173 = vadd.f32 %v3939, %v4127
    %v4174 = vadd.f32 %v3940, %v4129
    %v4175 = vadd.f32 %v3941, %v4133
    %v4176 = vadd.f32 %v3942, %v4135
    %v4177 = vadd.f32 %v3943, %v4139
    %v4178 = vadd.f32 %v3944, %v4141
    %v4179 = vadd.f32 %v3945, %v4145
    %v4180 = vadd.f32 %v3946, %v4147
    %v4181 = vadd.f32 %v3947, %v4151
    %v4182 = vadd.f32 %v3948, %v4153
    %v4183 = vadd.f32 %v3949, %v4157
    %v4184 = vadd.f32 %v3950, %v4159
    %v4185 = vadd.f32 %v3951, %v4163
    %v4186 = vadd.f32 %v3952, %v4165
    %v4187 = vadd.f32 %v3953, %v4169
    %v4188 = vadd.f32 %v3954, %v4171
    %s4189 = scalar_lea.vmem %s3, 1024
    %v4190 = vld [vmem:[%s4189] sm:$0xff]
    %v4191 = vld [vmem:[%s4189 + $0x8] sm:$0xff]
    %v4192 = vld [vmem:[%s4189 + $0x10] sm:$0xff]
    %v4193 = vld [vmem:[%s4189 + $0x18] sm:$0xff]
    %v4194 = vld [vmem:[%s4189 + $0x20] sm:$0xff]
    %v4195 = vld [vmem:[%s4189 + $0x28] sm:$0xff]
    %v4196 = vld [vmem:[%s4189 + $0x30] sm:$0xff]
    %v4197 = vld [vmem:[%s4189 + $0x38] sm:$0xff]
    %v4198 = vld [vmem:[%s4189 + $0x40] sm:$0xff]
    %v4199 = vld [vmem:[%s4189 + $0x48] sm:$0xff]
    %v4200 = vld [vmem:[%s4189 + $0x50] sm:$0xff]
    %v4201 = vld [vmem:[%s4189 + $0x58] sm:$0xff]
    %v4202 = vld [vmem:[%s4189 + $0x60] sm:$0xff]
    %v4203 = vld [vmem:[%s4189 + $0x68] sm:$0xff]
    %v4204 = vld [vmem:[%s4189 + $0x70] sm:$0xff]
    %v4205 = vld [vmem:[%s4189 + $0x78] sm:$0xff]
    %v4206 = vld [vmem:[%s4189 + $0x80] sm:$0xff]
    %v4207 = vld [vmem:[%s4189 + $0x88] sm:$0xff]
    %v4208 = vld [vmem:[%s4189 + $0x90] sm:$0xff]
    %v4209 = vld [vmem:[%s4189 + $0x98] sm:$0xff]
    %v4210 = vld [vmem:[%s4189 + $0xa0] sm:$0xff]
    %v4211 = vld [vmem:[%s4189 + $0xa8] sm:$0xff]
    %v4212 = vld [vmem:[%s4189 + $0xb0] sm:$0xff]
    %v4213 = vld [vmem:[%s4189 + $0xb8] sm:$0xff]
    %v4214 = vld [vmem:[%s4189 + $0xc0] sm:$0xff]
    %v4215 = vld [vmem:[%s4189 + $0xc8] sm:$0xff]
    %v4216 = vld [vmem:[%s4189 + $0xd0] sm:$0xff]
    %v4217 = vld [vmem:[%s4189 + $0xd8] sm:$0xff]
    %v4218 = vld [vmem:[%s4189 + $0xe0] sm:$0xff]
    %v4219 = vld [vmem:[%s4189 + $0xe8] sm:$0xff]
    %v4220 = vld [vmem:[%s4189 + $0xf0] sm:$0xff]
    %v4221 = vld [vmem:[%s4189 + $0xf8] sm:$0xff]
    %v4230 = vsel %vm3352, %v3132, %v3131
    %v4231 = vsel %vm3354, %v3133, %v4230
    %v4232 = vsel %vm3356, %v3134, %v4231
    %v4233 = vsel %vm3358, %v3135, %v4232
    %v4234 = vsel %vm3360, %v3136, %v4233
    %v4235 = vsel %vm3362, %v3137, %v4234
    %v4236 = vsel %vm3364, %v3138, %v4235
    %v4237 = vsel %vm3352, %v3144, %v3143
    %v4238 = vsel %vm3354, %v3145, %v4237
    %v4239 = vsel %vm3356, %v3146, %v4238
    %v4240 = vsel %vm3358, %v3147, %v4239
    %v4241 = vsel %vm3360, %v3148, %v4240
    %v4242 = vsel %vm3362, %v3149, %v4241
    %v4243 = vsel %vm3364, %v3150, %v4242
    %v4244 = vsel %vm3352, %v3156, %v3155
    %v4245 = vsel %vm3354, %v3157, %v4244
    %v4246 = vsel %vm3356, %v3158, %v4245
    %v4247 = vsel %vm3358, %v3159, %v4246
    %v4248 = vsel %vm3360, %v3160, %v4247
    %v4249 = vsel %vm3362, %v3161, %v4248
    %v4250 = vsel %vm3364, %v3162, %v4249
    %v4251 = vsel %vm3352, %v3168, %v3167
    %v4252 = vsel %vm3354, %v3169, %v4251
    %v4253 = vsel %vm3356, %v3170, %v4252
    %v4254 = vsel %vm3358, %v3171, %v4253
    %v4255 = vsel %vm3360, %v3172, %v4254
    %v4256 = vsel %vm3362, %v3173, %v4255
    %v4257 = vsel %vm3364, %v3174, %v4256
    %v4258 = vsel %vm3352, %v3180, %v3179
    %v4259 = vsel %vm3354, %v3181, %v4258
    %v4260 = vsel %vm3356, %v3182, %v4259
    %v4261 = vsel %vm3358, %v3183, %v4260
    %v4262 = vsel %vm3360, %v3184, %v4261
    %v4263 = vsel %vm3362, %v3185, %v4262
    %v4264 = vsel %vm3364, %v3186, %v4263
    %v4265 = vsel %vm3352, %v3192, %v3191
    %v4266 = vsel %vm3354, %v3193, %v4265
    %v4267 = vsel %vm3356, %v3194, %v4266
    %v4268 = vsel %vm3358, %v3195, %v4267
    %v4269 = vsel %vm3360, %v3196, %v4268
    %v4270 = vsel %vm3362, %v3197, %v4269
    %v4271 = vsel %vm3364, %v3198, %v4270
    %v4272 = vsel %vm3352, %v3204, %v3203
    %v4273 = vsel %vm3354, %v3205, %v4272
    %v4274 = vsel %vm3356, %v3206, %v4273
    %v4275 = vsel %vm3358, %v3207, %v4274
    %v4276 = vsel %vm3360, %v3208, %v4275
    %v4277 = vsel %vm3362, %v3209, %v4276
    %v4278 = vsel %vm3364, %v3210, %v4277
    %v4279 = vsel %vm3352, %v3216, %v3215
    %v4280 = vsel %vm3354, %v3217, %v4279
    %v4281 = vsel %vm3356, %v3218, %v4280
    %v4282 = vsel %vm3358, %v3219, %v4281
    %v4283 = vsel %vm3360, %v3220, %v4282
    %v4284 = vsel %vm3362, %v3221, %v4283
    %v4285 = vsel %vm3364, %v3222, %v4284
    %4294 = vmatprep.subr.mxu0 %v4221
    %4295 = vmatpush1.msra.mxu0 %v4220
    %4296 = vmatprep.subr.mxu0 %v4219
    %4297 = vmatpush1.msra.mxu0 %v4218
    %4298 = vmatprep.subr.mxu0 %v4217
    %4299 = vmatpush1.msra.mxu0 %v4216
    %4300 = vmatprep.subr.mxu0 %v4215
    %4301 = vmatpush1.msra.mxu0 %v4214
    %4302 = vmatprep.subr.mxu0 %v4213
    %4303 = vmatpush1.msra.mxu0 %v4212
    %4304 = vmatprep.subr.mxu0 %v4211
    %4305 = vmatpush1.msra.mxu0 %v4210
    %4306 = vmatprep.subr.mxu0 %v4209
    %4307 = vmatpush1.msra.mxu0 %v4208
    %4308 = vmatprep.subr.mxu0 %v4207
    %4309 = vmatpush1.msra.mxu0 %v4206
    %4310 = vmatprep.subr.mxu0 %v4205
    %4311 = vmatpush1.msra.mxu0 %v4204
    %4312 = vmatprep.subr.mxu0 %v4203
    %4313 = vmatpush1.msra.mxu0 %v4202
    %4314 = vmatprep.subr.mxu0 %v4201
    %4315 = vmatpush1.msra.mxu0 %v4200
    %4316 = vmatprep.subr.mxu0 %v4199
    %4317 = vmatpush1.msra.mxu0 %v4198
    %4318 = vmatprep.subr.mxu0 %v4197
    %4319 = vmatpush1.msra.mxu0 %v4196
    %4320 = vmatprep.subr.mxu0 %v4195
    %4321 = vmatpush1.msra.mxu0 %v4194
    %4322 = vmatprep.subr.mxu0 %v4193
    %4323 = vmatpush1.msra.mxu0 %v4192
    %4324 = vmatprep.subr.mxu0 %v4191
    %4325 = vmatpush1.msra.mxu0 %v4190
    %4326 = vmatprep.subr.mxu0 0.0
    %4327 = vmatpush2.msra.mxu0 0.0
    %4328 = vmatprep.subr.mxu0 0.0
    %4329 = vmatpush2.msra.mxu0 0.0
    %4330 = vmatprep.subr.mxu0 0.0
    %4331 = vmatpush2.msra.mxu0 0.0
    %4332 = vmatprep.subr.mxu0 0.0
    %4333 = vmatpush2.msra.mxu0 0.0
    %4334 = vmatprep.subr.mxu0 0.0
    %4335 = vmatpush2.msra.mxu0 0.0
    %4336 = vmatprep.subr.mxu0 0.0
    %4337 = vmatpush2.msra.mxu0 0.0
    %4338 = vmatprep.subr.mxu0 0.0
    %4339 = vmatpush2.msra.mxu0 0.0
    %4340 = vmatprep.subr.mxu0 0.0
    %4341 = vmatpush2.msra.mxu0 0.0
    %4342 = vmatprep.subr.mxu0 0.0
    %4343 = vmatpush2.msra.mxu0 0.0
    %4344 = vmatprep.subr.mxu0 0.0
    %4345 = vmatpush2.msra.mxu0 0.0
    %4346 = vmatprep.subr.mxu0 0.0
    %4347 = vmatpush2.msra.mxu0 0.0
    %4348 = vmatprep.subr.mxu0 0.0
    %4349 = vmatpush2.msra.mxu0 0.0
    %4350 = vmatprep.subr.mxu0 0.0
    %4351 = vmatpush2.msra.mxu0 0.0
    %4352 = vmatprep.subr.mxu0 0.0
    %4353 = vmatpush2.msra.mxu0 0.0
    %4354 = vmatprep.subr.mxu0 0.0
    %4355 = vmatpush2.msra.mxu0 0.0
    %4356 = vmatprep.subr.mxu0 0.0
    %4357 = vmatpush2.msra.mxu0 0.0
    %4358 = vmatprep.mubr.f32.mxu0 0.0
    %4359 = vmatmul.mubr.f32.gmra.mxu0 %v4236
    %v4360 = vpop.f32.mrf.mxu0
    %v4361 = vadd.f32 0.0, %v4360
    %v4362 = vpop.f32.mrf.mxu0
    %v4363 = vadd.f32 0.0, %v4362
    %4364 = vmatprep.mubr.f32.mxu0 0.0
    %4365 = vmatmul.mubr.f32.gmra.mxu0 %v4243
    %v4366 = vpop.f32.mrf.mxu0
    %v4367 = vadd.f32 0.0, %v4366
    %v4368 = vpop.f32.mrf.mxu0
    %v4369 = vadd.f32 0.0, %v4368
    %4370 = vmatprep.mubr.f32.mxu0 0.0
    %4371 = vmatmul.mubr.f32.gmra.mxu0 %v4250
    %v4372 = vpop.f32.mrf.mxu0
    %v4373 = vadd.f32 0.0, %v4372
    %v4374 = vpop.f32.mrf.mxu0
    %v4375 = vadd.f32 0.0, %v4374
    %4376 = vmatprep.mubr.f32.mxu0 0.0
    %4377 = vmatmul.mubr.f32.gmra.mxu0 %v4257
    %v4378 = vpop.f32.mrf.mxu0
    %v4379 = vadd.f32 0.0, %v4378
    %v4380 = vpop.f32.mrf.mxu0
    %v4381 = vadd.f32 0.0, %v4380
    %4382 = vmatprep.mubr.f32.mxu0 0.0
    %4383 = vmatmul.mubr.f32.gmra.mxu0 %v4264
    %v4384 = vpop.f32.mrf.mxu0
    %v4385 = vadd.f32 0.0, %v4384
    %v4386 = vpop.f32.mrf.mxu0
    %v4387 = vadd.f32 0.0, %v4386
    %4388 = vmatprep.mubr.f32.mxu0 0.0
    %4389 = vmatmul.mubr.f32.gmra.mxu0 %v4271
    %v4390 = vpop.f32.mrf.mxu0
    %v4391 = vadd.f32 0.0, %v4390
    %v4392 = vpop.f32.mrf.mxu0
    %v4393 = vadd.f32 0.0, %v4392
    %4394 = vmatprep.mubr.f32.mxu0 0.0
    %4395 = vmatmul.mubr.f32.gmra.mxu0 %v4278
    %v4396 = vpop.f32.mrf.mxu0
    %v4397 = vadd.f32 0.0, %v4396
    %v4398 = vpop.f32.mrf.mxu0
    %v4399 = vadd.f32 0.0, %v4398
    %4400 = vmatprep.mubr.f32.mxu0 0.0
    %4401 = vmatmul.mubr.f32.gmra.mxu0 %v4285
    %v4402 = vpop.f32.mrf.mxu0
    %v4403 = vadd.f32 0.0, %v4402
    %v4404 = vpop.f32.mrf.mxu0
    %v4405 = vadd.f32 0.0, %v4404
    %4406 = vdwg.mxu0
    %v4407 = vadd.f32 %v4173, %v4361
    %v4408 = vadd.f32 %v4174, %v4363
    %v4409 = vadd.f32 %v4175, %v4367
    %v4410 = vadd.f32 %v4176, %v4369
    %v4411 = vadd.f32 %v4177, %v4373
    %v4412 = vadd.f32 %v4178, %v4375
    %v4413 = vadd.f32 %v4179, %v4379
    %v4414 = vadd.f32 %v4180, %v4381
    %v4415 = vadd.f32 %v4181, %v4385
    %v4416 = vadd.f32 %v4182, %v4387
    %v4417 = vadd.f32 %v4183, %v4391
    %v4418 = vadd.f32 %v4184, %v4393
    %v4419 = vadd.f32 %v4185, %v4397
    %v4420 = vadd.f32 %v4186, %v4399
    %v4421 = vadd.f32 %v4187, %v4403
    %v4422 = vadd.f32 %v4188, %v4405
    %v4423 = vld [vmem:[%s4] sm:$0x3]
    %v4425 = vlaneseq
    %v4426 = vshrl.u32 %v4425, 7
    %v4427 = vsub.s32 0, %v4426
    %v4428 = vrot.slane %v4423, %v4427
    %v4429 = vlaneseq
    %v4430 = vshrl.u32 %v4429, 7
    %v4431 = vsub.s32 1, %v4430
    %v4432 = vrot.slane %v4423, %v4431
    %v4435 = vadd.f32 %v4407, %v4428
    %v4436 = vadd.f32 %v4408, %v4432
    %v4437 = vadd.f32 %v4409, %v4428
    %v4438 = vadd.f32 %v4410, %v4432
    %v4439 = vadd.f32 %v4411, %v4428
    %v4440 = vadd.f32 %v4412, %v4432
    %v4441 = vadd.f32 %v4413, %v4428
    %v4442 = vadd.f32 %v4414, %v4432
    %v4443 = vadd.f32 %v4415, %v4428
    %v4444 = vadd.f32 %v4416, %v4432
    %v4445 = vadd.f32 %v4417, %v4428
    %v4446 = vadd.f32 %v4418, %v4432
    %v4447 = vadd.f32 %v4419, %v4428
    %v4448 = vadd.f32 %v4420, %v4432
    %v4449 = vadd.f32 %v4421, %v4428
    %v4450 = vadd.f32 %v4422, %v4432
    %v4451 = vmax.f32 %v4435, %v4436
    %v4452 = vmax.f32 %v4437, %v4438
    %v4453 = vmax.f32 %v4439, %v4440
    %v4454 = vmax.f32 %v4441, %v4442
    %v4455 = vmax.f32 %v4443, %v4444
    %v4456 = vmax.f32 %v4445, %v4446
    %v4457 = vmax.f32 %v4447, %v4448
    %v4458 = vmax.f32 %v4449, %v4450
    %v4467 = vcombine.high %v4451, %v4451
    %v4469 = vunpack.c.l.s4 1983009808
    %v4470 = vunpack.c.0.s8 %v4469
    %v4471 = vlaneseq
    %v4472 = vshrl.u32 %v4471, 7
    %v4473 = vsub.s32 %v4470, %v4472
    %v4474 = vrot.slane %v4451, %v4473
    %v4476 = vunpack.c.l.s4 1983009808
    %v4477 = vunpack.c.0.s8 %v4476
    %v4478 = vlaneseq
    %v4479 = vshrl.u32 %v4478, 7
    %v4480 = vsub.s32 %v4477, %v4479
    %v4481 = vrot.slane %v4467, %v4480
    %v4482 = vcombine.high %v4474, %v4474
    %v4483 = vcombine.high %v4481, %v4481
    %v4484 = vcombine.high %v4452, %v4452
    %v4486 = vunpack.c.l.s4 1983009808
    %v4487 = vunpack.c.0.s8 %v4486
    %v4488 = vlaneseq
    %v4489 = vshrl.u32 %v4488, 7
    %v4490 = vsub.s32 %v4487, %v4489
    %v4491 = vrot.slane %v4452, %v4490
    %v4493 = vunpack.c.l.s4 1983009808
    %v4494 = vunpack.c.0.s8 %v4493
    %v4495 = vlaneseq
    %v4496 = vshrl.u32 %v4495, 7
    %v4497 = vsub.s32 %v4494, %v4496
    %v4498 = vrot.slane %v4484, %v4497
    %v4499 = vcombine.high %v4491, %v4491
    %v4500 = vcombine.high %v4498, %v4498
    %v4501 = vcombine.high %v4453, %v4453
    %v4503 = vunpack.c.l.s4 1983009808
    %v4504 = vunpack.c.0.s8 %v4503
    %v4505 = vlaneseq
    %v4506 = vshrl.u32 %v4505, 7
    %v4507 = vsub.s32 %v4504, %v4506
    %v4508 = vrot.slane %v4453, %v4507
    %v4510 = vunpack.c.l.s4 1983009808
    %v4511 = vunpack.c.0.s8 %v4510
    %v4512 = vlaneseq
    %v4513 = vshrl.u32 %v4512, 7
    %v4514 = vsub.s32 %v4511, %v4513
    %v4515 = vrot.slane %v4501, %v4514
    %v4516 = vcombine.high %v4508, %v4508
    %v4517 = vcombine.high %v4515, %v4515
    %v4518 = vcombine.high %v4454, %v4454
    %v4520 = vunpack.c.l.s4 1983009808
    %v4521 = vunpack.c.0.s8 %v4520
    %v4522 = vlaneseq
    %v4523 = vshrl.u32 %v4522, 7
    %v4524 = vsub.s32 %v4521, %v4523
    %v4525 = vrot.slane %v4454, %v4524
    %v4527 = vunpack.c.l.s4 1983009808
    %v4528 = vunpack.c.0.s8 %v4527
    %v4529 = vlaneseq
    %v4530 = vshrl.u32 %v4529, 7
    %v4531 = vsub.s32 %v4528, %v4530
    %v4532 = vrot.slane %v4518, %v4531
    %v4533 = vcombine.high %v4525, %v4525
    %v4534 = vcombine.high %v4532, %v4532
    %v4535 = vcombine.high %v4455, %v4455
    %v4537 = vunpack.c.l.s4 1983009808
    %v4538 = vunpack.c.0.s8 %v4537
    %v4539 = vlaneseq
    %v4540 = vshrl.u32 %v4539, 7
    %v4541 = vsub.s32 %v4538, %v4540
    %v4542 = vrot.slane %v4455, %v4541
    %v4544 = vunpack.c.l.s4 1983009808
    %v4545 = vunpack.c.0.s8 %v4544
    %v4546 = vlaneseq
    %v4547 = vshrl.u32 %v4546, 7
    %v4548 = vsub.s32 %v4545, %v4547
    %v4549 = vrot.slane %v4535, %v4548
    %v4550 = vcombine.high %v4542, %v4542
    %v4551 = vcombine.high %v4549, %v4549
    %v4552 = vcombine.high %v4456, %v4456
    %v4554 = vunpack.c.l.s4 1983009808
    %v4555 = vunpack.c.0.s8 %v4554
    %v4556 = vlaneseq
    %v4557 = vshrl.u32 %v4556, 7
    %v4558 = vsub.s32 %v4555, %v4557
    %v4559 = vrot.slane %v4456, %v4558
    %v4561 = vunpack.c.l.s4 1983009808
    %v4562 = vunpack.c.0.s8 %v4561
    %v4563 = vlaneseq
    %v4564 = vshrl.u32 %v4563, 7
    %v4565 = vsub.s32 %v4562, %v4564
    %v4566 = vrot.slane %v4552, %v4565
    %v4567 = vcombine.high %v4559, %v4559
    %v4568 = vcombine.high %v4566, %v4566
    %v4569 = vcombine.high %v4457, %v4457
    %v4571 = vunpack.c.l.s4 1983009808
    %v4572 = vunpack.c.0.s8 %v4571
    %v4573 = vlaneseq
    %v4574 = vshrl.u32 %v4573, 7
    %v4575 = vsub.s32 %v4572, %v4574
    %v4576 = vrot.slane %v4457, %v4575
    %v4578 = vunpack.c.l.s4 1983009808
    %v4579 = vunpack.c.0.s8 %v4578
    %v4580 = vlaneseq
    %v4581 = vshrl.u32 %v4580, 7
    %v4582 = vsub.s32 %v4579, %v4581
    %v4583 = vrot.slane %v4569, %v4582
    %v4584 = vcombine.high %v4576, %v4576
    %v4585 = vcombine.high %v4583, %v4583
    %v4586 = vcombine.high %v4458, %v4458
    %v4588 = vunpack.c.l.s4 1983009808
    %v4589 = vunpack.c.0.s8 %v4588
    %v4590 = vlaneseq
    %v4591 = vshrl.u32 %v4590, 7
    %v4592 = vsub.s32 %v4589, %v4591
    %v4593 = vrot.slane %v4458, %v4592
    %v4595 = vunpack.c.l.s4 1983009808
    %v4596 = vunpack.c.0.s8 %v4595
    %v4597 = vlaneseq
    %v4598 = vshrl.u32 %v4597, 7
    %v4599 = vsub.s32 %v4596, %v4598
    %v4600 = vrot.slane %v4586, %v4599
    %v4601 = vcombine.high %v4593, %v4593
    %v4602 = vcombine.high %v4600, %v4600
    %v4635 = vsel %vm2454, %v4474, -inf
    %v4636 = vrot.slane %v4635, 4
    %v4637 = vmax.f32 %v4635, %v4636
    %v4638 = vrot.slane %v4637, 2
    %v4639 = vmax.f32 %v4637, %v4638
    %v4640 = vrot.slane %v4639, 1
    %v4641 = vmax.f32 %v4639, %v4640
    %v4642 = vsel %vm2454, %v4482, -inf
    %v4643 = vrot.slane %v4642, 4
    %v4644 = vmax.f32 %v4642, %v4643
    %v4645 = vrot.slane %v4644, 2
    %v4646 = vmax.f32 %v4644, %v4645
    %v4647 = vrot.slane %v4646, 1
    %v4648 = vmax.f32 %v4646, %v4647
    %v4649 = vsel %vm2454, %v4481, -inf
    %v4650 = vrot.slane %v4649, 4
    %v4651 = vmax.f32 %v4649, %v4650
    %v4652 = vrot.slane %v4651, 2
    %v4653 = vmax.f32 %v4651, %v4652
    %v4654 = vrot.slane %v4653, 1
    %v4655 = vmax.f32 %v4653, %v4654
    %v4656 = vsel %vm2454, %v4483, -inf
    %v4657 = vrot.slane %v4656, 4
    %v4658 = vmax.f32 %v4656, %v4657
    %v4659 = vrot.slane %v4658, 2
    %v4660 = vmax.f32 %v4658, %v4659
    %v4661 = vrot.slane %v4660, 1
    %v4662 = vmax.f32 %v4660, %v4661
    %v4663 = vsel %vm2454, %v4491, -inf
    %v4664 = vrot.slane %v4663, 4
    %v4665 = vmax.f32 %v4663, %v4664
    %v4666 = vrot.slane %v4665, 2
    %v4667 = vmax.f32 %v4665, %v4666
    %v4668 = vrot.slane %v4667, 1
    %v4669 = vmax.f32 %v4667, %v4668
    %v4670 = vsel %vm2454, %v4499, -inf
    %v4671 = vrot.slane %v4670, 4
    %v4672 = vmax.f32 %v4670, %v4671
    %v4673 = vrot.slane %v4672, 2
    %v4674 = vmax.f32 %v4672, %v4673
    %v4675 = vrot.slane %v4674, 1
    %v4676 = vmax.f32 %v4674, %v4675
    %v4677 = vsel %vm2454, %v4498, -inf
    %v4678 = vrot.slane %v4677, 4
    %v4679 = vmax.f32 %v4677, %v4678
    %v4680 = vrot.slane %v4679, 2
    %v4681 = vmax.f32 %v4679, %v4680
    %v4682 = vrot.slane %v4681, 1
    %v4683 = vmax.f32 %v4681, %v4682
    %v4684 = vsel %vm2454, %v4500, -inf
    %v4685 = vrot.slane %v4684, 4
    %v4686 = vmax.f32 %v4684, %v4685
    %v4687 = vrot.slane %v4686, 2
    %v4688 = vmax.f32 %v4686, %v4687
    %v4689 = vrot.slane %v4688, 1
    %v4690 = vmax.f32 %v4688, %v4689
    %v4691 = vsel %vm2454, %v4508, -inf
    %v4692 = vrot.slane %v4691, 4
    %v4693 = vmax.f32 %v4691, %v4692
    %v4694 = vrot.slane %v4693, 2
    %v4695 = vmax.f32 %v4693, %v4694
    %v4696 = vrot.slane %v4695, 1
    %v4697 = vmax.f32 %v4695, %v4696
    %v4698 = vsel %vm2454, %v4516, -inf
    %v4699 = vrot.slane %v4698, 4
    %v4700 = vmax.f32 %v4698, %v4699
    %v4701 = vrot.slane %v4700, 2
    %v4702 = vmax.f32 %v4700, %v4701
    %v4703 = vrot.slane %v4702, 1
    %v4704 = vmax.f32 %v4702, %v4703
    %v4705 = vsel %vm2454, %v4515, -inf
    %v4706 = vrot.slane %v4705, 4
    %v4707 = vmax.f32 %v4705, %v4706
    %v4708 = vrot.slane %v4707, 2
    %v4709 = vmax.f32 %v4707, %v4708
    %v4710 = vrot.slane %v4709, 1
    %v4711 = vmax.f32 %v4709, %v4710
    %v4712 = vsel %vm2454, %v4517, -inf
    %v4713 = vrot.slane %v4712, 4
    %v4714 = vmax.f32 %v4712, %v4713
    %v4715 = vrot.slane %v4714, 2
    %v4716 = vmax.f32 %v4714, %v4715
    %v4717 = vrot.slane %v4716, 1
    %v4718 = vmax.f32 %v4716, %v4717
    %v4719 = vsel %vm2454, %v4525, -inf
    %v4720 = vrot.slane %v4719, 4
    %v4721 = vmax.f32 %v4719, %v4720
    %v4722 = vrot.slane %v4721, 2
    %v4723 = vmax.f32 %v4721, %v4722
    %v4724 = vrot.slane %v4723, 1
    %v4725 = vmax.f32 %v4723, %v4724
    %v4726 = vsel %vm2454, %v4533, -inf
    %v4727 = vrot.slane %v4726, 4
    %v4728 = vmax.f32 %v4726, %v4727
    %v4729 = vrot.slane %v4728, 2
    %v4730 = vmax.f32 %v4728, %v4729
    %v4731 = vrot.slane %v4730, 1
    %v4732 = vmax.f32 %v4730, %v4731
    %v4733 = vsel %vm2454, %v4532, -inf
    %v4734 = vrot.slane %v4733, 4
    %v4735 = vmax.f32 %v4733, %v4734
    %v4736 = vrot.slane %v4735, 2
    %v4737 = vmax.f32 %v4735, %v4736
    %v4738 = vrot.slane %v4737, 1
    %v4739 = vmax.f32 %v4737, %v4738
    %v4740 = vsel %vm2454, %v4534, -inf
    %v4741 = vrot.slane %v4740, 4
    %v4742 = vmax.f32 %v4740, %v4741
    %v4743 = vrot.slane %v4742, 2
    %v4744 = vmax.f32 %v4742, %v4743
    %v4745 = vrot.slane %v4744, 1
    %v4746 = vmax.f32 %v4744, %v4745
    %v4747 = vsel %vm2454, %v4542, -inf
    %v4748 = vrot.slane %v4747, 4
    %v4749 = vmax.f32 %v4747, %v4748
    %v4750 = vrot.slane %v4749, 2
    %v4751 = vmax.f32 %v4749, %v4750
    %v4752 = vrot.slane %v4751, 1
    %v4753 = vmax.f32 %v4751, %v4752
    %v4754 = vsel %vm2454, %v4550, -inf
    %v4755 = vrot.slane %v4754, 4
    %v4756 = vmax.f32 %v4754, %v4755
    %v4757 = vrot.slane %v4756, 2
    %v4758 = vmax.f32 %v4756, %v4757
    %v4759 = vrot.slane %v4758, 1
    %v4760 = vmax.f32 %v4758, %v4759
    %v4761 = vsel %vm2454, %v4549, -inf
    %v4762 = vrot.slane %v4761, 4
    %v4763 = vmax.f32 %v4761, %v4762
    %v4764 = vrot.slane %v4763, 2
    %v4765 = vmax.f32 %v4763, %v4764
    %v4766 = vrot.slane %v4765, 1
    %v4767 = vmax.f32 %v4765, %v4766
    %v4768 = vsel %vm2454, %v4551, -inf
    %v4769 = vrot.slane %v4768, 4
    %v4770 = vmax.f32 %v4768, %v4769
    %v4771 = vrot.slane %v4770, 2
    %v4772 = vmax.f32 %v4770, %v4771
    %v4773 = vrot.slane %v4772, 1
    %v4774 = vmax.f32 %v4772, %v4773
    %v4775 = vsel %vm2454, %v4559, -inf
    %v4776 = vrot.slane %v4775, 4
    %v4777 = vmax.f32 %v4775, %v4776
    %v4778 = vrot.slane %v4777, 2
    %v4779 = vmax.f32 %v4777, %v4778
    %v4780 = vrot.slane %v4779, 1
    %v4781 = vmax.f32 %v4779, %v4780
    %v4782 = vsel %vm2454, %v4567, -inf
    %v4783 = vrot.slane %v4782, 4
    %v4784 = vmax.f32 %v4782, %v4783
    %v4785 = vrot.slane %v4784, 2
    %v4786 = vmax.f32 %v4784, %v4785
    %v4787 = vrot.slane %v4786, 1
    %v4788 = vmax.f32 %v4786, %v4787
    %v4789 = vsel %vm2454, %v4566, -inf
    %v4790 = vrot.slane %v4789, 4
    %v4791 = vmax.f32 %v4789, %v4790
    %v4792 = vrot.slane %v4791, 2
    %v4793 = vmax.f32 %v4791, %v4792
    %v4794 = vrot.slane %v4793, 1
    %v4795 = vmax.f32 %v4793, %v4794
    %v4796 = vsel %vm2454, %v4568, -inf
    %v4797 = vrot.slane %v4796, 4
    %v4798 = vmax.f32 %v4796, %v4797
    %v4799 = vrot.slane %v4798, 2
    %v4800 = vmax.f32 %v4798, %v4799
    %v4801 = vrot.slane %v4800, 1
    %v4802 = vmax.f32 %v4800, %v4801
    %v4803 = vsel %vm2454, %v4576, -inf
    %v4804 = vrot.slane %v4803, 4
    %v4805 = vmax.f32 %v4803, %v4804
    %v4806 = vrot.slane %v4805, 2
    %v4807 = vmax.f32 %v4805, %v4806
    %v4808 = vrot.slane %v4807, 1
    %v4809 = vmax.f32 %v4807, %v4808
    %v4810 = vsel %vm2454, %v4584, -inf
    %v4811 = vrot.slane %v4810, 4
    %v4812 = vmax.f32 %v4810, %v4811
    %v4813 = vrot.slane %v4812, 2
    %v4814 = vmax.f32 %v4812, %v4813
    %v4815 = vrot.slane %v4814, 1
    %v4816 = vmax.f32 %v4814, %v4815
    %v4817 = vsel %vm2454, %v4583, -inf
    %v4818 = vrot.slane %v4817, 4
    %v4819 = vmax.f32 %v4817, %v4818
    %v4820 = vrot.slane %v4819, 2
    %v4821 = vmax.f32 %v4819, %v4820
    %v4822 = vrot.slane %v4821, 1
    %v4823 = vmax.f32 %v4821, %v4822
    %v4824 = vsel %vm2454, %v4585, -inf
    %v4825 = vrot.slane %v4824, 4
    %v4826 = vmax.f32 %v4824, %v4825
    %v4827 = vrot.slane %v4826, 2
    %v4828 = vmax.f32 %v4826, %v4827
    %v4829 = vrot.slane %v4828, 1
    %v4830 = vmax.f32 %v4828, %v4829
    %v4831 = vsel %vm2454, %v4593, -inf
    %v4832 = vrot.slane %v4831, 4
    %v4833 = vmax.f32 %v4831, %v4832
    %v4834 = vrot.slane %v4833, 2
    %v4835 = vmax.f32 %v4833, %v4834
    %v4836 = vrot.slane %v4835, 1
    %v4837 = vmax.f32 %v4835, %v4836
    %v4838 = vsel %vm2454, %v4601, -inf
    %v4839 = vrot.slane %v4838, 4
    %v4840 = vmax.f32 %v4838, %v4839
    %v4841 = vrot.slane %v4840, 2
    %v4842 = vmax.f32 %v4840, %v4841
    %v4843 = vrot.slane %v4842, 1
    %v4844 = vmax.f32 %v4842, %v4843
    %v4845 = vsel %vm2454, %v4600, -inf
    %v4846 = vrot.slane %v4845, 4
    %v4847 = vmax.f32 %v4845, %v4846
    %v4848 = vrot.slane %v4847, 2
    %v4849 = vmax.f32 %v4847, %v4848
    %v4850 = vrot.slane %v4849, 1
    %v4851 = vmax.f32 %v4849, %v4850
    %v4852 = vsel %vm2454, %v4602, -inf
    %v4853 = vrot.slane %v4852, 4
    %v4854 = vmax.f32 %v4852, %v4853
    %v4855 = vrot.slane %v4854, 2
    %v4856 = vmax.f32 %v4854, %v4855
    %v4857 = vrot.slane %v4856, 1
    %v4858 = vmax.f32 %v4856, %v4857
    %v4859 = vmax.f32 %v4641, 0.0
    %v4860 = vmax.f32 %v4648, 0.0
    %v4861 = vmax.f32 %v4655, 0.0
    %v4862 = vmax.f32 %v4662, 0.0
    %v4863 = vmax.f32 %v4669, 0.0
    %v4864 = vmax.f32 %v4676, 0.0
    %v4865 = vmax.f32 %v4683, 0.0
    %v4866 = vmax.f32 %v4690, 0.0
    %v4867 = vmax.f32 %v4697, 0.0
    %v4868 = vmax.f32 %v4704, 0.0
    %v4869 = vmax.f32 %v4711, 0.0
    %v4870 = vmax.f32 %v4718, 0.0
    %v4871 = vmax.f32 %v4725, 0.0
    %v4872 = vmax.f32 %v4732, 0.0
    %v4873 = vmax.f32 %v4739, 0.0
    %v4874 = vmax.f32 %v4746, 0.0
    %v4875 = vmax.f32 %v4753, 0.0
    %v4876 = vmax.f32 %v4760, 0.0
    %v4877 = vmax.f32 %v4767, 0.0
    %v4878 = vmax.f32 %v4774, 0.0
    %v4879 = vmax.f32 %v4781, 0.0
    %v4880 = vmax.f32 %v4788, 0.0
    %v4881 = vmax.f32 %v4795, 0.0
    %v4882 = vmax.f32 %v4802, 0.0
    %v4883 = vmax.f32 %v4809, 0.0
    %v4884 = vmax.f32 %v4816, 0.0
    %v4885 = vmax.f32 %v4823, 0.0
    %v4886 = vmax.f32 %v4830, 0.0
    %v4887 = vmax.f32 %v4837, 0.0
    %v4888 = vmax.f32 %v4844, 0.0
    %v4889 = vmax.f32 %v4851, 0.0
    %v4890 = vmax.f32 %v4858, 0.0
    %v4923 = vsel %vm3352, %v4860, %v4859
    %v4924 = vsel %vm3354, %v4861, %v4923
    %v4925 = vsel %vm3356, %v4862, %v4924
    %v4926 = vsel %vm3352, %v4864, %v4863
    %v4927 = vsel %vm3354, %v4865, %v4926
    %v4928 = vsel %vm3356, %v4866, %v4927
    %v4929 = vsel %vm3352, %v4868, %v4867
    %v4930 = vsel %vm3354, %v4869, %v4929
    %v4931 = vsel %vm3356, %v4870, %v4930
    %v4932 = vsel %vm3352, %v4872, %v4871
    %v4933 = vsel %vm3354, %v4873, %v4932
    %v4934 = vsel %vm3356, %v4874, %v4933
    %v4935 = vsel %vm3352, %v4876, %v4875
    %v4936 = vsel %vm3354, %v4877, %v4935
    %v4937 = vsel %vm3356, %v4878, %v4936
    %v4938 = vsel %vm3352, %v4880, %v4879
    %v4939 = vsel %vm3354, %v4881, %v4938
    %v4940 = vsel %vm3356, %v4882, %v4939
    %v4941 = vsel %vm3352, %v4884, %v4883
    %v4942 = vsel %vm3354, %v4885, %v4941
    %v4943 = vsel %vm3356, %v4886, %v4942
    %v4944 = vsel %vm3352, %v4888, %v4887
    %v4945 = vsel %vm3354, %v4889, %v4944
    %v4946 = vsel %vm3356, %v4890, %v4945
    %v4955 = vcombine.low %v4925, %v4931
    %v4957 = vunpack.c.l.s4 1983009808
    %v4958 = vunpack.c.0.s8 %v4957
    %v4959 = vlaneseq
    %v4960 = vshrl.u32 %v4959, 7
    %v4961 = vsub.s32 %v4958, %v4960
    %v4962 = vrot.slane %v4955, %v4961
    %v4963 = vcombine.low %v4928, %v4934
    %v4965 = vunpack.c.l.s4 1983009808
    %v4966 = vunpack.c.0.s8 %v4965
    %v4967 = vlaneseq
    %v4968 = vshrl.u32 %v4967, 7
    %v4969 = vsub.s32 %v4966, %v4968
    %v4970 = vrot.slane %v4963, %v4969
    %v4971 = vcombine.low %v4937, %v4943
    %v4973 = vunpack.c.l.s4 1983009808
    %v4974 = vunpack.c.0.s8 %v4973
    %v4975 = vlaneseq
    %v4976 = vshrl.u32 %v4975, 7
    %v4977 = vsub.s32 %v4974, %v4976
    %v4978 = vrot.slane %v4971, %v4977
    %v4979 = vcombine.low %v4940, %v4946
    %v4981 = vunpack.c.l.s4 1983009808
    %v4982 = vunpack.c.0.s8 %v4981
    %v4983 = vlaneseq
    %v4984 = vshrl.u32 %v4983, 7
    %v4985 = vsub.s32 %v4982, %v4984
    %v4986 = vrot.slane %v4979, %v4985
    %v4987 = vcombine.low %v4962, %v4970
    %v4988 = vcombine.high %v4962, %v4970
    %v4990 = vunpack.c.l.s4 1934713408
    %v4991 = vunpack.c.0.s8 %v4990
    %v4992 = vlaneseq
    %v4993 = vshrl.u32 %v4992, 7
    %v4994 = vsub.s32 %v4991, %v4993
    %v4995 = vrot.slane %v4987, %v4994
    %v4997 = vunpack.c.l.s4 1934713408
    %v4998 = vunpack.c.0.s8 %v4997
    %v4999 = vlaneseq
    %v5000 = vshrl.u32 %v4999, 7
    %v5001 = vsub.s32 %v4998, %v5000
    %v5002 = vrot.slane %v4988, %v5001
    %v5003 = vcombine.low %v4978, %v4986
    %v5004 = vcombine.high %v4978, %v4986
    %v5006 = vunpack.c.l.s4 1934713408
    %v5007 = vunpack.c.0.s8 %v5006
    %v5008 = vlaneseq
    %v5009 = vshrl.u32 %v5008, 7
    %v5010 = vsub.s32 %v5007, %v5009
    %v5011 = vrot.slane %v5003, %v5010
    %v5013 = vunpack.c.l.s4 1934713408
    %v5014 = vunpack.c.0.s8 %v5013
    %v5015 = vlaneseq
    %v5016 = vshrl.u32 %v5015, 7
    %v5017 = vsub.s32 %v5014, %v5016
    %v5018 = vrot.slane %v5004, %v5017
    %v5019 = vcombine.low %v4995, %v5011
    %v5020 = vcombine.high %v4995, %v5011
    %v5021 = vcombine.low %v5002, %v5018
    %v5022 = vcombine.high %v5002, %v5018
    %v5023 = vld [vmem:[%s5] sm:$0xff]
    %v5024 = vld [vmem:[%s5 + $0x8] sm:$0xff]
    %v5025 = vld [vmem:[%s5 + $0x10] sm:$0xff]
    %v5026 = vld [vmem:[%s5 + $0x18] sm:$0xff]
    %v5027 = vld [vmem:[%s5 + $0x20] sm:$0xff]
    %v5028 = vld [vmem:[%s5 + $0x28] sm:$0xff]
    %v5029 = vld [vmem:[%s5 + $0x30] sm:$0xff]
    %v5030 = vld [vmem:[%s5 + $0x38] sm:$0xff]
    %v5031 = vld [vmem:[%s5 + $0x40] sm:$0xff]
    %v5032 = vld [vmem:[%s5 + $0x48] sm:$0xff]
    %v5033 = vld [vmem:[%s5 + $0x50] sm:$0xff]
    %v5034 = vld [vmem:[%s5 + $0x58] sm:$0xff]
    %v5035 = vld [vmem:[%s5 + $0x60] sm:$0xff]
    %v5036 = vld [vmem:[%s5 + $0x68] sm:$0xff]
    %v5037 = vld [vmem:[%s5 + $0x70] sm:$0xff]
    %v5038 = vld [vmem:[%s5 + $0x78] sm:$0xff]
    %v5039 = vld [vmem:[%s5 + $0x80] sm:$0xff]
    %v5040 = vld [vmem:[%s5 + $0x88] sm:$0xff]
    %v5041 = vld [vmem:[%s5 + $0x90] sm:$0xff]
    %v5042 = vld [vmem:[%s5 + $0x98] sm:$0xff]
    %v5043 = vld [vmem:[%s5 + $0xa0] sm:$0xff]
    %v5044 = vld [vmem:[%s5 + $0xa8] sm:$0xff]
    %v5045 = vld [vmem:[%s5 + $0xb0] sm:$0xff]
    %v5046 = vld [vmem:[%s5 + $0xb8] sm:$0xff]
    %v5047 = vld [vmem:[%s5 + $0xc0] sm:$0xff]
    %v5048 = vld [vmem:[%s5 + $0xc8] sm:$0xff]
    %v5049 = vld [vmem:[%s5 + $0xd0] sm:$0xff]
    %v5050 = vld [vmem:[%s5 + $0xd8] sm:$0xff]
    %v5051 = vld [vmem:[%s5 + $0xe0] sm:$0xff]
    %v5052 = vld [vmem:[%s5 + $0xe8] sm:$0xff]
    %v5053 = vld [vmem:[%s5 + $0xf0] sm:$0xff]
    %v5054 = vld [vmem:[%s5 + $0xf8] sm:$0xff]
    %v5055 = vld [vmem:[%s5 + $0x100] sm:$0xff]
    %v5056 = vld [vmem:[%s5 + $0x108] sm:$0xff]
    %v5057 = vld [vmem:[%s5 + $0x110] sm:$0xff]
    %v5058 = vld [vmem:[%s5 + $0x118] sm:$0xff]
    %v5059 = vld [vmem:[%s5 + $0x120] sm:$0xff]
    %v5060 = vld [vmem:[%s5 + $0x128] sm:$0xff]
    %v5061 = vld [vmem:[%s5 + $0x130] sm:$0xff]
    %v5062 = vld [vmem:[%s5 + $0x138] sm:$0xff]
    %v5063 = vld [vmem:[%s5 + $0x140] sm:$0xff]
    %v5064 = vld [vmem:[%s5 + $0x148] sm:$0xff]
    %v5065 = vld [vmem:[%s5 + $0x150] sm:$0xff]
    %v5066 = vld [vmem:[%s5 + $0x158] sm:$0xff]
    %v5067 = vld [vmem:[%s5 + $0x160] sm:$0xff]
    %v5068 = vld [vmem:[%s5 + $0x168] sm:$0xff]
    %v5069 = vld [vmem:[%s5 + $0x170] sm:$0xff]
    %v5070 = vld [vmem:[%s5 + $0x178] sm:$0xff]
    %v5071 = vld [vmem:[%s5 + $0x180] sm:$0xff]
    %v5072 = vld [vmem:[%s5 + $0x188] sm:$0xff]
    %v5073 = vld [vmem:[%s5 + $0x190] sm:$0xff]
    %v5074 = vld [vmem:[%s5 + $0x198] sm:$0xff]
    %v5075 = vld [vmem:[%s5 + $0x1a0] sm:$0xff]
    %v5076 = vld [vmem:[%s5 + $0x1a8] sm:$0xff]
    %v5077 = vld [vmem:[%s5 + $0x1b0] sm:$0xff]
    %v5078 = vld [vmem:[%s5 + $0x1b8] sm:$0xff]
    %v5079 = vld [vmem:[%s5 + $0x1c0] sm:$0xff]
    %v5080 = vld [vmem:[%s5 + $0x1c8] sm:$0xff]
    %v5081 = vld [vmem:[%s5 + $0x1d0] sm:$0xff]
    %v5082 = vld [vmem:[%s5 + $0x1d8] sm:$0xff]
    %v5083 = vld [vmem:[%s5 + $0x1e0] sm:$0xff]
    %v5084 = vld [vmem:[%s5 + $0x1e8] sm:$0xff]
    %v5085 = vld [vmem:[%s5 + $0x1f0] sm:$0xff]
    %v5086 = vld [vmem:[%s5 + $0x1f8] sm:$0xff]
    %v5087 = vld [vmem:[%s6] sm:$0x1]
    %v5089 = vlaneseq
    %v5090 = vshrl.u32 %v5089, 7
    %v5091 = vsub.s32 0, %v5090
    %v5092 = vrot.slane %v5087, %v5091
    %5094 = vmatprep.subr.mxu0 0.0
    %5095 = vmatpush1.msra.mxu0 %v5038
    %5096 = vmatprep.subr.mxu0 0.0
    %5097 = vmatpush1.msra.mxu0 %v5037
    %5098 = vmatprep.subr.mxu0 0.0
    %5099 = vmatpush1.msra.mxu0 %v5036
    %5100 = vmatprep.subr.mxu0 0.0
    %5101 = vmatpush1.msra.mxu0 %v5035
    %5102 = vmatprep.subr.mxu0 0.0
    %5103 = vmatpush1.msra.mxu0 %v5034
    %5104 = vmatprep.subr.mxu0 0.0
    %5105 = vmatpush1.msra.mxu0 %v5033
    %5106 = vmatprep.subr.mxu0 0.0
    %5107 = vmatpush1.msra.mxu0 %v5032
    %5108 = vmatprep.subr.mxu0 0.0
    %5109 = vmatpush1.msra.mxu0 %v5031
    %5110 = vmatprep.subr.mxu0 0.0
    %5111 = vmatpush1.msra.mxu0 %v5030
    %5112 = vmatprep.subr.mxu0 0.0
    %5113 = vmatpush1.msra.mxu0 %v5029
    %5114 = vmatprep.subr.mxu0 0.0
    %5115 = vmatpush1.msra.mxu0 %v5028
    %5116 = vmatprep.subr.mxu0 0.0
    %5117 = vmatpush1.msra.mxu0 %v5027
    %5118 = vmatprep.subr.mxu0 0.0
    %5119 = vmatpush1.msra.mxu0 %v5026
    %5120 = vmatprep.subr.mxu0 0.0
    %5121 = vmatpush1.msra.mxu0 %v5025
    %5122 = vmatprep.subr.mxu0 0.0
    %5123 = vmatpush1.msra.mxu0 %v5024
    %5124 = vmatprep.subr.mxu0 0.0
    %5125 = vmatpush1.msra.mxu0 %v5023
    %5126 = vmatprep.subr.mxu0 0.0
    %5127 = vmatpush2.msra.mxu0 %v5054
    %5128 = vmatprep.subr.mxu0 0.0
    %5129 = vmatpush2.msra.mxu0 %v5053
    %5130 = vmatprep.subr.mxu0 0.0
    %5131 = vmatpush2.msra.mxu0 %v5052
    %5132 = vmatprep.subr.mxu0 0.0
    %5133 = vmatpush2.msra.mxu0 %v5051
    %5134 = vmatprep.subr.mxu0 0.0
    %5135 = vmatpush2.msra.mxu0 %v5050
    %5136 = vmatprep.subr.mxu0 0.0
    %5137 = vmatpush2.msra.mxu0 %v5049
    %5138 = vmatprep.subr.mxu0 0.0
    %5139 = vmatpush2.msra.mxu0 %v5048
    %5140 = vmatprep.subr.mxu0 0.0
    %5141 = vmatpush2.msra.mxu0 %v5047
    %5142 = vmatprep.subr.mxu0 0.0
    %5143 = vmatpush2.msra.mxu0 %v5046
    %5144 = vmatprep.subr.mxu0 0.0
    %5145 = vmatpush2.msra.mxu0 %v5045
    %5146 = vmatprep.subr.mxu0 0.0
    %5147 = vmatpush2.msra.mxu0 %v5044
    %5148 = vmatprep.subr.mxu0 0.0
    %5149 = vmatpush2.msra.mxu0 %v5043
    %5150 = vmatprep.subr.mxu0 0.0
    %5151 = vmatpush2.msra.mxu0 %v5042
    %5152 = vmatprep.subr.mxu0 0.0
    %5153 = vmatpush2.msra.mxu0 %v5041
    %5154 = vmatprep.subr.mxu0 0.0
    %5155 = vmatpush2.msra.mxu0 %v5040
    %5156 = vmatprep.subr.mxu0 0.0
    %5157 = vmatpush2.msra.mxu0 %v5039
    %5158 = vmatprep.mubr.f32.mxu0 %v5020
    %5159 = vmatmul.mubr.f32.gmra.mxu0 %v5019
    %v5160 = vpop.f32.mrf.mxu0
    %v5161 = vadd.f32 %v5092, %v5160
    %v5162 = vpop.f32.mrf.mxu0
    %5163 = vdwg.mxu0
    %5164 = vmatprep.subr.mxu0 0.0
    %5165 = vmatpush1.msra.mxu0 %v5070
    %5166 = vmatprep.subr.mxu0 0.0
    %5167 = vmatpush1.msra.mxu0 %v5069
    %5168 = vmatprep.subr.mxu0 0.0
    %5169 = vmatpush1.msra.mxu0 %v5068
    %5170 = vmatprep.subr.mxu0 0.0
    %5171 = vmatpush1.msra.mxu0 %v5067
    %5172 = vmatprep.subr.mxu0 0.0
    %5173 = vmatpush1.msra.mxu0 %v5066
    %5174 = vmatprep.subr.mxu0 0.0
    %5175 = vmatpush1.msra.mxu0 %v5065
    %5176 = vmatprep.subr.mxu0 0.0
    %5177 = vmatpush1.msra.mxu0 %v5064
    %5178 = vmatprep.subr.mxu0 0.0
    %5179 = vmatpush1.msra.mxu0 %v5063
    %5180 = vmatprep.subr.mxu0 0.0
    %5181 = vmatpush1.msra.mxu0 %v5062
    %5182 = vmatprep.subr.mxu0 0.0
    %5183 = vmatpush1.msra.mxu0 %v5061
    %5184 = vmatprep.subr.mxu0 0.0
    %5185 = vmatpush1.msra.mxu0 %v5060
    %5186 = vmatprep.subr.mxu0 0.0
    %5187 = vmatpush1.msra.mxu0 %v5059
    %5188 = vmatprep.subr.mxu0 0.0
    %5189 = vmatpush1.msra.mxu0 %v5058
    %5190 = vmatprep.subr.mxu0 0.0
    %5191 = vmatpush1.msra.mxu0 %v5057
    %5192 = vmatprep.subr.mxu0 0.0
    %5193 = vmatpush1.msra.mxu0 %v5056
    %5194 = vmatprep.subr.mxu0 0.0
    %5195 = vmatpush1.msra.mxu0 %v5055
    %5196 = vmatprep.subr.mxu0 0.0
    %5197 = vmatpush2.msra.mxu0 %v5086
    %5198 = vmatprep.subr.mxu0 0.0
    %5199 = vmatpush2.msra.mxu0 %v5085
    %5200 = vmatprep.subr.mxu0 0.0
    %5201 = vmatpush2.msra.mxu0 %v5084
    %5202 = vmatprep.subr.mxu0 0.0
    %5203 = vmatpush2.msra.mxu0 %v5083
    %5204 = vmatprep.subr.mxu0 0.0
    %5205 = vmatpush2.msra.mxu0 %v5082
    %5206 = vmatprep.subr.mxu0 0.0
    %5207 = vmatpush2.msra.mxu0 %v5081
    %5208 = vmatprep.subr.mxu0 0.0
    %5209 = vmatpush2.msra.mxu0 %v5080
    %5210 = vmatprep.subr.mxu0 0.0
    %5211 = vmatpush2.msra.mxu0 %v5079
    %5212 = vmatprep.subr.mxu0 0.0
    %5213 = vmatpush2.msra.mxu0 %v5078
    %5214 = vmatprep.subr.mxu0 0.0
    %5215 = vmatpush2.msra.mxu0 %v5077
    %5216 = vmatprep.subr.mxu0 0.0
    %5217 = vmatpush2.msra.mxu0 %v5076
    %5218 = vmatprep.subr.mxu0 0.0
    %5219 = vmatpush2.msra.mxu0 %v5075
    %5220 = vmatprep.subr.mxu0 0.0
    %5221 = vmatpush2.msra.mxu0 %v5074
    %5222 = vmatprep.subr.mxu0 0.0
    %5223 = vmatpush2.msra.mxu0 %v5073
    %5224 = vmatprep.subr.mxu0 0.0
    %5225 = vmatpush2.msra.mxu0 %v5072
    %5226 = vmatprep.subr.mxu0 0.0
    %5227 = vmatpush2.msra.mxu0 %v5071
    %5228 = vmatprep.mubr.f32.mxu0 %v5022
    %5229 = vmatmul.mubr.f32.gmra.mxu0 %v5021
    %v5230 = vpop.f32.mrf.mxu0
    %v5231 = vadd.f32 %v5161, %v5230
    %v5232 = vpop.f32.mrf.mxu0
    %5233 = vdwg.mxu0
    %v5234 = vmax.f32 %v5231, 0.0
    %v5235 = vld [vmem:[%s7] sm:$0xff]
    %v5236 = vld [vmem:[%s7 + $0x8] sm:$0xff]
    %v5237 = vld [vmem:[%s7 + $0x10] sm:$0xff]
    %v5238 = vld [vmem:[%s7 + $0x18] sm:$0xff]
    %v5239 = vld [vmem:[%s7 + $0x20] sm:$0xff]
    %v5240 = vld [vmem:[%s7 + $0x28] sm:$0xff]
    %v5241 = vld [vmem:[%s7 + $0x30] sm:$0x3]
    %v5242 = vld [vmem:[%s8] sm:$0x1]
    %v5244 = vlaneseq
    %v5245 = vshrl.u32 %v5244, 7
    %v5246 = vsub.s32 0, %v5245
    %v5247 = vrot.slane %v5242, %v5246
    %vm5249 = vcmask 408576
    %v5251 = vsel %vm5249, %v5234, 0
    %v5254 = vsel %vm2454, %v5241, 0
    %5256 = vmatprep.subr.mxu0 0.0
    %5257 = vmatpush1.msra.mxu0 0.0
    %5258 = vmatprep.subr.mxu0 0.0
    %5259 = vmatpush1.msra.mxu0 0.0
    %5260 = vmatprep.subr.mxu0 0.0
    %5261 = vmatpush1.msra.mxu0 0.0
    %5262 = vmatprep.subr.mxu0 0.0
    %5263 = vmatpush1.msra.mxu0 0.0
    %5264 = vmatprep.subr.mxu0 0.0
    %5265 = vmatpush1.msra.mxu0 0.0
    %5266 = vmatprep.subr.mxu0 0.0
    %5267 = vmatpush1.msra.mxu0 0.0
    %5268 = vmatprep.subr.mxu0 0.0
    %5269 = vmatpush1.msra.mxu0 0.0
    %5270 = vmatprep.subr.mxu0 0.0
    %5271 = vmatpush1.msra.mxu0 0.0
    %5272 = vmatprep.subr.mxu0 0.0
    %5273 = vmatpush1.msra.mxu0 0.0
    %5274 = vmatprep.subr.mxu0 0.0
    %5275 = vmatpush1.msra.mxu0 %v5254
    %5276 = vmatprep.subr.mxu0 0.0
    %5277 = vmatpush1.msra.mxu0 %v5240
    %5278 = vmatprep.subr.mxu0 0.0
    %5279 = vmatpush1.msra.mxu0 %v5239
    %5280 = vmatprep.subr.mxu0 0.0
    %5281 = vmatpush1.msra.mxu0 %v5238
    %5282 = vmatprep.subr.mxu0 0.0
    %5283 = vmatpush1.msra.mxu0 %v5237
    %5284 = vmatprep.subr.mxu0 0.0
    %5285 = vmatpush1.msra.mxu0 %v5236
    %5286 = vmatprep.subr.mxu0 0.0
    %5287 = vmatpush1.msra.mxu0 %v5235
    %5288 = vmatprep.subr.mxu0 0.0
    %5289 = vmatpush2.msra.mxu0 0.0
    %5290 = vmatprep.subr.mxu0 0.0
    %5291 = vmatpush2.msra.mxu0 0.0
    %5292 = vmatprep.subr.mxu0 0.0
    %5293 = vmatpush2.msra.mxu0 0.0
    %5294 = vmatprep.subr.mxu0 0.0
    %5295 = vmatpush2.msra.mxu0 0.0
    %5296 = vmatprep.subr.mxu0 0.0
    %5297 = vmatpush2.msra.mxu0 0.0
    %5298 = vmatprep.subr.mxu0 0.0
    %5299 = vmatpush2.msra.mxu0 0.0
    %5300 = vmatprep.subr.mxu0 0.0
    %5301 = vmatpush2.msra.mxu0 0.0
    %5302 = vmatprep.subr.mxu0 0.0
    %5303 = vmatpush2.msra.mxu0 0.0
    %5304 = vmatprep.subr.mxu0 0.0
    %5305 = vmatpush2.msra.mxu0 0.0
    %5306 = vmatprep.subr.mxu0 0.0
    %5307 = vmatpush2.msra.mxu0 0.0
    %5308 = vmatprep.subr.mxu0 0.0
    %5309 = vmatpush2.msra.mxu0 0.0
    %5310 = vmatprep.subr.mxu0 0.0
    %5311 = vmatpush2.msra.mxu0 0.0
    %5312 = vmatprep.subr.mxu0 0.0
    %5313 = vmatpush2.msra.mxu0 0.0
    %5314 = vmatprep.subr.mxu0 0.0
    %5315 = vmatpush2.msra.mxu0 0.0
    %5316 = vmatprep.subr.mxu0 0.0
    %5317 = vmatpush2.msra.mxu0 0.0
    %5318 = vmatprep.subr.mxu0 0.0
    %5319 = vmatpush2.msra.mxu0 0.0
    %5320 = vmatprep.mubr.f32.mxu0 0.0
    %5321 = vmatmul.mubr.f32.gmra.mxu0 %v5251
    %v5322 = vpop.f32.mrf.mxu0
    %v5323 = vadd.f32 %v5247, %v5322
    %v5324 = vpop.f32.mrf.mxu0
    %5325 = vdwg.mxu0
    %vm5326 = vcmask 80896
    %v5327 = vsel %vm5326, %v5323, -inf
    %5328 = vmax.xlane.f32.xlu0 %v5327
    %v5329 = vpop.xlane.xlu0 %5328
    %v5330 = vsub.f32 %v5323, %v5329
    %v5331 = vmul.f32 %v5330, 1.442695
    %v5332 = vpow.pop %v5331
    %v5333 = vsel %vm5326, %v5332, 0.0
    %5334 = vadd.xlane.f32.xlu0 %v5333
    %v5335 = vpop.xlane.xlu0 %5334
    %v5336 = vlog2.pop %v5335
    %v5337 = vmul.f32 %v5336, 0.6931472
    %v5338 = vsub.f32 %v5330, %v5337
    %5339 = vst.msk [vmem:[%s9] sm:$0xff] %vm5326, %v5338
    // Predicated region
    $region42: #{forward.1} parent=1 // pred_check
      _
    $region43: #{forward.1} parent=1 // pred_check_branch
      %5341 = sbr.rel (0) target = $region45
    $region44: #{forward.1} parent=1 // pred_region
      _
    $region45: #{forward.1} parent=1 // pred_fallthru
      _
    // Predicated region
    $region46: #{forward.1} parent=1 // pred_check
      _
    $region47: #{forward.1} parent=1 // pred_check_branch
      %5343 = sbr.rel (0) target = $region49
    $region48: #{forward.1} parent=1 // pred_region
      _
    $region49: #{forward.1} parent=1 // pred_fallthru
      _
    %5344 = vsyncpa [#allocation3], 1

</llo_original>
